<compile_context>
chip_gen: v7x
topology: tpu7x:2x2x1
jax: 0.10.0
libtpu: 0.0.40
codegen_flags: <defaults>
</compile_context>

<pallas_src>
import functools

import jax
import jax.numpy as jnp
from jax.experimental import pallas as pl
from jax.experimental.pallas import tpu as pltpu


def _cross_attn_core_kernel(batch_block, compute_dtype,
                            q1_ref, k1_ref, v1_ref,
                            q2_ref, k2_ref, v2_ref,
                            m1r_ref, m1c_ref, m2r_ref, m2c_ref,
                            o1_ref, o2_ref):
    """q*/k*/v* blocks: (B, nh, L, D) in compute_dtype; masks: (B, L, 1)/(B, 1, L) f32 {0,1};
    outputs: (B, nh, L, D) f32, head-major (merged to (N, L, H) by the wrapper)."""
    f32 = jnp.float32
    inf = 1e6

    def masked_softmax(logits, bias):
        # logits: (nh, Lq, Lk) f32; bias: (Lq, Lk) f32 additive mask, head-independent.
        logits = logits + bias[None]
        m = jnp.max(logits, axis=-1, keepdims=True)
        e = jnp.exp(logits - m)
        inv = pl.reciprocal(jnp.sum(e, axis=-1, keepdims=True), approx=True)
        return (e * inv).astype(compute_dtype)

    for b in range(batch_block):          # small static batch block; heads are batched below
        q1, k1, v1 = q1_ref[b], k1_ref[b], v1_ref[b]      # (nh, L1, D)
        q2, k2, v2 = q2_ref[b], k2_ref[b], v2_ref[b]      # (nh, L2, D)
        m1r, m1c = m1r_ref[b], m1c_ref[b]                 # (L1, 1), (1, L1)
        m2r, m2c = m2r_ref[b], m2c_ref[b]                 # (L2, 1), (1, L2)

        # Head-independent additive mask biases: logits - 1e6*(1 - row*col).  Hoisted out of
        # any per-head work; computed once per batch element.
        bias11 = (m1r * m1c - 1.0) * inf                  # (L1, L1)
        bias12 = (m1r * m2c - 1.0) * inf                  # (L1, L2)
        bias21 = (m2r * m1c - 1.0) * inf                  # (L2, L1)
        bias22 = (m2r * m2c - 1.0) * inf                  # (L2, L2)

        # Head-batched QK^T: leading-batch 3-D dot_general, single vmatmul stream, f32 acc.
        l11 = jnp.einsum('hld,hkd->hlk', q1, k1, preferred_element_type=f32)
        l12 = jnp.einsum('hld,hkd->hlk', q1, k2, preferred_element_type=f32)
        l21 = jnp.einsum('hld,hkd->hlk', q2, k1, preferred_element_type=f32)
        l22 = jnp.einsum('hld,hkd->hlk', q2, k2, preferred_element_type=f32)

        a11 = masked_softmax(l11, bias11)                 # (nh, L1, L1) compute_dtype
        a12 = masked_softmax(l12, bias12)                 # (nh, L1, L2)
        a21 = masked_softmax(l21, bias21)                 # (nh, L2, L1)
        a22 = masked_softmax(l22, bias22)                 # (nh, L2, L2)

        # Head-batched alpha @ V (f32 acc); fold the query-row masking and the /2 average
        # into one multiply per output.
        o1 = (jnp.einsum('hlk,hkd->hld', a11, v1, preferred_element_type=f32)
              + jnp.einsum('hlk,hkd->hld', a12, v2, preferred_element_type=f32))
        o2 = (jnp.einsum('hlk,hkd->hld', a21, v1, preferred_element_type=f32)
              + jnp.einsum('hlk,hkd->hld', a22, v2, preferred_element_type=f32))

        o1_ref[b] = (o1 * (0.5 * m1r)[None]).astype(o1_ref.dtype)   # one whole-block store
        o2_ref[b] = (o2 * (0.5 * m2r)[None]).astype(o2_ref.dtype)


def cross_attention_block(input1, input2, mask1, mask2,
                          wq1, wk1, wv1, wq2, wk2, wv2, *,
                          num_heads, compute_dtype=jnp.bfloat16, batch_block=None):
    """input1: (N, L1, H); input2: (N, L2, H); mask1: (N, L1); mask2: (N, L2) float {0,1}.
    w*: PyTorch-style (out, in) weight matrices of nn.Linear(bias=False)."""
    N, L1, H = input1.shape
    L2 = input2.shape[1]
    assert H % num_heads == 0
    nh = num_heads
    D = H // nh
    cdt = compute_dtype
    f32 = jnp.float32

    # ---- XLA-side projections (one big matmul each; bf16 operands, f32 accumulation),
    #      reshaped to head-major (N, nh, L, D) so the kernel needs no in-kernel transposes.
    def proj(x, w):
        y = jnp.dot(x.reshape(-1, H).astype(cdt), w.T.astype(cdt),
                    preferred_element_type=f32)
        return (y.reshape(x.shape[0], x.shape[1], nh, D)
                 .transpose(0, 2, 1, 3)
                 .astype(cdt))

    q1, k1, v1 = proj(input1, wq1), proj(input1, wk1), proj(input1, wv1)
    q2, k2, v2 = proj(input2, wq2), proj(input2, wk2), proj(input2, wv2)

    m1r = mask1.astype(f32).reshape(N, L1, 1)
    m1c = mask1.astype(f32).reshape(N, 1, L1)
    m2r = mask2.astype(f32).reshape(N, L2, 1)
    m2c = mask2.astype(f32).reshape(N, 1, L2)

    # ---- batch block: several batch elements per grid step to amortize per-step overhead.
    if batch_block is None:
        batch_block = 1
        for cand in (8, 4, 2, 1):
            if N % cand == 0:
                batch_block = cand
                break
    assert N % batch_block == 0
    B = batch_block
    grid = (N // B,)

    qkv_spec = lambda L: pl.BlockSpec((B, nh, L, D), lambda i: (i, 0, 0, 0))
    mask_spec = lambda a, b_: pl.BlockSpec((B, a, b_), lambda i: (i, 0, 0))
    out_spec = lambda L: pl.BlockSpec((B, nh, L, D), lambda i: (i, 0, 0, 0))

    # ---- VMEM budget (double-buffered I/O blocks + live logits/alpha), clamped so the toy
    #      case keeps the default and large cases stay within v7x's 64 MiB physical VMEM.
    bpe = jnp.dtype(cdt).itemsize
    io_bytes = (3 * B * nh * (L1 + L2) * D * bpe          # q/k/v blocks
                + B * nh * (L1 + L2) * D * 4              # output blocks (f32)
                + 2 * B * (L1 + L2) * 4)                  # masks
    live_bytes = 2 * nh * (L1 * L1 + 2 * L1 * L2 + L2 * L2) * 4   # logits + alpha
    vmem_limit = max(32 << 20, min(int(2 * io_bytes + live_bytes + (4 << 20)), 64 << 20))

    kernel = functools.partial(_cross_attn_core_kernel, B, cdt)

    o1h, o2h = pl.pallas_call(
        kernel,
        out_shape=(jax.ShapeDtypeStruct((N, nh, L1, D), f32),
                   jax.ShapeDtypeStruct((N, nh, L2, D), f32)),
        grid_spec=pltpu.PrefetchScalarGridSpec(
            num_scalar_prefetch=0,
            grid=grid,
            in_specs=[qkv_spec(L1), qkv_spec(L1), qkv_spec(L1),
                      qkv_spec(L2), qkv_spec(L2), qkv_spec(L2),
                      mask_spec(L1, 1), mask_spec(1, L1),
                      mask_spec(L2, 1), mask_spec(1, L2)],
            out_specs=[out_spec(L1), out_spec(L2)],
        ),
        compiler_params=pltpu.CompilerParams(
            dimension_semantics=("parallel",),
            vmem_limit_bytes=vmem_limit),
    )(q1, k1, v1, q2, k2, v2, m1r, m1c, m2r, m2c)

    # Lane-dense (N, L, H) layout produced by XLA (pure layout plumbing, fuses downstream).
    out1 = o1h.transpose(0, 2, 1, 3).reshape(N, L1, H)
    out2 = o2h.transpose(0, 2, 1, 3).reshape(N, L2, H)
    return out1, out2


def _reference(input1, input2, mask1, mask2,
               wq1, wk1, wv1, wq2, wk2, wv2, num_heads,
               compute_dtype=jnp.float32, inf=1e6):
    """Pure-JAX replica of the PyTorch forward (mirrors the kernel's compute_dtype casts so
    the comparison isolates kernel bugs rather than bf16 rounding)."""
    N, L1, H = input1.shape
    L2 = input2.shape[1]
    D = H // num_heads
    cdt = compute_dtype
    f32 = jnp.float32

    def proj(x, w):
        y = jnp.dot(x.astype(cdt), w.T.astype(cdt), preferred_element_type=f32)
        return y.reshape(x.shape[0], x.shape[1], num_heads, D).astype(cdt)

    q1, k1, v1 = proj(input1, wq1), proj(input1, wk1), proj(input1, wv1)
    q2, k2, v2 = proj(input2, wq2), proj(input2, wk2), proj(input2, wv2)
    logits = lambda q, k: jnp.einsum('blhd,bkhd->blkh', q, k, preferred_element_type=f32)

    def alpha_fn(lg, mrow, mcol):
        pair = (mrow[:, :, None, None] * mcol[:, None, :, None]) > 0
        lg = jnp.where(pair, lg, lg - inf)
        a = jax.nn.softmax(lg, axis=2)
        return jnp.where(mrow[:, :, None, None] > 0, a, 0.0).astype(cdt)

    a11 = alpha_fn(logits(q1, k1), mask1, mask1)
    a12 = alpha_fn(logits(q1, k2), mask1, mask2)
    a21 = alpha_fn(logits(q2, k1), mask2, mask1)
    a22 = alpha_fn(logits(q2, k2), mask2, mask2)
    mix = lambda a, v: jnp.einsum('blkh,bkhd->blhd', a, v,
                                  preferred_element_type=f32).reshape(a.shape[0], a.shape[1], H)
    o1 = (mix(a11, v1) + mix(a12, v2)) / 2
    o2 = (mix(a21, v1) + mix(a22, v2)) / 2
    return o1, o2


if __name__ == "__main__":
    N, L1, L2 = 2, 8, 16
    hidden_dim, num_heads = 32, 4

    key = jax.random.PRNGKey(0)
    ks = jax.random.split(key, 10)
    input1 = jax.random.normal(ks[0], (N, L1, hidden_dim), jnp.float32)
    input2 = jax.random.normal(ks[1], (N, L2, hidden_dim), jnp.float32)
    mask1 = (jax.random.uniform(ks[2], (N, L1)) < 0.7).astype(jnp.float32)
    mask2 = (jax.random.uniform(ks[3], (N, L2)) < 0.7).astype(jnp.float32)

    scale = 1.0 / jnp.sqrt(hidden_dim)
    wq1 = jax.random.normal(ks[4], (hidden_dim, hidden_dim), jnp.float32) * scale
    wk1 = jax.random.normal(ks[5], (hidden_dim, hidden_dim), jnp.float32) * scale
    wv1 = jax.random.normal(ks[6], (hidden_dim, hidden_dim), jnp.float32) * scale
    wq2 = jax.random.normal(ks[7], (hidden_dim, hidden_dim), jnp.float32) * scale
    wk2 = jax.random.normal(ks[8], (hidden_dim, hidden_dim), jnp.float32) * scale
    wv2 = jax.random.normal(ks[9], (hidden_dim, hidden_dim), jnp.float32) * scale

    out1, out2 = cross_attention_block(
        input1, input2, mask1, mask2,
        wq1, wk1, wv1, wq2, wk2, wv2,
        num_heads=num_heads, compute_dtype=jnp.bfloat16)
    jax.block_until_ready((out1, out2))

    ref1, ref2 = _reference(input1, input2, mask1, mask2,
                            wq1, wk1, wv1, wq2, wk2, wv2, num_heads,
                            compute_dtype=jnp.bfloat16)
    # Tolerance covers the approximate EUP reciprocal and matmul accumulation-order noise.
    assert jnp.allclose(out1, ref1, atol=1e-2, rtol=1e-2)
    assert jnp.allclose(out2, ref2, atol=1e-2, rtol=1e-2)
    print("KERNEL_OK")
</pallas_src>

<mosaic_0001>
module attributes {stable_mosaic.version = 11 : i64} {
  func.func @_cross_attn_core_kernel(%arg0: i32, %arg1: memref<2x4x8x8xbf16, #tpu.memory_space<vmem>>, %arg2: memref<2x4x8x8xbf16, #tpu.memory_space<vmem>>, %arg3: memref<2x4x8x8xbf16, #tpu.memory_space<vmem>>, %arg4: memref<2x4x16x8xbf16, #tpu.memory_space<vmem>>, %arg5: memref<2x4x16x8xbf16, #tpu.memory_space<vmem>>, %arg6: memref<2x4x16x8xbf16, #tpu.memory_space<vmem>>, %arg7: memref<2x8x1xf32, #tpu.memory_space<vmem>>, %arg8: memref<2x1x8xf32, #tpu.memory_space<vmem>>, %arg9: memref<2x16x1xf32, #tpu.memory_space<vmem>>, %arg10: memref<2x1x16xf32, #tpu.memory_space<vmem>>, %arg11: memref<2x4x8x8xf32, #tpu.memory_space<vmem>>, %arg12: memref<2x4x16x8xf32, #tpu.memory_space<vmem>>) attributes {dimension_semantics = [#tpu.dimension_semantics<parallel>], iteration_bounds = array<i64: 1>, scalar_prefetch = 0 : i64, scratch_operands = 0 : i64, tpu.core_type = #tpu.core_type<tc>, window_params = [{transform_indices = @transform_0, window_bounds = array<i64: 2, 4, 8, 8>}, {transform_indices = @transform_1, window_bounds = array<i64: 2, 4, 8, 8>}, {transform_indices = @transform_2, window_bounds = array<i64: 2, 4, 8, 8>}, {transform_indices = @transform_3, window_bounds = array<i64: 2, 4, 16, 8>}, {transform_indices = @transform_4, window_bounds = array<i64: 2, 4, 16, 8>}, {transform_indices = @transform_5, window_bounds = array<i64: 2, 4, 16, 8>}, {transform_indices = @transform_6, window_bounds = array<i64: 2, 8, 1>}, {transform_indices = @transform_7, window_bounds = array<i64: 2, 1, 8>}, {transform_indices = @transform_8, window_bounds = array<i64: 2, 16, 1>}, {transform_indices = @transform_9, window_bounds = array<i64: 2, 1, 16>}, {transform_indices = @transform_10, window_bounds = array<i64: 2, 4, 8, 8>}, {transform_indices = @transform_11, window_bounds = array<i64: 2, 4, 16, 8>}]} {
    %c0 = arith.constant 0 : index
    %c0_0 = arith.constant 0 : index
    %c0_1 = arith.constant 0 : index
    %c0_2 = arith.constant 0 : index
    %0 = vector.load %arg1[%c0, %c0_0, %c0_1, %c0_2] : memref<2x4x8x8xbf16, #tpu.memory_space<vmem>>, vector<1x4x8x8xbf16>
    %1 = vector.shape_cast %0 : vector<1x4x8x8xbf16> to vector<4x8x8xbf16>
    %c0_3 = arith.constant 0 : index
    %c0_4 = arith.constant 0 : index
    %c0_5 = arith.constant 0 : index
    %c0_6 = arith.constant 0 : index
    %2 = vector.load %arg2[%c0_3, %c0_4, %c0_5, %c0_6] : memref<2x4x8x8xbf16, #tpu.memory_space<vmem>>, vector<1x4x8x8xbf16>
    %3 = vector.shape_cast %2 : vector<1x4x8x8xbf16> to vector<4x8x8xbf16>
    %c0_7 = arith.constant 0 : index
    %c0_8 = arith.constant 0 : index
    %c0_9 = arith.constant 0 : index
    %c0_10 = arith.constant 0 : index
    %4 = vector.load %arg3[%c0_7, %c0_8, %c0_9, %c0_10] : memref<2x4x8x8xbf16, #tpu.memory_space<vmem>>, vector<1x4x8x8xbf16>
    %5 = vector.shape_cast %4 : vector<1x4x8x8xbf16> to vector<4x8x8xbf16>
    %c0_11 = arith.constant 0 : index
    %c0_12 = arith.constant 0 : index
    %c0_13 = arith.constant 0 : index
    %c0_14 = arith.constant 0 : index
    %6 = vector.load %arg4[%c0_11, %c0_12, %c0_13, %c0_14] : memref<2x4x16x8xbf16, #tpu.memory_space<vmem>>, vector<1x4x16x8xbf16>
    %7 = vector.shape_cast %6 : vector<1x4x16x8xbf16> to vector<4x16x8xbf16>
    %c0_15 = arith.constant 0 : index
    %c0_16 = arith.constant 0 : index
    %c0_17 = arith.constant 0 : index
    %c0_18 = arith.constant 0 : index
    %8 = vector.load %arg5[%c0_15, %c0_16, %c0_17, %c0_18] : memref<2x4x16x8xbf16, #tpu.memory_space<vmem>>, vector<1x4x16x8xbf16>
    %9 = vector.shape_cast %8 : vector<1x4x16x8xbf16> to vector<4x16x8xbf16>
    %c0_19 = arith.constant 0 : index
    %c0_20 = arith.constant 0 : index
    %c0_21 = arith.constant 0 : index
    %c0_22 = arith.constant 0 : index
    %10 = vector.load %arg6[%c0_19, %c0_20, %c0_21, %c0_22] : memref<2x4x16x8xbf16, #tpu.memory_space<vmem>>, vector<1x4x16x8xbf16>
    %11 = vector.shape_cast %10 : vector<1x4x16x8xbf16> to vector<4x16x8xbf16>
    %c0_23 = arith.constant 0 : index
    %c0_24 = arith.constant 0 : index
    %c0_25 = arith.constant 0 : index
    %12 = vector.load %arg7[%c0_23, %c0_24, %c0_25] : memref<2x8x1xf32, #tpu.memory_space<vmem>>, vector<1x8x1xf32>
    %13 = vector.shape_cast %12 : vector<1x8x1xf32> to vector<8x1xf32>
    %c0_26 = arith.constant 0 : index
    %c0_27 = arith.constant 0 : index
    %c0_28 = arith.constant 0 : index
    %14 = vector.load %arg8[%c0_26, %c0_27, %c0_28] : memref<2x1x8xf32, #tpu.memory_space<vmem>>, vector<1x1x8xf32>
    %15 = vector.shape_cast %14 : vector<1x1x8xf32> to vector<1x8xf32>
    %c0_29 = arith.constant 0 : index
    %c0_30 = arith.constant 0 : index
    %c0_31 = arith.constant 0 : index
    %16 = vector.load %arg9[%c0_29, %c0_30, %c0_31] : memref<2x16x1xf32, #tpu.memory_space<vmem>>, vector<1x16x1xf32>
    %17 = vector.shape_cast %16 : vector<1x16x1xf32> to vector<16x1xf32>
    %c0_32 = arith.constant 0 : index
    %c0_33 = arith.constant 0 : index
    %c0_34 = arith.constant 0 : index
    %18 = vector.load %arg10[%c0_32, %c0_33, %c0_34] : memref<2x1x16xf32, #tpu.memory_space<vmem>>, vector<1x1x16xf32>
    %19 = vector.shape_cast %18 : vector<1x1x16xf32> to vector<1x16xf32>
    %20 = vector.broadcast %13 : vector<8x1xf32> to vector<8x8xf32>
    %21 = vector.broadcast %15 : vector<1x8xf32> to vector<8x8xf32>
    %22 = arith.mulf %20, %21 : vector<8x8xf32>
    %cst = arith.constant 1.000000e+00 : f32
    %23 = vector.broadcast %cst : f32 to vector<8x8xf32>
    %24 = arith.subf %22, %23 : vector<8x8xf32>
    %cst_35 = arith.constant 1.000000e+06 : f32
    %25 = vector.broadcast %cst_35 : f32 to vector<8x8xf32>
    %26 = arith.mulf %24, %25 : vector<8x8xf32>
    %27 = vector.broadcast %13 : vector<8x1xf32> to vector<8x16xf32>
    %28 = vector.broadcast %19 : vector<1x16xf32> to vector<8x16xf32>
    %29 = arith.mulf %27, %28 : vector<8x16xf32>
    %cst_36 = arith.constant 1.000000e+00 : f32
    %30 = vector.broadcast %cst_36 : f32 to vector<8x16xf32>
    %31 = arith.subf %29, %30 : vector<8x16xf32>
    %cst_37 = arith.constant 1.000000e+06 : f32
    %32 = vector.broadcast %cst_37 : f32 to vector<8x16xf32>
    %33 = arith.mulf %31, %32 : vector<8x16xf32>
    %34 = vector.broadcast %17 : vector<16x1xf32> to vector<16x8xf32>
    %35 = vector.broadcast %15 : vector<1x8xf32> to vector<16x8xf32>
    %36 = arith.mulf %34, %35 : vector<16x8xf32>
    %cst_38 = arith.constant 1.000000e+00 : f32
    %37 = vector.broadcast %cst_38 : f32 to vector<16x8xf32>
    %38 = arith.subf %36, %37 : vector<16x8xf32>
    %cst_39 = arith.constant 1.000000e+06 : f32
    %39 = vector.broadcast %cst_39 : f32 to vector<16x8xf32>
    %40 = arith.mulf %38, %39 : vector<16x8xf32>
    %41 = vector.broadcast %17 : vector<16x1xf32> to vector<16x16xf32>
    %42 = vector.broadcast %19 : vector<1x16xf32> to vector<16x16xf32>
    %43 = arith.mulf %41, %42 : vector<16x16xf32>
    %cst_40 = arith.constant 1.000000e+00 : f32
    %44 = vector.broadcast %cst_40 : f32 to vector<16x16xf32>
    %45 = arith.subf %43, %44 : vector<16x16xf32>
    %cst_41 = arith.constant 1.000000e+06 : f32
    %46 = vector.broadcast %cst_41 : f32 to vector<16x16xf32>
    %47 = arith.mulf %45, %46 : vector<16x16xf32>
    "tpu.trace_start"() <{level = 10 : i32, message = "hld,hkd->hlk"}> : () -> ()
    %cst_42 = arith.constant dense<0.000000e+00> : vector<4x8x8xf32>
    %48 = tpu.matmul %1, %3, %cst_42 {dimension_numbers = #tpu.dot_dimension_numbers<[2], [2], [1], [1], [0, 0, 0, 1, 1, 1], [0], [0]>} : vector<4x8x8xbf16>, vector<4x8x8xbf16>, vector<4x8x8xf32> -> vector<4x8x8xf32>
    %cst_43 = arith.constant dense<0.000000e+00> : vector<4x8x16xf32>
    %49 = tpu.matmul %1, %9, %cst_43 {dimension_numbers = #tpu.dot_dimension_numbers<[2], [2], [1], [1], [0, 0, 0, 1, 1, 1], [0], [0]>} : vector<4x8x8xbf16>, vector<4x16x8xbf16>, vector<4x8x16xf32> -> vector<4x8x16xf32>
    %cst_44 = arith.constant dense<0.000000e+00> : vector<4x16x8xf32>
    %50 = tpu.matmul %7, %3, %cst_44 {dimension_numbers = #tpu.dot_dimension_numbers<[2], [2], [1], [1], [0, 0, 0, 1, 1, 1], [0], [0]>} : vector<4x16x8xbf16>, vector<4x8x8xbf16>, vector<4x16x8xf32> -> vector<4x16x8xf32>
    %cst_45 = arith.constant dense<0.000000e+00> : vector<4x16x16xf32>
    %51 = tpu.matmul %7, %9, %cst_45 {dimension_numbers = #tpu.dot_dimension_numbers<[2], [2], [1], [1], [0, 0, 0, 1, 1, 1], [0], [0]>} : vector<4x16x8xbf16>, vector<4x16x8xbf16>, vector<4x16x16xf32> -> vector<4x16x16xf32>
    "tpu.trace_stop"() : () -> ()
    %52 = vector.shape_cast %26 : vector<8x8xf32> to vector<1x8x8xf32>
    %53 = vector.broadcast %52 : vector<1x8x8xf32> to vector<4x8x8xf32>
    %54 = arith.addf %48, %53 : vector<4x8x8xf32>
    %cst_46 = arith.constant dense<0xFF800000> : vector<4x8xf32>
    %55 = vector.multi_reduction <maximumf>, %54, %cst_46 [2] : vector<4x8x8xf32> to vector<4x8xf32>
    %56 = vector.shape_cast %55 : vector<4x8xf32> to vector<4x8x1xf32>
    %57 = vector.broadcast %56 : vector<4x8x1xf32> to vector<4x8x8xf32>
    %58 = arith.subf %54, %57 : vector<4x8x8xf32>
    %59 = math.exp %58 : vector<4x8x8xf32>
    %cst_47 = arith.constant dense<0.000000e+00> : vector<4x8xf32>
    %60 = vector.multi_reduction <add>, %59, %cst_47 [2] : vector<4x8x8xf32> to vector<4x8xf32>
    %61 = vector.shape_cast %60 : vector<4x8xf32> to vector<4x8x1xf32>
    %62 = tpu.reciprocal %61 {approx = true} : vector<4x8x1xf32> -> vector<4x8x1xf32>
    %63 = vector.broadcast %62 : vector<4x8x1xf32> to vector<4x8x8xf32>
    %64 = arith.mulf %59, %63 : vector<4x8x8xf32>
    %65 = arith.truncf %64 : vector<4x8x8xf32> to vector<4x8x8xbf16>
    %66 = vector.shape_cast %33 : vector<8x16xf32> to vector<1x8x16xf32>
    %67 = vector.broadcast %66 : vector<1x8x16xf32> to vector<4x8x16xf32>
    %68 = arith.addf %49, %67 : vector<4x8x16xf32>
    %cst_48 = arith.constant dense<0xFF800000> : vector<4x8xf32>
    %69 = vector.multi_reduction <maximumf>, %68, %cst_48 [2] : vector<4x8x16xf32> to vector<4x8xf32>
    %70 = vector.shape_cast %69 : vector<4x8xf32> to vector<4x8x1xf32>
    %71 = vector.broadcast %70 : vector<4x8x1xf32> to vector<4x8x16xf32>
    %72 = arith.subf %68, %71 : vector<4x8x16xf32>
    %73 = math.exp %72 : vector<4x8x16xf32>
    %cst_49 = arith.constant dense<0.000000e+00> : vector<4x8xf32>
    %74 = vector.multi_reduction <add>, %73, %cst_49 [2] : vector<4x8x16xf32> to vector<4x8xf32>
    %75 = vector.shape_cast %74 : vector<4x8xf32> to vector<4x8x1xf32>
    %76 = tpu.reciprocal %75 {approx = true} : vector<4x8x1xf32> -> vector<4x8x1xf32>
    %77 = vector.broadcast %76 : vector<4x8x1xf32> to vector<4x8x16xf32>
    %78 = arith.mulf %73, %77 : vector<4x8x16xf32>
    %79 = arith.truncf %78 : vector<4x8x16xf32> to vector<4x8x16xbf16>
    %80 = vector.shape_cast %40 : vector<16x8xf32> to vector<1x16x8xf32>
    %81 = vector.broadcast %80 : vector<1x16x8xf32> to vector<4x16x8xf32>
    %82 = arith.addf %50, %81 : vector<4x16x8xf32>
    %cst_50 = arith.constant dense<0xFF800000> : vector<4x16xf32>
    %83 = vector.multi_reduction <maximumf>, %82, %cst_50 [2] : vector<4x16x8xf32> to vector<4x16xf32>
    %84 = vector.shape_cast %83 : vector<4x16xf32> to vector<4x16x1xf32>
    %85 = vector.broadcast %84 : vector<4x16x1xf32> to vector<4x16x8xf32>
    %86 = arith.subf %82, %85 : vector<4x16x8xf32>
    %87 = math.exp %86 : vector<4x16x8xf32>
    %cst_51 = arith.constant dense<0.000000e+00> : vector<4x16xf32>
    %88 = vector.multi_reduction <add>, %87, %cst_51 [2] : vector<4x16x8xf32> to vector<4x16xf32>
    %89 = vector.shape_cast %88 : vector<4x16xf32> to vector<4x16x1xf32>
    %90 = tpu.reciprocal %89 {approx = true} : vector<4x16x1xf32> -> vector<4x16x1xf32>
    %91 = vector.broadcast %90 : vector<4x16x1xf32> to vector<4x16x8xf32>
    %92 = arith.mulf %87, %91 : vector<4x16x8xf32>
    %93 = arith.truncf %92 : vector<4x16x8xf32> to vector<4x16x8xbf16>
    %94 = vector.shape_cast %47 : vector<16x16xf32> to vector<1x16x16xf32>
    %95 = vector.broadcast %94 : vector<1x16x16xf32> to vector<4x16x16xf32>
    %96 = arith.addf %51, %95 : vector<4x16x16xf32>
    %cst_52 = arith.constant dense<0xFF800000> : vector<4x16xf32>
    %97 = vector.multi_reduction <maximumf>, %96, %cst_52 [2] : vector<4x16x16xf32> to vector<4x16xf32>
    %98 = vector.shape_cast %97 : vector<4x16xf32> to vector<4x16x1xf32>
    %99 = vector.broadcast %98 : vector<4x16x1xf32> to vector<4x16x16xf32>
    %100 = arith.subf %96, %99 : vector<4x16x16xf32>
    %101 = math.exp %100 : vector<4x16x16xf32>
    %cst_53 = arith.constant dense<0.000000e+00> : vector<4x16xf32>
    %102 = vector.multi_reduction <add>, %101, %cst_53 [2] : vector<4x16x16xf32> to vector<4x16xf32>
    %103 = vector.shape_cast %102 : vector<4x16xf32> to vector<4x16x1xf32>
    %104 = tpu.reciprocal %103 {approx = true} : vector<4x16x1xf32> -> vector<4x16x1xf32>
    %105 = vector.broadcast %104 : vector<4x16x1xf32> to vector<4x16x16xf32>
    %106 = arith.mulf %101, %105 : vector<4x16x16xf32>
    %107 = arith.truncf %106 : vector<4x16x16xf32> to vector<4x16x16xbf16>
    "tpu.trace_start"() <{level = 10 : i32, message = "hlk,hkd->hld"}> : () -> ()
    %cst_54 = arith.constant dense<0.000000e+00> : vector<4x8x8xf32>
    %108 = tpu.matmul %65, %5, %cst_54 {dimension_numbers = #tpu.dot_dimension_numbers<[2], [1], [1], [2], [0, 0, 0, 1, 1, 2], [0], [0]>} : vector<4x8x8xbf16>, vector<4x8x8xbf16>, vector<4x8x8xf32> -> vector<4x8x8xf32>
    %cst_55 = arith.constant dense<0.000000e+00> : vector<4x8x8xf32>
    %109 = tpu.matmul %79, %11, %cst_55 {dimension_numbers = #tpu.dot_dimension_numbers<[2], [1], [1], [2], [0, 0, 0, 1, 1, 2], [0], [0]>} : vector<4x8x16xbf16>, vector<4x16x8xbf16>, vector<4x8x8xf32> -> vector<4x8x8xf32>
    "tpu.trace_stop"() : () -> ()
    %110 = arith.addf %108, %109 : vector<4x8x8xf32>
    "tpu.trace_start"() <{level = 10 : i32, message = "hlk,hkd->hld"}> : () -> ()
    %cst_56 = arith.constant dense<0.000000e+00> : vector<4x16x8xf32>
    %111 = tpu.matmul %93, %5, %cst_56 {dimension_numbers = #tpu.dot_dimension_numbers<[2], [1], [1], [2], [0, 0, 0, 1, 1, 2], [0], [0]>} : vector<4x16x8xbf16>, vector<4x8x8xbf16>, vector<4x16x8xf32> -> vector<4x16x8xf32>
    %cst_57 = arith.constant dense<0.000000e+00> : vector<4x16x8xf32>
    %112 = tpu.matmul %107, %11, %cst_57 {dimension_numbers = #tpu.dot_dimension_numbers<[2], [1], [1], [2], [0, 0, 0, 1, 1, 2], [0], [0]>} : vector<4x16x16xbf16>, vector<4x16x8xbf16>, vector<4x16x8xf32> -> vector<4x16x8xf32>
    "tpu.trace_stop"() : () -> ()
    %113 = arith.addf %111, %112 : vector<4x16x8xf32>
    %cst_58 = arith.constant 5.000000e-01 : f32
    %114 = vector.broadcast %cst_58 : f32 to vector<8x1xf32>
    %115 = arith.mulf %114, %13 : vector<8x1xf32>
    %116 = vector.shape_cast %115 : vector<8x1xf32> to vector<1x8x1xf32>
    %117 = vector.broadcast %116 : vector<1x8x1xf32> to vector<4x8x8xf32>
    %118 = arith.mulf %110, %117 : vector<4x8x8xf32>
    %c0_59 = arith.constant 0 : index
    %c0_60 = arith.constant 0 : index
    %c0_61 = arith.constant 0 : index
    %c0_62 = arith.constant 0 : index
    %119 = vector.load %arg11[%c0_59, %c0_60, %c0_61, %c0_62] : memref<2x4x8x8xf32, #tpu.memory_space<vmem>>, vector<1x4x8x8xf32>
    %120 = vector.shape_cast %119 : vector<1x4x8x8xf32> to vector<4x8x8xf32>
    %121 = vector.shape_cast %118 : vector<4x8x8xf32> to vector<1x4x8x8xf32>
    tpu.vector_store %arg11[%c0_59, %c0_60, %c0_61, %c0_62], %121 {strides = array<i32>} : memref<2x4x8x8xf32, #tpu.memory_space<vmem>>, vector<1x4x8x8xf32>,
    %cst_63 = arith.constant 5.000000e-01 : f32
    %122 = vector.broadcast %cst_63 : f32 to vector<16x1xf32>
    %123 = arith.mulf %122, %17 : vector<16x1xf32>
    %124 = vector.shape_cast %123 : vector<16x1xf32> to vector<1x16x1xf32>
    %125 = vector.broadcast %124 : vector<1x16x1xf32> to vector<4x16x8xf32>
    %126 = arith.mulf %113, %125 : vector<4x16x8xf32>
    %c0_64 = arith.constant 0 : index
    %c0_65 = arith.constant 0 : index
    %c0_66 = arith.constant 0 : index
    %c0_67 = arith.constant 0 : index
    %127 = vector.load %arg12[%c0_64, %c0_65, %c0_66, %c0_67] : memref<2x4x16x8xf32, #tpu.memory_space<vmem>>, vector<1x4x16x8xf32>
    %128 = vector.shape_cast %127 : vector<1x4x16x8xf32> to vector<4x16x8xf32>
    %129 = vector.shape_cast %126 : vector<4x16x8xf32> to vector<1x4x16x8xf32>
    tpu.vector_store %arg12[%c0_64, %c0_65, %c0_66, %c0_67], %129 {strides = array<i32>} : memref<2x4x16x8xf32, #tpu.memory_space<vmem>>, vector<1x4x16x8xf32>,
    %c1 = arith.constant 1 : index
    %c0_68 = arith.constant 0 : index
    %c0_69 = arith.constant 0 : index
    %c0_70 = arith.constant 0 : index
    %130 = vector.load %arg1[%c1, %c0_68, %c0_69, %c0_70] : memref<2x4x8x8xbf16, #tpu.memory_space<vmem>>, vector<1x4x8x8xbf16>
    %131 = vector.shape_cast %130 : vector<1x4x8x8xbf16> to vector<4x8x8xbf16>
    %c1_71 = arith.constant 1 : index
    %c0_72 = arith.constant 0 : index
    %c0_73 = arith.constant 0 : index
    %c0_74 = arith.constant 0 : index
    %132 = vector.load %arg2[%c1_71, %c0_72, %c0_73, %c0_74] : memref<2x4x8x8xbf16, #tpu.memory_space<vmem>>, vector<1x4x8x8xbf16>
    %133 = vector.shape_cast %132 : vector<1x4x8x8xbf16> to vector<4x8x8xbf16>
    %c1_75 = arith.constant 1 : index
    %c0_76 = arith.constant 0 : index
    %c0_77 = arith.constant 0 : index
    %c0_78 = arith.constant 0 : index
    %134 = vector.load %arg3[%c1_75, %c0_76, %c0_77, %c0_78] : memref<2x4x8x8xbf16, #tpu.memory_space<vmem>>, vector<1x4x8x8xbf16>
    %135 = vector.shape_cast %134 : vector<1x4x8x8xbf16> to vector<4x8x8xbf16>
    %c1_79 = arith.constant 1 : index
    %c0_80 = arith.constant 0 : index
    %c0_81 = arith.constant 0 : index
    %c0_82 = arith.constant 0 : index
    %136 = vector.load %arg4[%c1_79, %c0_80, %c0_81, %c0_82] : memref<2x4x16x8xbf16, #tpu.memory_space<vmem>>, vector<1x4x16x8xbf16>
    %137 = vector.shape_cast %136 : vector<1x4x16x8xbf16> to vector<4x16x8xbf16>
    %c1_83 = arith.constant 1 : index
    %c0_84 = arith.constant 0 : index
    %c0_85 = arith.constant 0 : index
    %c0_86 = arith.constant 0 : index
    %138 = vector.load %arg5[%c1_83, %c0_84, %c0_85, %c0_86] : memref<2x4x16x8xbf16, #tpu.memory_space<vmem>>, vector<1x4x16x8xbf16>
    %139 = vector.shape_cast %138 : vector<1x4x16x8xbf16> to vector<4x16x8xbf16>
    %c1_87 = arith.constant 1 : index
    %c0_88 = arith.constant 0 : index
    %c0_89 = arith.constant 0 : index
    %c0_90 = arith.constant 0 : index
    %140 = vector.load %arg6[%c1_87, %c0_88, %c0_89, %c0_90] : memref<2x4x16x8xbf16, #tpu.memory_space<vmem>>, vector<1x4x16x8xbf16>
    %141 = vector.shape_cast %140 : vector<1x4x16x8xbf16> to vector<4x16x8xbf16>
    %c1_91 = arith.constant 1 : index
    %c0_92 = arith.constant 0 : index
    %c0_93 = arith.constant 0 : index
    %142 = vector.load %arg7[%c1_91, %c0_92, %c0_93] : memref<2x8x1xf32, #tpu.memory_space<vmem>>, vector<1x8x1xf32>
    %143 = vector.shape_cast %142 : vector<1x8x1xf32> to vector<8x1xf32>
    %c1_94 = arith.constant 1 : index
    %c0_95 = arith.constant 0 : index
    %c0_96 = arith.constant 0 : index
    %144 = vector.load %arg8[%c1_94, %c0_95, %c0_96] : memref<2x1x8xf32, #tpu.memory_space<vmem>>, vector<1x1x8xf32>
    %145 = vector.shape_cast %144 : vector<1x1x8xf32> to vector<1x8xf32>
    %c1_97 = arith.constant 1 : index
    %c0_98 = arith.constant 0 : index
    %c0_99 = arith.constant 0 : index
    %146 = vector.load %arg9[%c1_97, %c0_98, %c0_99] : memref<2x16x1xf32, #tpu.memory_space<vmem>>, vector<1x16x1xf32>
    %147 = vector.shape_cast %146 : vector<1x16x1xf32> to vector<16x1xf32>
    %c1_100 = arith.constant 1 : index
    %c0_101 = arith.constant 0 : index
    %c0_102 = arith.constant 0 : index
    %148 = vector.load %arg10[%c1_100, %c0_101, %c0_102] : memref<2x1x16xf32, #tpu.memory_space<vmem>>, vector<1x1x16xf32>
    %149 = vector.shape_cast %148 : vector<1x1x16xf32> to vector<1x16xf32>
    %150 = vector.broadcast %143 : vector<8x1xf32> to vector<8x8xf32>
    %151 = vector.broadcast %145 : vector<1x8xf32> to vector<8x8xf32>
    %152 = arith.mulf %150, %151 : vector<8x8xf32>
    %cst_103 = arith.constant 1.000000e+00 : f32
    %153 = vector.broadcast %cst_103 : f32 to vector<8x8xf32>
    %154 = arith.subf %152, %153 : vector<8x8xf32>
    %cst_104 = arith.constant 1.000000e+06 : f32
    %155 = vector.broadcast %cst_104 : f32 to vector<8x8xf32>
    %156 = arith.mulf %154, %155 : vector<8x8xf32>
    %157 = vector.broadcast %143 : vector<8x1xf32> to vector<8x16xf32>
    %158 = vector.broadcast %149 : vector<1x16xf32> to vector<8x16xf32>
    %159 = arith.mulf %157, %158 : vector<8x16xf32>
    %cst_105 = arith.constant 1.000000e+00 : f32
    %160 = vector.broadcast %cst_105 : f32 to vector<8x16xf32>
    %161 = arith.subf %159, %160 : vector<8x16xf32>
    %cst_106 = arith.constant 1.000000e+06 : f32
    %162 = vector.broadcast %cst_106 : f32 to vector<8x16xf32>
    %163 = arith.mulf %161, %162 : vector<8x16xf32>
    %164 = vector.broadcast %147 : vector<16x1xf32> to vector<16x8xf32>
    %165 = vector.broadcast %145 : vector<1x8xf32> to vector<16x8xf32>
    %166 = arith.mulf %164, %165 : vector<16x8xf32>
    %cst_107 = arith.constant 1.000000e+00 : f32
    %167 = vector.broadcast %cst_107 : f32 to vector<16x8xf32>
    %168 = arith.subf %166, %167 : vector<16x8xf32>
    %cst_108 = arith.constant 1.000000e+06 : f32
    %169 = vector.broadcast %cst_108 : f32 to vector<16x8xf32>
    %170 = arith.mulf %168, %169 : vector<16x8xf32>
    %171 = vector.broadcast %147 : vector<16x1xf32> to vector<16x16xf32>
    %172 = vector.broadcast %149 : vector<1x16xf32> to vector<16x16xf32>
    %173 = arith.mulf %171, %172 : vector<16x16xf32>
    %cst_109 = arith.constant 1.000000e+00 : f32
    %174 = vector.broadcast %cst_109 : f32 to vector<16x16xf32>
    %175 = arith.subf %173, %174 : vector<16x16xf32>
    %cst_110 = arith.constant 1.000000e+06 : f32
    %176 = vector.broadcast %cst_110 : f32 to vector<16x16xf32>
    %177 = arith.mulf %175, %176 : vector<16x16xf32>
    "tpu.trace_start"() <{level = 10 : i32, message = "hld,hkd->hlk"}> : () -> ()
    %cst_111 = arith.constant dense<0.000000e+00> : vector<4x8x8xf32>
    %178 = tpu.matmul %131, %133, %cst_111 {dimension_numbers = #tpu.dot_dimension_numbers<[2], [2], [1], [1], [0, 0, 0, 1, 1, 1], [0], [0]>} : vector<4x8x8xbf16>, vector<4x8x8xbf16>, vector<4x8x8xf32> -> vector<4x8x8xf32>
    %cst_112 = arith.constant dense<0.000000e+00> : vector<4x8x16xf32>
    %179 = tpu.matmul %131, %139, %cst_112 {dimension_numbers = #tpu.dot_dimension_numbers<[2], [2], [1], [1], [0, 0, 0, 1, 1, 1], [0], [0]>} : vector<4x8x8xbf16>, vector<4x16x8xbf16>, vector<4x8x16xf32> -> vector<4x8x16xf32>
    %cst_113 = arith.constant dense<0.000000e+00> : vector<4x16x8xf32>
    %180 = tpu.matmul %137, %133, %cst_113 {dimension_numbers = #tpu.dot_dimension_numbers<[2], [2], [1], [1], [0, 0, 0, 1, 1, 1], [0], [0]>} : vector<4x16x8xbf16>, vector<4x8x8xbf16>, vector<4x16x8xf32> -> vector<4x16x8xf32>
    %cst_114 = arith.constant dense<0.000000e+00> : vector<4x16x16xf32>
    %181 = tpu.matmul %137, %139, %cst_114 {dimension_numbers = #tpu.dot_dimension_numbers<[2], [2], [1], [1], [0, 0, 0, 1, 1, 1], [0], [0]>} : vector<4x16x8xbf16>, vector<4x16x8xbf16>, vector<4x16x16xf32> -> vector<4x16x16xf32>
    "tpu.trace_stop"() : () -> ()
    %182 = vector.shape_cast %156 : vector<8x8xf32> to vector<1x8x8xf32>
    %183 = vector.broadcast %182 : vector<1x8x8xf32> to vector<4x8x8xf32>
    %184 = arith.addf %178, %183 : vector<4x8x8xf32>
    %cst_115 = arith.constant dense<0xFF800000> : vector<4x8xf32>
    %185 = vector.multi_reduction <maximumf>, %184, %cst_115 [2] : vector<4x8x8xf32> to vector<4x8xf32>
    %186 = vector.shape_cast %185 : vector<4x8xf32> to vector<4x8x1xf32>
    %187 = vector.broadcast %186 : vector<4x8x1xf32> to vector<4x8x8xf32>
    %188 = arith.subf %184, %187 : vector<4x8x8xf32>
    %189 = math.exp %188 : vector<4x8x8xf32>
    %cst_116 = arith.constant dense<0.000000e+00> : vector<4x8xf32>
    %190 = vector.multi_reduction <add>, %189, %cst_116 [2] : vector<4x8x8xf32> to vector<4x8xf32>
    %191 = vector.shape_cast %190 : vector<4x8xf32> to vector<4x8x1xf32>
    %192 = tpu.reciprocal %191 {approx = true} : vector<4x8x1xf32> -> vector<4x8x1xf32>
    %193 = vector.broadcast %192 : vector<4x8x1xf32> to vector<4x8x8xf32>
    %194 = arith.mulf %189, %193 : vector<4x8x8xf32>
    %195 = arith.truncf %194 : vector<4x8x8xf32> to vector<4x8x8xbf16>
    %196 = vector.shape_cast %163 : vector<8x16xf32> to vector<1x8x16xf32>
    %197 = vector.broadcast %196 : vector<1x8x16xf32> to vector<4x8x16xf32>
    %198 = arith.addf %179, %197 : vector<4x8x16xf32>
    %cst_117 = arith.constant dense<0xFF800000> : vector<4x8xf32>
    %199 = vector.multi_reduction <maximumf>, %198, %cst_117 [2] : vector<4x8x16xf32> to vector<4x8xf32>
    %200 = vector.shape_cast %199 : vector<4x8xf32> to vector<4x8x1xf32>
    %201 = vector.broadcast %200 : vector<4x8x1xf32> to vector<4x8x16xf32>
    %202 = arith.subf %198, %201 : vector<4x8x16xf32>
    %203 = math.exp %202 : vector<4x8x16xf32>
    %cst_118 = arith.constant dense<0.000000e+00> : vector<4x8xf32>
    %204 = vector.multi_reduction <add>, %203, %cst_118 [2] : vector<4x8x16xf32> to vector<4x8xf32>
    %205 = vector.shape_cast %204 : vector<4x8xf32> to vector<4x8x1xf32>
    %206 = tpu.reciprocal %205 {approx = true} : vector<4x8x1xf32> -> vector<4x8x1xf32>
    %207 = vector.broadcast %206 : vector<4x8x1xf32> to vector<4x8x16xf32>
    %208 = arith.mulf %203, %207 : vector<4x8x16xf32>
    %209 = arith.truncf %208 : vector<4x8x16xf32> to vector<4x8x16xbf16>
    %210 = vector.shape_cast %170 : vector<16x8xf32> to vector<1x16x8xf32>
    %211 = vector.broadcast %210 : vector<1x16x8xf32> to vector<4x16x8xf32>
    %212 = arith.addf %180, %211 : vector<4x16x8xf32>
    %cst_119 = arith.constant dense<0xFF800000> : vector<4x16xf32>
    %213 = vector.multi_reduction <maximumf>, %212, %cst_119 [2] : vector<4x16x8xf32> to vector<4x16xf32>
    %214 = vector.shape_cast %213 : vector<4x16xf32> to vector<4x16x1xf32>
    %215 = vector.broadcast %214 : vector<4x16x1xf32> to vector<4x16x8xf32>
    %216 = arith.subf %212, %215 : vector<4x16x8xf32>
    %217 = math.exp %216 : vector<4x16x8xf32>
    %cst_120 = arith.constant dense<0.000000e+00> : vector<4x16xf32>
    %218 = vector.multi_reduction <add>, %217, %cst_120 [2] : vector<4x16x8xf32> to vector<4x16xf32>
    %219 = vector.shape_cast %218 : vector<4x16xf32> to vector<4x16x1xf32>
    %220 = tpu.reciprocal %219 {approx = true} : vector<4x16x1xf32> -> vector<4x16x1xf32>
    %221 = vector.broadcast %220 : vector<4x16x1xf32> to vector<4x16x8xf32>
    %222 = arith.mulf %217, %221 : vector<4x16x8xf32>
    %223 = arith.truncf %222 : vector<4x16x8xf32> to vector<4x16x8xbf16>
    %224 = vector.shape_cast %177 : vector<16x16xf32> to vector<1x16x16xf32>
    %225 = vector.broadcast %224 : vector<1x16x16xf32> to vector<4x16x16xf32>
    %226 = arith.addf %181, %225 : vector<4x16x16xf32>
    %cst_121 = arith.constant dense<0xFF800000> : vector<4x16xf32>
    %227 = vector.multi_reduction <maximumf>, %226, %cst_121 [2] : vector<4x16x16xf32> to vector<4x16xf32>
    %228 = vector.shape_cast %227 : vector<4x16xf32> to vector<4x16x1xf32>
    %229 = vector.broadcast %228 : vector<4x16x1xf32> to vector<4x16x16xf32>
    %230 = arith.subf %226, %229 : vector<4x16x16xf32>
    %231 = math.exp %230 : vector<4x16x16xf32>
    %cst_122 = arith.constant dense<0.000000e+00> : vector<4x16xf32>
    %232 = vector.multi_reduction <add>, %231, %cst_122 [2] : vector<4x16x16xf32> to vector<4x16xf32>
    %233 = vector.shape_cast %232 : vector<4x16xf32> to vector<4x16x1xf32>
    %234 = tpu.reciprocal %233 {approx = true} : vector<4x16x1xf32> -> vector<4x16x1xf32>
    %235 = vector.broadcast %234 : vector<4x16x1xf32> to vector<4x16x16xf32>
    %236 = arith.mulf %231, %235 : vector<4x16x16xf32>
    %237 = arith.truncf %236 : vector<4x16x16xf32> to vector<4x16x16xbf16>
    "tpu.trace_start"() <{level = 10 : i32, message = "hlk,hkd->hld"}> : () -> ()
    %cst_123 = arith.constant dense<0.000000e+00> : vector<4x8x8xf32>
    %238 = tpu.matmul %195, %135, %cst_123 {dimension_numbers = #tpu.dot_dimension_numbers<[2], [1], [1], [2], [0, 0, 0, 1, 1, 2], [0], [0]>} : vector<4x8x8xbf16>, vector<4x8x8xbf16>, vector<4x8x8xf32> -> vector<4x8x8xf32>
    %cst_124 = arith.constant dense<0.000000e+00> : vector<4x8x8xf32>
    %239 = tpu.matmul %209, %141, %cst_124 {dimension_numbers = #tpu.dot_dimension_numbers<[2], [1], [1], [2], [0, 0, 0, 1, 1, 2], [0], [0]>} : vector<4x8x16xbf16>, vector<4x16x8xbf16>, vector<4x8x8xf32> -> vector<4x8x8xf32>
    "tpu.trace_stop"() : () -> ()
    %240 = arith.addf %238, %239 : vector<4x8x8xf32>
    "tpu.trace_start"() <{level = 10 : i32, message = "hlk,hkd->hld"}> : () -> ()
    %cst_125 = arith.constant dense<0.000000e+00> : vector<4x16x8xf32>
    %241 = tpu.matmul %223, %135, %cst_125 {dimension_numbers = #tpu.dot_dimension_numbers<[2], [1], [1], [2], [0, 0, 0, 1, 1, 2], [0], [0]>} : vector<4x16x8xbf16>, vector<4x8x8xbf16>, vector<4x16x8xf32> -> vector<4x16x8xf32>
    %cst_126 = arith.constant dense<0.000000e+00> : vector<4x16x8xf32>
    %242 = tpu.matmul %237, %141, %cst_126 {dimension_numbers = #tpu.dot_dimension_numbers<[2], [1], [1], [2], [0, 0, 0, 1, 1, 2], [0], [0]>} : vector<4x16x16xbf16>, vector<4x16x8xbf16>, vector<4x16x8xf32> -> vector<4x16x8xf32>
    "tpu.trace_stop"() : () -> ()
    %243 = arith.addf %241, %242 : vector<4x16x8xf32>
    %cst_127 = arith.constant 5.000000e-01 : f32
    %244 = vector.broadcast %cst_127 : f32 to vector<8x1xf32>
    %245 = arith.mulf %244, %143 : vector<8x1xf32>
    %246 = vector.shape_cast %245 : vector<8x1xf32> to vector<1x8x1xf32>
    %247 = vector.broadcast %246 : vector<1x8x1xf32> to vector<4x8x8xf32>
    %248 = arith.mulf %240, %247 : vector<4x8x8xf32>
    %c1_128 = arith.constant 1 : index
    %c0_129 = arith.constant 0 : index
    %c0_130 = arith.constant 0 : index
    %c0_131 = arith.constant 0 : index
    %249 = vector.load %arg11[%c1_128, %c0_129, %c0_130, %c0_131] : memref<2x4x8x8xf32, #tpu.memory_space<vmem>>, vector<1x4x8x8xf32>
    %250 = vector.shape_cast %249 : vector<1x4x8x8xf32> to vector<4x8x8xf32>
    %251 = vector.shape_cast %248 : vector<4x8x8xf32> to vector<1x4x8x8xf32>
    tpu.vector_store %arg11[%c1_128, %c0_129, %c0_130, %c0_131], %251 {strides = array<i32>} : memref<2x4x8x8xf32, #tpu.memory_space<vmem>>, vector<1x4x8x8xf32>,
    %cst_132 = arith.constant 5.000000e-01 : f32
    %252 = vector.broadcast %cst_132 : f32 to vector<16x1xf32>
    %253 = arith.mulf %252, %147 : vector<16x1xf32>
    %254 = vector.shape_cast %253 : vector<16x1xf32> to vector<1x16x1xf32>
    %255 = vector.broadcast %254 : vector<1x16x1xf32> to vector<4x16x8xf32>
    %256 = arith.mulf %243, %255 : vector<4x16x8xf32>
    %c1_133 = arith.constant 1 : index
    %c0_134 = arith.constant 0 : index
    %c0_135 = arith.constant 0 : index
    %c0_136 = arith.constant 0 : index
    %257 = vector.load %arg12[%c1_133, %c0_134, %c0_135, %c0_136] : memref<2x4x16x8xf32, #tpu.memory_space<vmem>>, vector<1x4x16x8xf32>
    %258 = vector.shape_cast %257 : vector<1x4x16x8xf32> to vector<4x16x8xf32>
    %259 = vector.shape_cast %256 : vector<4x16x8xf32> to vector<1x4x16x8xf32>
    tpu.vector_store %arg12[%c1_133, %c0_134, %c0_135, %c0_136], %259 {strides = array<i32>} : memref<2x4x16x8xf32, #tpu.memory_space<vmem>>, vector<1x4x16x8xf32>,
    return
  }
  func.func @transform_0(%arg0: i32) -> (i32, i32, i32, i32) {
    %c0_i32 = arith.constant 0 : i32
    %c0_i32_0 = arith.constant 0 : i32
    %c0_i32_1 = arith.constant 0 : i32
    %c0_i32_2 = arith.constant 0 : i32
    return %arg0, %c0_i32, %c0_i32_0, %c0_i32_1 : i32, i32, i32, i32
  }
  func.func @transform_1(%arg0: i32) -> (i32, i32, i32, i32) {
    %c0_i32 = arith.constant 0 : i32
    %c0_i32_0 = arith.constant 0 : i32
    %c0_i32_1 = arith.constant 0 : i32
    %c0_i32_2 = arith.constant 0 : i32
    return %arg0, %c0_i32, %c0_i32_0, %c0_i32_1 : i32, i32, i32, i32
  }
  func.func @transform_2(%arg0: i32) -> (i32, i32, i32, i32) {
    %c0_i32 = arith.constant 0 : i32
    %c0_i32_0 = arith.constant 0 : i32
    %c0_i32_1 = arith.constant 0 : i32
    %c0_i32_2 = arith.constant 0 : i32
    return %arg0, %c0_i32, %c0_i32_0, %c0_i32_1 : i32, i32, i32, i32
  }
  func.func @transform_3(%arg0: i32) -> (i32, i32, i32, i32) {
    %c0_i32 = arith.constant 0 : i32
    %c0_i32_0 = arith.constant 0 : i32
    %c0_i32_1 = arith.constant 0 : i32
    %c0_i32_2 = arith.constant 0 : i32
    return %arg0, %c0_i32, %c0_i32_0, %c0_i32_1 : i32, i32, i32, i32
  }
  func.func @transform_4(%arg0: i32) -> (i32, i32, i32, i32) {
    %c0_i32 = arith.constant 0 : i32
    %c0_i32_0 = arith.constant 0 : i32
    %c0_i32_1 = arith.constant 0 : i32
    %c0_i32_2 = arith.constant 0 : i32
    return %arg0, %c0_i32, %c0_i32_0, %c0_i32_1 : i32, i32, i32, i32
  }
  func.func @transform_5(%arg0: i32) -> (i32, i32, i32, i32) {
    %c0_i32 = arith.constant 0 : i32
    %c0_i32_0 = arith.constant 0 : i32
    %c0_i32_1 = arith.constant 0 : i32
    %c0_i32_2 = arith.constant 0 : i32
    return %arg0, %c0_i32, %c0_i32_0, %c0_i32_1 : i32, i32, i32, i32
  }
  func.func @transform_6(%arg0: i32) -> (i32, i32, i32) {
    %c0_i32 = arith.constant 0 : i32
    %c0_i32_0 = arith.constant 0 : i32
    %c0_i32_1 = arith.constant 0 : i32
    return %arg0, %c0_i32, %c0_i32_0 : i32, i32, i32
  }
  func.func @transform_7(%arg0: i32) -> (i32, i32, i32) {
    %c0_i32 = arith.constant 0 : i32
    %c0_i32_0 = arith.constant 0 : i32
    %c0_i32_1 = arith.constant 0 : i32
    return %arg0, %c0_i32, %c0_i32_0 : i32, i32, i32
  }
  func.func @transform_8(%arg0: i32) -> (i32, i32, i32) {
    %c0_i32 = arith.constant 0 : i32
    %c0_i32_0 = arith.constant 0 : i32
    %c0_i32_1 = arith.constant 0 : i32
    return %arg0, %c0_i32, %c0_i32_0 : i32, i32, i32
  }
  func.func @transform_9(%arg0: i32) -> (i32, i32, i32) {
    %c0_i32 = arith.constant 0 : i32
    %c0_i32_0 = arith.constant 0 : i32
    %c0_i32_1 = arith.constant 0 : i32
    return %arg0, %c0_i32, %c0_i32_0 : i32, i32, i32
  }
  func.func @transform_10(%arg0: i32) -> (i32, i32, i32, i32) {
    %c0_i32 = arith.constant 0 : i32
    %c0_i32_0 = arith.constant 0 : i32
    %c0_i32_1 = arith.constant 0 : i32
    %c0_i32_2 = arith.constant 0 : i32
    return %arg0, %c0_i32, %c0_i32_0, %c0_i32_1 : i32, i32, i32, i32
  }
  func.func @transform_11(%arg0: i32) -> (i32, i32, i32, i32) {
    %c0_i32 = arith.constant 0 : i32
    %c0_i32_0 = arith.constant 0 : i32
    %c0_i32_1 = arith.constant 0 : i32
    %c0_i32_2 = arith.constant 0 : i32
    return %arg0, %c0_i32, %c0_i32_0, %c0_i32_1 : i32, i32, i32, i32
  }
}

</mosaic_0001>

<llo_original>
// kernel: tpu_custom_call.1
$region0: #{tpu_custom_call.1}
  #allocation0 [shape = 'u32[]', space=smem, size = 0x4, offset = 0x4, fixed_abs, tag = 'smem constant byte address 0x4 - core index']
  #allocation1 [shape = 'u32[144,128]{1,0:T(1,128)}', space=vmem, size = 0x12000, scoped, tag = 'internal scratch']
  %s0 = inlined_call_operand.vmem [shape: bf16[2,4,8,8], index: 0, kind: input, shape index: {}]
  %s1 = inlined_call_operand.vmem [shape: bf16[2,4,8,8], index: 1, kind: input, shape index: {}]
  %s2 = inlined_call_operand.vmem [shape: bf16[2,4,8,8], index: 2, kind: input, shape index: {}]
  %s3 = inlined_call_operand.vmem [shape: bf16[2,4,16,8], index: 3, kind: input, shape index: {}]
  %s4 = inlined_call_operand.vmem [shape: bf16[2,4,16,8], index: 4, kind: input, shape index: {}]
  %s5 = inlined_call_operand.vmem [shape: bf16[2,4,16,8], index: 5, kind: input, shape index: {}]
  %s6 = inlined_call_operand.vmem [shape: f32[2,8,1], index: 6, kind: input, shape index: {}]
  %s7 = inlined_call_operand.vmem [shape: f32[2,1,8], index: 7, kind: input, shape index: {}]
  %s8 = inlined_call_operand.vmem [shape: f32[2,16,1], index: 8, kind: input, shape index: {}]
  %s9 = inlined_call_operand.vmem [shape: f32[2,1,16], index: 9, kind: input, shape index: {}]
  %s10 = inlined_call_operand.hbm [shape: f32[2,4,8,8], index: 10, kind: output, shape index: {0}]
  %s11 = inlined_call_operand.vmem [shape: f32[2,4,16,8], index: 11, kind: output, shape index: {1}]
  %12 = xla_tuple %s10, %s11
  %s13 = sld [smem:[#allocation0]]
  $region58: #{tpu_custom_call.1} parent=0
    _
  %s15 = ssub.s32 1, %s13
  %s16 = scalar_select 0, %s15, %s13
  $region1: #{tpu_custom_call.1} parent=0
    #allocation2 [shape = 'u8[32768]{0}', space=vmem, size = 0x8000, scoped, tag = 'output window, operand 0, single buffered']
    #allocation3 [shape = 's32[1]{0}', space=sflag, size = 0x4, scoped, tag = 'scoped memory for tpu_custom_call.1']
    %17 = vsyncpa [#allocation3], 0
    // Predicated region
    $region2: #{tpu_custom_call.1} parent=1 // pred_check
      _
    $region3: #{tpu_custom_call.1} parent=1 // pred_check_branch
      %19 = sbr.rel (0) target = $region5
    $region4: #{tpu_custom_call.1} parent=1 // pred_region
      _
    $region5: #{tpu_custom_call.1} parent=1 // pred_fallthru
      _
    // Predicated region
    $region6: #{tpu_custom_call.1} parent=1 // pred_check
      _
    $region7: #{tpu_custom_call.1} parent=1 // pred_check_branch
      %21 = sbr.rel (0) target = $region9
    $region8: #{tpu_custom_call.1} parent=1 // pred_region
      _
    $region9: #{tpu_custom_call.1} parent=1 // pred_fallthru
      _
    // Predicated region
    $region10: #{tpu_custom_call.1} parent=1 // pred_check
      _
    $region11: #{tpu_custom_call.1} parent=1 // pred_check_branch
      %23 = sbr.rel (0) target = $region13
    $region12: #{tpu_custom_call.1} parent=1 // pred_region
      _
    $region13: #{tpu_custom_call.1} parent=1 // pred_fallthru
      _
    // Predicated region
    $region14: #{tpu_custom_call.1} parent=1 // pred_check
      _
    $region15: #{tpu_custom_call.1} parent=1 // pred_check_branch
      %25 = sbr.rel (0) target = $region17
    $region16: #{tpu_custom_call.1} parent=1 // pred_region
      _
    $region17: #{tpu_custom_call.1} parent=1 // pred_fallthru
      _
    // Predicated region
    $region18: #{tpu_custom_call.1} parent=1 // pred_check
      _
    $region19: #{tpu_custom_call.1} parent=1 // pred_check_branch
      %27 = sbr.rel (0) target = $region21
    $region20: #{tpu_custom_call.1} parent=1 // pred_region
      _
    $region21: #{tpu_custom_call.1} parent=1 // pred_fallthru
      _
    // Predicated region
    $region22: #{tpu_custom_call.1} parent=1 // pred_check
      _
    $region23: #{tpu_custom_call.1} parent=1 // pred_check_branch
      %29 = sbr.rel (0) target = $region25
    $region24: #{tpu_custom_call.1} parent=1 // pred_region
      _
    $region25: #{tpu_custom_call.1} parent=1 // pred_fallthru
      _
    // Predicated region
    $region26: #{tpu_custom_call.1} parent=1 // pred_check
      _
    $region27: #{tpu_custom_call.1} parent=1 // pred_check_branch
      %31 = sbr.rel (0) target = $region29
    $region28: #{tpu_custom_call.1} parent=1 // pred_region
      _
    $region29: #{tpu_custom_call.1} parent=1 // pred_fallthru
      _
    // Predicated region
    $region30: #{tpu_custom_call.1} parent=1 // pred_check
      _
    $region31: #{tpu_custom_call.1} parent=1 // pred_check_branch
      %33 = sbr.rel (0) target = $region33
    $region32: #{tpu_custom_call.1} parent=1 // pred_region
      _
    $region33: #{tpu_custom_call.1} parent=1 // pred_fallthru
      _
    // Predicated region
    $region34: #{tpu_custom_call.1} parent=1 // pred_check
      _
    $region35: #{tpu_custom_call.1} parent=1 // pred_check_branch
      %35 = sbr.rel (0) target = $region37
    $region36: #{tpu_custom_call.1} parent=1 // pred_region
      _
    $region37: #{tpu_custom_call.1} parent=1 // pred_fallthru
      _
    // Predicated region
    $region38: #{tpu_custom_call.1} parent=1 // pred_check
      _
    $region39: #{tpu_custom_call.1} parent=1 // pred_check_branch
      %37 = sbr.rel (0) target = $region41
    $region40: #{tpu_custom_call.1} parent=1 // pred_region
      _
    $region41: #{tpu_custom_call.1} parent=1 // pred_fallthru
      _
    %v39 = vld [vmem:[%s0] sm:$0xf]
    %v40 = vld [vmem:[%s0 + $0x4] sm:$0xf]
    %v41 = vld [vmem:[%s0 + $0x8] sm:$0xf]
    %v42 = vld [vmem:[%s0 + $0xc] sm:$0xf]
    %v43 = vld [vmem:[%s1] sm:$0xf]
    %v44 = vld [vmem:[%s1 + $0x4] sm:$0xf]
    %v45 = vld [vmem:[%s1 + $0x8] sm:$0xf]
    %v46 = vld [vmem:[%s1 + $0xc] sm:$0xf]
    %v47 = vld [vmem:[%s2] sm:$0xf]
    %v48 = vld [vmem:[%s2 + $0x4] sm:$0xf]
    %v49 = vld [vmem:[%s2 + $0x8] sm:$0xf]
    %v50 = vld [vmem:[%s2 + $0xc] sm:$0xf]
    %v51 = vld [vmem:[%s3] sm:$0xf]
    %v52 = vld [vmem:[%s3 + $0x4] sm:$0xf]
    %v53 = vld [vmem:[%s3 + $0x8] sm:$0xf]
    %v54 = vld [vmem:[%s3 + $0xc] sm:$0xf]
    %v55 = vld [vmem:[%s3 + $0x10] sm:$0xf]
    %v56 = vld [vmem:[%s3 + $0x14] sm:$0xf]
    %v57 = vld [vmem:[%s3 + $0x18] sm:$0xf]
    %v58 = vld [vmem:[%s3 + $0x1c] sm:$0xf]
    %v59 = vld [vmem:[%s4] sm:$0xf]
    %v60 = vld [vmem:[%s4 + $0x4] sm:$0xf]
    %v61 = vld [vmem:[%s4 + $0x8] sm:$0xf]
    %v62 = vld [vmem:[%s4 + $0xc] sm:$0xf]
    %v63 = vld [vmem:[%s4 + $0x10] sm:$0xf]
    %v64 = vld [vmem:[%s4 + $0x14] sm:$0xf]
    %v65 = vld [vmem:[%s4 + $0x18] sm:$0xf]
    %v66 = vld [vmem:[%s4 + $0x1c] sm:$0xf]
    %v67 = vld [vmem:[%s5] sm:$0xf]
    %v68 = vld [vmem:[%s5 + $0x4] sm:$0xf]
    %v69 = vld [vmem:[%s5 + $0x8] sm:$0xf]
    %v70 = vld [vmem:[%s5 + $0xc] sm:$0xf]
    %v71 = vld [vmem:[%s5 + $0x10] sm:$0xf]
    %v72 = vld [vmem:[%s5 + $0x14] sm:$0xf]
    %v73 = vld [vmem:[%s5 + $0x18] sm:$0xf]
    %v74 = vld [vmem:[%s5 + $0x1c] sm:$0xf]
    %v75 = vld [vmem:[%s6] sm:$0xff]
    %v76 = vld [vmem:[%s7] sm:$0x1]
    %v77 = vld [vmem:[%s8] sm:$0xff]
    %v78 = vld [vmem:[%s8 + $0x8] sm:$0xff]
    %v79 = vld [vmem:[%s9] sm:$0x1]
    %81 = vset.pattern.permute.xlu0 0
    %82 = vperm.xlu0 %81, %v75
    %v83 = vpop.permute.xlu0 %82
    %v86 = vlaneseq
    %v87 = vshrl.u32 %v86, 7
    %v88 = vsub.s32 0, %v87
    %v89 = vrot.slane %v76, %v88
    %v91 = vmul.f32 %v83, %v89
    %v92 = vsub.f32 %v91, 1.0
    %v93 = vmul.f32 %v92, 1000000.0
    %v95 = vlaneseq
    %v96 = vshrl.u32 %v95, 7
    %v97 = vsub.s32 0, %v96
    %v98 = vrot.slane %v79, %v97
    %v100 = vmul.f32 %v83, %v98
    %v101 = vsub.f32 %v100, 1.0
    %v102 = vmul.f32 %v101, 1000000.0
    %104 = vset.pattern.permute.xlu0 0
    %105 = vperm.xlu0 %104, %v77
    %v106 = vpop.permute.xlu0 %105
    %109 = vset.pattern.permute.xlu0 0
    %110 = vperm.xlu0 %109, %v78
    %v111 = vpop.permute.xlu0 %110
    %v113 = vmul.f32 %v106, %v89
    %v114 = vmul.f32 %v111, %v89
    %v115 = vsub.f32 %v113, 1.0
    %v116 = vsub.f32 %v114, 1.0
    %v117 = vmul.f32 %v115, 1000000.0
    %v118 = vmul.f32 %v116, 1000000.0
    %v119 = vmul.f32 %v106, %v98
    %v120 = vmul.f32 %v111, %v98
    %v121 = vsub.f32 %v119, 1.0
    %v122 = vsub.f32 %v120, 1.0
    %v123 = vmul.f32 %v121, 1000000.0
    %v124 = vmul.f32 %v122, 1000000.0
    %vm125 = vcmask 64512
    %v127 = vsel %vm125, %v39, 0
    %v130 = vsel %vm125, %v43, 0
    %132 = vmatprep.subr.bf16.mxu0 0
    %133 = vmatpush1.bf16.xpose.msra.mxu0 %v130
    %134 = vmatprep.subr.bf16.mxu0 0
    %135 = vmatpush1.bf16.xpose.msra.mxu0 0
    %136 = vmatprep.subr.bf16.mxu0 0
    %137 = vmatpush1.bf16.xpose.msra.mxu0 0
    %138 = vmatprep.subr.bf16.mxu0 0
    %139 = vmatpush1.bf16.xpose.msra.mxu0 0
    %140 = vmatprep.subr.bf16.mxu0 0
    %141 = vmatpush1.bf16.xpose.msra.mxu0 0
    %142 = vmatprep.subr.bf16.mxu0 0
    %143 = vmatpush1.bf16.xpose.msra.mxu0 0
    %144 = vmatprep.subr.bf16.mxu0 0
    %145 = vmatpush1.bf16.xpose.msra.mxu0 0
    %146 = vmatprep.subr.bf16.mxu0 0
    %147 = vmatpush1.bf16.xpose.msra.mxu0 0
    %148 = vmatprep.subr.bf16.mxu0 0
    %149 = vmatpush1.bf16.xpose.msra.mxu0 0
    %150 = vmatprep.subr.bf16.mxu0 0
    %151 = vmatpush1.bf16.xpose.msra.mxu0 0
    %152 = vmatprep.subr.bf16.mxu0 0
    %153 = vmatpush1.bf16.xpose.msra.mxu0 0
    %154 = vmatprep.subr.bf16.mxu0 0
    %155 = vmatpush1.bf16.xpose.msra.mxu0 0
    %156 = vmatprep.subr.bf16.mxu0 0
    %157 = vmatpush1.bf16.xpose.msra.mxu0 0
    %158 = vmatprep.subr.bf16.mxu0 0
    %159 = vmatpush1.bf16.xpose.msra.mxu0 0
    %160 = vmatprep.subr.bf16.mxu0 0
    %161 = vmatpush1.bf16.xpose.msra.mxu0 0
    %162 = vmatprep.subr.bf16.mxu0 0
    %163 = vmatpush1.bf16.xpose.msra.mxu0 0
    %164 = vmatprep.mubr.bf16.mxu0 0
    %165 = vmatmul.mubr.bf16.gmra.mrb[0].mxu0 %v127
    %v166 = vpop.f32.mrb[0].mxu0
    %v167 = vadd.f32 %v93, %v166
    %v168 = vpop.f32.mrb[0].mxu0
    %v169 = vpop.f32.mrb[0].mxu0
    %v170 = vpop.f32.mrb[0].mxu0
    %171 = vdwg.mxu0
    %v173 = vsel %vm125, %v40, 0
    %v176 = vsel %vm125, %v44, 0
    %178 = vmatprep.subr.bf16.mxu0 0
    %179 = vmatpush1.bf16.xpose.msra.mxu0 %v176
    %180 = vmatprep.subr.bf16.mxu0 0
    %181 = vmatpush1.bf16.xpose.msra.mxu0 0
    %182 = vmatprep.subr.bf16.mxu0 0
    %183 = vmatpush1.bf16.xpose.msra.mxu0 0
    %184 = vmatprep.subr.bf16.mxu0 0
    %185 = vmatpush1.bf16.xpose.msra.mxu0 0
    %186 = vmatprep.subr.bf16.mxu0 0
    %187 = vmatpush1.bf16.xpose.msra.mxu0 0
    %188 = vmatprep.subr.bf16.mxu0 0
    %189 = vmatpush1.bf16.xpose.msra.mxu0 0
    %190 = vmatprep.subr.bf16.mxu0 0
    %191 = vmatpush1.bf16.xpose.msra.mxu0 0
    %192 = vmatprep.subr.bf16.mxu0 0
    %193 = vmatpush1.bf16.xpose.msra.mxu0 0
    %194 = vmatprep.subr.bf16.mxu0 0
    %195 = vmatpush1.bf16.xpose.msra.mxu0 0
    %196 = vmatprep.subr.bf16.mxu0 0
    %197 = vmatpush1.bf16.xpose.msra.mxu0 0
    %198 = vmatprep.subr.bf16.mxu0 0
    %199 = vmatpush1.bf16.xpose.msra.mxu0 0
    %200 = vmatprep.subr.bf16.mxu0 0
    %201 = vmatpush1.bf16.xpose.msra.mxu0 0
    %202 = vmatprep.subr.bf16.mxu0 0
    %203 = vmatpush1.bf16.xpose.msra.mxu0 0
    %204 = vmatprep.subr.bf16.mxu0 0
    %205 = vmatpush1.bf16.xpose.msra.mxu0 0
    %206 = vmatprep.subr.bf16.mxu0 0
    %207 = vmatpush1.bf16.xpose.msra.mxu0 0
    %208 = vmatprep.subr.bf16.mxu0 0
    %209 = vmatpush1.bf16.xpose.msra.mxu0 0
    %210 = vmatprep.mubr.bf16.mxu0 0
    %211 = vmatmul.mubr.bf16.gmra.mrb[0].mxu0 %v173
    %v212 = vpop.f32.mrb[0].mxu0
    %v213 = vadd.f32 %v93, %v212
    %v214 = vpop.f32.mrb[0].mxu0
    %v215 = vpop.f32.mrb[0].mxu0
    %v216 = vpop.f32.mrb[0].mxu0
    %217 = vdwg.mxu0
    %v219 = vsel %vm125, %v41, 0
    %v222 = vsel %vm125, %v45, 0
    %224 = vmatprep.subr.bf16.mxu0 0
    %225 = vmatpush1.bf16.xpose.msra.mxu0 %v222
    %226 = vmatprep.subr.bf16.mxu0 0
    %227 = vmatpush1.bf16.xpose.msra.mxu0 0
    %228 = vmatprep.subr.bf16.mxu0 0
    %229 = vmatpush1.bf16.xpose.msra.mxu0 0
    %230 = vmatprep.subr.bf16.mxu0 0
    %231 = vmatpush1.bf16.xpose.msra.mxu0 0
    %232 = vmatprep.subr.bf16.mxu0 0
    %233 = vmatpush1.bf16.xpose.msra.mxu0 0
    %234 = vmatprep.subr.bf16.mxu0 0
    %235 = vmatpush1.bf16.xpose.msra.mxu0 0
    %236 = vmatprep.subr.bf16.mxu0 0
    %237 = vmatpush1.bf16.xpose.msra.mxu0 0
    %238 = vmatprep.subr.bf16.mxu0 0
    %239 = vmatpush1.bf16.xpose.msra.mxu0 0
    %240 = vmatprep.subr.bf16.mxu0 0
    %241 = vmatpush1.bf16.xpose.msra.mxu0 0
    %242 = vmatprep.subr.bf16.mxu0 0
    %243 = vmatpush1.bf16.xpose.msra.mxu0 0
    %244 = vmatprep.subr.bf16.mxu0 0
    %245 = vmatpush1.bf16.xpose.msra.mxu0 0
    %246 = vmatprep.subr.bf16.mxu0 0
    %247 = vmatpush1.bf16.xpose.msra.mxu0 0
    %248 = vmatprep.subr.bf16.mxu0 0
    %249 = vmatpush1.bf16.xpose.msra.mxu0 0
    %250 = vmatprep.subr.bf16.mxu0 0
    %251 = vmatpush1.bf16.xpose.msra.mxu0 0
    %252 = vmatprep.subr.bf16.mxu0 0
    %253 = vmatpush1.bf16.xpose.msra.mxu0 0
    %254 = vmatprep.subr.bf16.mxu0 0
    %255 = vmatpush1.bf16.xpose.msra.mxu0 0
    %256 = vmatprep.mubr.bf16.mxu0 0
    %257 = vmatmul.mubr.bf16.gmra.mrb[0].mxu0 %v219
    %v258 = vpop.f32.mrb[0].mxu0
    %v259 = vadd.f32 %v93, %v258
    %v260 = vpop.f32.mrb[0].mxu0
    %v261 = vpop.f32.mrb[0].mxu0
    %v262 = vpop.f32.mrb[0].mxu0
    %263 = vdwg.mxu0
    %v265 = vsel %vm125, %v42, 0
    %v268 = vsel %vm125, %v46, 0
    %270 = vmatprep.subr.bf16.mxu0 0
    %271 = vmatpush1.bf16.xpose.msra.mxu0 %v268
    %272 = vmatprep.subr.bf16.mxu0 0
    %273 = vmatpush1.bf16.xpose.msra.mxu0 0
    %274 = vmatprep.subr.bf16.mxu0 0
    %275 = vmatpush1.bf16.xpose.msra.mxu0 0
    %276 = vmatprep.subr.bf16.mxu0 0
    %277 = vmatpush1.bf16.xpose.msra.mxu0 0
    %278 = vmatprep.subr.bf16.mxu0 0
    %279 = vmatpush1.bf16.xpose.msra.mxu0 0
    %280 = vmatprep.subr.bf16.mxu0 0
    %281 = vmatpush1.bf16.xpose.msra.mxu0 0
    %282 = vmatprep.subr.bf16.mxu0 0
    %283 = vmatpush1.bf16.xpose.msra.mxu0 0
    %284 = vmatprep.subr.bf16.mxu0 0
    %285 = vmatpush1.bf16.xpose.msra.mxu0 0
    %286 = vmatprep.subr.bf16.mxu0 0
    %287 = vmatpush1.bf16.xpose.msra.mxu0 0
    %288 = vmatprep.subr.bf16.mxu0 0
    %289 = vmatpush1.bf16.xpose.msra.mxu0 0
    %290 = vmatprep.subr.bf16.mxu0 0
    %291 = vmatpush1.bf16.xpose.msra.mxu0 0
    %292 = vmatprep.subr.bf16.mxu0 0
    %293 = vmatpush1.bf16.xpose.msra.mxu0 0
    %294 = vmatprep.subr.bf16.mxu0 0
    %295 = vmatpush1.bf16.xpose.msra.mxu0 0
    %296 = vmatprep.subr.bf16.mxu0 0
    %297 = vmatpush1.bf16.xpose.msra.mxu0 0
    %298 = vmatprep.subr.bf16.mxu0 0
    %299 = vmatpush1.bf16.xpose.msra.mxu0 0
    %300 = vmatprep.subr.bf16.mxu0 0
    %301 = vmatpush1.bf16.xpose.msra.mxu0 0
    %302 = vmatprep.mubr.bf16.mxu0 0
    %303 = vmatmul.mubr.bf16.gmra.mrb[0].mxu0 %v265
    %v304 = vpop.f32.mrb[0].mxu0
    %v305 = vadd.f32 %v93, %v304
    %v306 = vpop.f32.mrb[0].mxu0
    %v307 = vpop.f32.mrb[0].mxu0
    %v308 = vpop.f32.mrb[0].mxu0
    %309 = vdwg.mxu0
    %v310 = vsel %vm125, %v167, -inf
    %311 = vmax.xlane.f32.xlu0 %v310
    %v312 = vpop.xlane.xlu0 %311
    %v313 = vsel %vm125, %v213, -inf
    %314 = vmax.xlane.f32.xlu0 %v313
    %v315 = vpop.xlane.xlu0 %314
    %v316 = vsel %vm125, %v259, -inf
    %317 = vmax.xlane.f32.xlu0 %v316
    %v318 = vpop.xlane.xlu0 %317
    %v319 = vsel %vm125, %v305, -inf
    %320 = vmax.xlane.f32.xlu0 %v319
    %v321 = vpop.xlane.xlu0 %320
    %v322 = vsub.f32 %v167, %v312
    %v323 = vsub.f32 %v213, %v315
    %v324 = vsub.f32 %v259, %v318
    %v325 = vsub.f32 %v305, %v321
    %v326 = vmul.f32 %v322, 1.442695
    %v327 = vpow.pop %v326
    %v328 = vmul.f32 %v323, 1.442695
    %v329 = vpow.pop %v328
    %v330 = vmul.f32 %v324, 1.442695
    %v331 = vpow.pop %v330
    %v332 = vmul.f32 %v325, 1.442695
    %v333 = vpow.pop %v332
    %v334 = vsel %vm125, %v327, 0.0
    %335 = vadd.xlane.f32.xlu0 %v334
    %v336 = vpop.xlane.xlu0 %335
    %v337 = vsel %vm125, %v329, 0.0
    %338 = vadd.xlane.f32.xlu0 %v337
    %v339 = vpop.xlane.xlu0 %338
    %v340 = vsel %vm125, %v331, 0.0
    %341 = vadd.xlane.f32.xlu0 %v340
    %v342 = vpop.xlane.xlu0 %341
    %v343 = vsel %vm125, %v333, 0.0
    %344 = vadd.xlane.f32.xlu0 %v343
    %v345 = vpop.xlane.xlu0 %344
    %v346 = vrcp.pop %v336
    %v347 = vrcp.pop %v339
    %v348 = vrcp.pop %v342
    %v349 = vrcp.pop %v345
    %v350 = vmul.f32 %v327, %v346
    %v351 = vmul.f32 %v329, %v347
    %v352 = vmul.f32 %v331, %v348
    %v353 = vmul.f32 %v333, %v349
    %v354 = vpack.c.bf16 %v350, %v350
    %v355 = vpack.c.bf16 %v351, %v351
    %v356 = vpack.c.bf16 %v352, %v352
    %v357 = vpack.c.bf16 %v353, %v353
    %v360 = vunpack.c.l.b16 %v59
    %v361 = vunpack.c.l.b16 %v60
    %v362 = vpack.c.b16 %v361, %v360
    %v364 = vsel %vm125, %v362, 0
    %366 = vmatprep.subr.bf16.mxu0 0
    %367 = vmatpush1.bf16.xpose.msra.mxu0 %v364
    %368 = vmatprep.subr.bf16.mxu0 0
    %369 = vmatpush1.bf16.xpose.msra.mxu0 0
    %370 = vmatprep.subr.bf16.mxu0 0
    %371 = vmatpush1.bf16.xpose.msra.mxu0 0
    %372 = vmatprep.subr.bf16.mxu0 0
    %373 = vmatpush1.bf16.xpose.msra.mxu0 0
    %374 = vmatprep.subr.bf16.mxu0 0
    %375 = vmatpush1.bf16.xpose.msra.mxu0 0
    %376 = vmatprep.subr.bf16.mxu0 0
    %377 = vmatpush1.bf16.xpose.msra.mxu0 0
    %378 = vmatprep.subr.bf16.mxu0 0
    %379 = vmatpush1.bf16.xpose.msra.mxu0 0
    %380 = vmatprep.subr.bf16.mxu0 0
    %381 = vmatpush1.bf16.xpose.msra.mxu0 0
    %382 = vmatprep.subr.bf16.mxu0 0
    %383 = vmatpush1.bf16.xpose.msra.mxu0 0
    %384 = vmatprep.subr.bf16.mxu0 0
    %385 = vmatpush1.bf16.xpose.msra.mxu0 0
    %386 = vmatprep.subr.bf16.mxu0 0
    %387 = vmatpush1.bf16.xpose.msra.mxu0 0
    %388 = vmatprep.subr.bf16.mxu0 0
    %389 = vmatpush1.bf16.xpose.msra.mxu0 0
    %390 = vmatprep.subr.bf16.mxu0 0
    %391 = vmatpush1.bf16.xpose.msra.mxu0 0
    %392 = vmatprep.subr.bf16.mxu0 0
    %393 = vmatpush1.bf16.xpose.msra.mxu0 0
    %394 = vmatprep.subr.bf16.mxu0 0
    %395 = vmatpush1.bf16.xpose.msra.mxu0 0
    %396 = vmatprep.subr.bf16.mxu0 0
    %397 = vmatpush1.bf16.xpose.msra.mxu0 0
    %398 = vmatprep.mubr.bf16.mxu0 0
    %399 = vmatmul.mubr.bf16.gmra.mrb[0].mxu0 %v127
    %v400 = vpop.f32.mrb[0].mxu0
    %v401 = vadd.f32 %v102, %v400
    %v402 = vpop.f32.mrb[0].mxu0
    %v403 = vpop.f32.mrb[0].mxu0
    %v404 = vpop.f32.mrb[0].mxu0
    %405 = vdwg.mxu0
    %v408 = vunpack.c.l.b16 %v61
    %v409 = vunpack.c.l.b16 %v62
    %v410 = vpack.c.b16 %v409, %v408
    %v412 = vsel %vm125, %v410, 0
    %414 = vmatprep.subr.bf16.mxu0 0
    %415 = vmatpush1.bf16.xpose.msra.mxu0 %v412
    %416 = vmatprep.subr.bf16.mxu0 0
    %417 = vmatpush1.bf16.xpose.msra.mxu0 0
    %418 = vmatprep.subr.bf16.mxu0 0
    %419 = vmatpush1.bf16.xpose.msra.mxu0 0
    %420 = vmatprep.subr.bf16.mxu0 0
    %421 = vmatpush1.bf16.xpose.msra.mxu0 0
    %422 = vmatprep.subr.bf16.mxu0 0
    %423 = vmatpush1.bf16.xpose.msra.mxu0 0
    %424 = vmatprep.subr.bf16.mxu0 0
    %425 = vmatpush1.bf16.xpose.msra.mxu0 0
    %426 = vmatprep.subr.bf16.mxu0 0
    %427 = vmatpush1.bf16.xpose.msra.mxu0 0
    %428 = vmatprep.subr.bf16.mxu0 0
    %429 = vmatpush1.bf16.xpose.msra.mxu0 0
    %430 = vmatprep.subr.bf16.mxu0 0
    %431 = vmatpush1.bf16.xpose.msra.mxu0 0
    %432 = vmatprep.subr.bf16.mxu0 0
    %433 = vmatpush1.bf16.xpose.msra.mxu0 0
    %434 = vmatprep.subr.bf16.mxu0 0
    %435 = vmatpush1.bf16.xpose.msra.mxu0 0
    %436 = vmatprep.subr.bf16.mxu0 0
    %437 = vmatpush1.bf16.xpose.msra.mxu0 0
    %438 = vmatprep.subr.bf16.mxu0 0
    %439 = vmatpush1.bf16.xpose.msra.mxu0 0
    %440 = vmatprep.subr.bf16.mxu0 0
    %441 = vmatpush1.bf16.xpose.msra.mxu0 0
    %442 = vmatprep.subr.bf16.mxu0 0
    %443 = vmatpush1.bf16.xpose.msra.mxu0 0
    %444 = vmatprep.subr.bf16.mxu0 0
    %445 = vmatpush1.bf16.xpose.msra.mxu0 0
    %446 = vmatprep.mubr.bf16.mxu0 0
    %447 = vmatmul.mubr.bf16.gmra.mrb[0].mxu0 %v173
    %v448 = vpop.f32.mrb[0].mxu0
    %v449 = vadd.f32 %v102, %v448
    %v450 = vpop.f32.mrb[0].mxu0
    %v451 = vpop.f32.mrb[0].mxu0
    %v452 = vpop.f32.mrb[0].mxu0
    %453 = vdwg.mxu0
    %v456 = vunpack.c.l.b16 %v63
    %v457 = vunpack.c.l.b16 %v64
    %v458 = vpack.c.b16 %v457, %v456
    %v460 = vsel %vm125, %v458, 0
    %462 = vmatprep.subr.bf16.mxu0 0
    %463 = vmatpush1.bf16.xpose.msra.mxu0 %v460
    %464 = vmatprep.subr.bf16.mxu0 0
    %465 = vmatpush1.bf16.xpose.msra.mxu0 0
    %466 = vmatprep.subr.bf16.mxu0 0
    %467 = vmatpush1.bf16.xpose.msra.mxu0 0
    %468 = vmatprep.subr.bf16.mxu0 0
    %469 = vmatpush1.bf16.xpose.msra.mxu0 0
    %470 = vmatprep.subr.bf16.mxu0 0
    %471 = vmatpush1.bf16.xpose.msra.mxu0 0
    %472 = vmatprep.subr.bf16.mxu0 0
    %473 = vmatpush1.bf16.xpose.msra.mxu0 0
    %474 = vmatprep.subr.bf16.mxu0 0
    %475 = vmatpush1.bf16.xpose.msra.mxu0 0
    %476 = vmatprep.subr.bf16.mxu0 0
    %477 = vmatpush1.bf16.xpose.msra.mxu0 0
    %478 = vmatprep.subr.bf16.mxu0 0
    %479 = vmatpush1.bf16.xpose.msra.mxu0 0
    %480 = vmatprep.subr.bf16.mxu0 0
    %481 = vmatpush1.bf16.xpose.msra.mxu0 0
    %482 = vmatprep.subr.bf16.mxu0 0
    %483 = vmatpush1.bf16.xpose.msra.mxu0 0
    %484 = vmatprep.subr.bf16.mxu0 0
    %485 = vmatpush1.bf16.xpose.msra.mxu0 0
    %486 = vmatprep.subr.bf16.mxu0 0
    %487 = vmatpush1.bf16.xpose.msra.mxu0 0
    %488 = vmatprep.subr.bf16.mxu0 0
    %489 = vmatpush1.bf16.xpose.msra.mxu0 0
    %490 = vmatprep.subr.bf16.mxu0 0
    %491 = vmatpush1.bf16.xpose.msra.mxu0 0
    %492 = vmatprep.subr.bf16.mxu0 0
    %493 = vmatpush1.bf16.xpose.msra.mxu0 0
    %494 = vmatprep.mubr.bf16.mxu0 0
    %495 = vmatmul.mubr.bf16.gmra.mrb[0].mxu0 %v219
    %v496 = vpop.f32.mrb[0].mxu0
    %v497 = vadd.f32 %v102, %v496
    %v498 = vpop.f32.mrb[0].mxu0
    %v499 = vpop.f32.mrb[0].mxu0
    %v500 = vpop.f32.mrb[0].mxu0
    %501 = vdwg.mxu0
    %v504 = vunpack.c.l.b16 %v65
    %v505 = vunpack.c.l.b16 %v66
    %v506 = vpack.c.b16 %v505, %v504
    %v508 = vsel %vm125, %v506, 0
    %510 = vmatprep.subr.bf16.mxu0 0
    %511 = vmatpush1.bf16.xpose.msra.mxu0 %v508
    %512 = vmatprep.subr.bf16.mxu0 0
    %513 = vmatpush1.bf16.xpose.msra.mxu0 0
    %514 = vmatprep.subr.bf16.mxu0 0
    %515 = vmatpush1.bf16.xpose.msra.mxu0 0
    %516 = vmatprep.subr.bf16.mxu0 0
    %517 = vmatpush1.bf16.xpose.msra.mxu0 0
    %518 = vmatprep.subr.bf16.mxu0 0
    %519 = vmatpush1.bf16.xpose.msra.mxu0 0
    %520 = vmatprep.subr.bf16.mxu0 0
    %521 = vmatpush1.bf16.xpose.msra.mxu0 0
    %522 = vmatprep.subr.bf16.mxu0 0
    %523 = vmatpush1.bf16.xpose.msra.mxu0 0
    %524 = vmatprep.subr.bf16.mxu0 0
    %525 = vmatpush1.bf16.xpose.msra.mxu0 0
    %526 = vmatprep.subr.bf16.mxu0 0
    %527 = vmatpush1.bf16.xpose.msra.mxu0 0
    %528 = vmatprep.subr.bf16.mxu0 0
    %529 = vmatpush1.bf16.xpose.msra.mxu0 0
    %530 = vmatprep.subr.bf16.mxu0 0
    %531 = vmatpush1.bf16.xpose.msra.mxu0 0
    %532 = vmatprep.subr.bf16.mxu0 0
    %533 = vmatpush1.bf16.xpose.msra.mxu0 0
    %534 = vmatprep.subr.bf16.mxu0 0
    %535 = vmatpush1.bf16.xpose.msra.mxu0 0
    %536 = vmatprep.subr.bf16.mxu0 0
    %537 = vmatpush1.bf16.xpose.msra.mxu0 0
    %538 = vmatprep.subr.bf16.mxu0 0
    %539 = vmatpush1.bf16.xpose.msra.mxu0 0
    %540 = vmatprep.subr.bf16.mxu0 0
    %541 = vmatpush1.bf16.xpose.msra.mxu0 0
    %542 = vmatprep.mubr.bf16.mxu0 0
    %543 = vmatmul.mubr.bf16.gmra.mrb[0].mxu0 %v265
    %v544 = vpop.f32.mrb[0].mxu0
    %v545 = vadd.f32 %v102, %v544
    %v546 = vpop.f32.mrb[0].mxu0
    %v547 = vpop.f32.mrb[0].mxu0
    %v548 = vpop.f32.mrb[0].mxu0
    %549 = vdwg.mxu0
    %vm550 = vcmask 130048
    %v551 = vsel %vm550, %v401, -inf
    %552 = vmax.xlane.f32.xlu0 %v551
    %v553 = vpop.xlane.xlu0 %552
    %v554 = vsel %vm550, %v449, -inf
    %555 = vmax.xlane.f32.xlu0 %v554
    %v556 = vpop.xlane.xlu0 %555
    %v557 = vsel %vm550, %v497, -inf
    %558 = vmax.xlane.f32.xlu0 %v557
    %v559 = vpop.xlane.xlu0 %558
    %v560 = vsel %vm550, %v545, -inf
    %561 = vmax.xlane.f32.xlu0 %v560
    %v562 = vpop.xlane.xlu0 %561
    %v563 = vsub.f32 %v401, %v553
    %v564 = vsub.f32 %v449, %v556
    %v565 = vsub.f32 %v497, %v559
    %v566 = vsub.f32 %v545, %v562
    %v567 = vmul.f32 %v563, 1.442695
    %v568 = vpow.pop %v567
    %v569 = vmul.f32 %v564, 1.442695
    %v570 = vpow.pop %v569
    %v571 = vmul.f32 %v565, 1.442695
    %v572 = vpow.pop %v571
    %v573 = vmul.f32 %v566, 1.442695
    %v574 = vpow.pop %v573
    %v575 = vsel %vm550, %v568, 0.0
    %576 = vadd.xlane.f32.xlu0 %v575
    %v577 = vpop.xlane.xlu0 %576
    %v578 = vsel %vm550, %v570, 0.0
    %579 = vadd.xlane.f32.xlu0 %v578
    %v580 = vpop.xlane.xlu0 %579
    %v581 = vsel %vm550, %v572, 0.0
    %582 = vadd.xlane.f32.xlu0 %v581
    %v583 = vpop.xlane.xlu0 %582
    %v584 = vsel %vm550, %v574, 0.0
    %585 = vadd.xlane.f32.xlu0 %v584
    %v586 = vpop.xlane.xlu0 %585
    %v587 = vrcp.pop %v577
    %v588 = vrcp.pop %v580
    %v589 = vrcp.pop %v583
    %v590 = vrcp.pop %v586
    %v591 = vmul.f32 %v568, %v587
    %v592 = vmul.f32 %v570, %v588
    %v593 = vmul.f32 %v572, %v589
    %v594 = vmul.f32 %v574, %v590
    %v595 = vpack.c.bf16 %v591, %v591
    %v596 = vpack.c.bf16 %v592, %v592
    %v597 = vpack.c.bf16 %v593, %v593
    %v598 = vpack.c.bf16 %v594, %v594
    %v601 = vunpack.c.l.b16 %v51
    %v602 = vunpack.c.l.b16 %v52
    %v603 = vpack.c.b16 %v602, %v601
    %v605 = vsel %vm125, %v603, 0
    %607 = vmatprep.subr.bf16.mxu0 0
    %608 = vmatpush1.bf16.xpose.msra.mxu0 %v130
    %609 = vmatprep.subr.bf16.mxu0 0
    %610 = vmatpush1.bf16.xpose.msra.mxu0 0
    %611 = vmatprep.subr.bf16.mxu0 0
    %612 = vmatpush1.bf16.xpose.msra.mxu0 0
    %613 = vmatprep.subr.bf16.mxu0 0
    %614 = vmatpush1.bf16.xpose.msra.mxu0 0
    %615 = vmatprep.subr.bf16.mxu0 0
    %616 = vmatpush1.bf16.xpose.msra.mxu0 0
    %617 = vmatprep.subr.bf16.mxu0 0
    %618 = vmatpush1.bf16.xpose.msra.mxu0 0
    %619 = vmatprep.subr.bf16.mxu0 0
    %620 = vmatpush1.bf16.xpose.msra.mxu0 0
    %621 = vmatprep.subr.bf16.mxu0 0
    %622 = vmatpush1.bf16.xpose.msra.mxu0 0
    %623 = vmatprep.subr.bf16.mxu0 0
    %624 = vmatpush1.bf16.xpose.msra.mxu0 0
    %625 = vmatprep.subr.bf16.mxu0 0
    %626 = vmatpush1.bf16.xpose.msra.mxu0 0
    %627 = vmatprep.subr.bf16.mxu0 0
    %628 = vmatpush1.bf16.xpose.msra.mxu0 0
    %629 = vmatprep.subr.bf16.mxu0 0
    %630 = vmatpush1.bf16.xpose.msra.mxu0 0
    %631 = vmatprep.subr.bf16.mxu0 0
    %632 = vmatpush1.bf16.xpose.msra.mxu0 0
    %633 = vmatprep.subr.bf16.mxu0 0
    %634 = vmatpush1.bf16.xpose.msra.mxu0 0
    %635 = vmatprep.subr.bf16.mxu0 0
    %636 = vmatpush1.bf16.xpose.msra.mxu0 0
    %637 = vmatprep.subr.bf16.mxu0 0
    %638 = vmatpush1.bf16.xpose.msra.mxu0 0
    %639 = vmatprep.mubr.bf16.mxu0 0
    %640 = vmatmul.mubr.bf16.gmra.mrb[0].mxu0 %v605
    %v641 = vpop.f32.mrb[0].mxu0
    %v642 = vadd.f32 %v117, %v641
    %v643 = vpop.f32.mrb[0].mxu0
    %v644 = vpop.f32.mrb[0].mxu0
    %v645 = vadd.f32 %v118, %v644
    %v646 = vpop.f32.mrb[0].mxu0
    %647 = vdwg.mxu0
    %v650 = vunpack.c.l.b16 %v53
    %v651 = vunpack.c.l.b16 %v54
    %v652 = vpack.c.b16 %v651, %v650
    %v654 = vsel %vm125, %v652, 0
    %656 = vmatprep.subr.bf16.mxu0 0
    %657 = vmatpush1.bf16.xpose.msra.mxu0 %v176
    %658 = vmatprep.subr.bf16.mxu0 0
    %659 = vmatpush1.bf16.xpose.msra.mxu0 0
    %660 = vmatprep.subr.bf16.mxu0 0
    %661 = vmatpush1.bf16.xpose.msra.mxu0 0
    %662 = vmatprep.subr.bf16.mxu0 0
    %663 = vmatpush1.bf16.xpose.msra.mxu0 0
    %664 = vmatprep.subr.bf16.mxu0 0
    %665 = vmatpush1.bf16.xpose.msra.mxu0 0
    %666 = vmatprep.subr.bf16.mxu0 0
    %667 = vmatpush1.bf16.xpose.msra.mxu0 0
    %668 = vmatprep.subr.bf16.mxu0 0
    %669 = vmatpush1.bf16.xpose.msra.mxu0 0
    %670 = vmatprep.subr.bf16.mxu0 0
    %671 = vmatpush1.bf16.xpose.msra.mxu0 0
    %672 = vmatprep.subr.bf16.mxu0 0
    %673 = vmatpush1.bf16.xpose.msra.mxu0 0
    %674 = vmatprep.subr.bf16.mxu0 0
    %675 = vmatpush1.bf16.xpose.msra.mxu0 0
    %676 = vmatprep.subr.bf16.mxu0 0
    %677 = vmatpush1.bf16.xpose.msra.mxu0 0
    %678 = vmatprep.subr.bf16.mxu0 0
    %679 = vmatpush1.bf16.xpose.msra.mxu0 0
    %680 = vmatprep.subr.bf16.mxu0 0
    %681 = vmatpush1.bf16.xpose.msra.mxu0 0
    %682 = vmatprep.subr.bf16.mxu0 0
    %683 = vmatpush1.bf16.xpose.msra.mxu0 0
    %684 = vmatprep.subr.bf16.mxu0 0
    %685 = vmatpush1.bf16.xpose.msra.mxu0 0
    %686 = vmatprep.subr.bf16.mxu0 0
    %687 = vmatpush1.bf16.xpose.msra.mxu0 0
    %688 = vmatprep.mubr.bf16.mxu0 0
    %689 = vmatmul.mubr.bf16.gmra.mrb[0].mxu0 %v654
    %v690 = vpop.f32.mrb[0].mxu0
    %v691 = vadd.f32 %v117, %v690
    %v692 = vpop.f32.mrb[0].mxu0
    %v693 = vpop.f32.mrb[0].mxu0
    %v694 = vadd.f32 %v118, %v693
    %v695 = vpop.f32.mrb[0].mxu0
    %696 = vdwg.mxu0
    %v699 = vunpack.c.l.b16 %v55
    %v700 = vunpack.c.l.b16 %v56
    %v701 = vpack.c.b16 %v700, %v699
    %v703 = vsel %vm125, %v701, 0
    %705 = vmatprep.subr.bf16.mxu0 0
    %706 = vmatpush1.bf16.xpose.msra.mxu0 %v222
    %707 = vmatprep.subr.bf16.mxu0 0
    %708 = vmatpush1.bf16.xpose.msra.mxu0 0
    %709 = vmatprep.subr.bf16.mxu0 0
    %710 = vmatpush1.bf16.xpose.msra.mxu0 0
    %711 = vmatprep.subr.bf16.mxu0 0
    %712 = vmatpush1.bf16.xpose.msra.mxu0 0
    %713 = vmatprep.subr.bf16.mxu0 0
    %714 = vmatpush1.bf16.xpose.msra.mxu0 0
    %715 = vmatprep.subr.bf16.mxu0 0
    %716 = vmatpush1.bf16.xpose.msra.mxu0 0
    %717 = vmatprep.subr.bf16.mxu0 0
    %718 = vmatpush1.bf16.xpose.msra.mxu0 0
    %719 = vmatprep.subr.bf16.mxu0 0
    %720 = vmatpush1.bf16.xpose.msra.mxu0 0
    %721 = vmatprep.subr.bf16.mxu0 0
    %722 = vmatpush1.bf16.xpose.msra.mxu0 0
    %723 = vmatprep.subr.bf16.mxu0 0
    %724 = vmatpush1.bf16.xpose.msra.mxu0 0
    %725 = vmatprep.subr.bf16.mxu0 0
    %726 = vmatpush1.bf16.xpose.msra.mxu0 0
    %727 = vmatprep.subr.bf16.mxu0 0
    %728 = vmatpush1.bf16.xpose.msra.mxu0 0
    %729 = vmatprep.subr.bf16.mxu0 0
    %730 = vmatpush1.bf16.xpose.msra.mxu0 0
    %731 = vmatprep.subr.bf16.mxu0 0
    %732 = vmatpush1.bf16.xpose.msra.mxu0 0
    %733 = vmatprep.subr.bf16.mxu0 0
    %734 = vmatpush1.bf16.xpose.msra.mxu0 0
    %735 = vmatprep.subr.bf16.mxu0 0
    %736 = vmatpush1.bf16.xpose.msra.mxu0 0
    %737 = vmatprep.mubr.bf16.mxu0 0
    %738 = vmatmul.mubr.bf16.gmra.mrb[0].mxu0 %v703
    %v739 = vpop.f32.mrb[0].mxu0
    %v740 = vadd.f32 %v117, %v739
    %v741 = vpop.f32.mrb[0].mxu0
    %v742 = vpop.f32.mrb[0].mxu0
    %v743 = vadd.f32 %v118, %v742
    %v744 = vpop.f32.mrb[0].mxu0
    %745 = vdwg.mxu0
    %v748 = vunpack.c.l.b16 %v57
    %v749 = vunpack.c.l.b16 %v58
    %v750 = vpack.c.b16 %v749, %v748
    %v752 = vsel %vm125, %v750, 0
    %754 = vmatprep.subr.bf16.mxu0 0
    %755 = vmatpush1.bf16.xpose.msra.mxu0 %v268
    %756 = vmatprep.subr.bf16.mxu0 0
    %757 = vmatpush1.bf16.xpose.msra.mxu0 0
    %758 = vmatprep.subr.bf16.mxu0 0
    %759 = vmatpush1.bf16.xpose.msra.mxu0 0
    %760 = vmatprep.subr.bf16.mxu0 0
    %761 = vmatpush1.bf16.xpose.msra.mxu0 0
    %762 = vmatprep.subr.bf16.mxu0 0
    %763 = vmatpush1.bf16.xpose.msra.mxu0 0
    %764 = vmatprep.subr.bf16.mxu0 0
    %765 = vmatpush1.bf16.xpose.msra.mxu0 0
    %766 = vmatprep.subr.bf16.mxu0 0
    %767 = vmatpush1.bf16.xpose.msra.mxu0 0
    %768 = vmatprep.subr.bf16.mxu0 0
    %769 = vmatpush1.bf16.xpose.msra.mxu0 0
    %770 = vmatprep.subr.bf16.mxu0 0
    %771 = vmatpush1.bf16.xpose.msra.mxu0 0
    %772 = vmatprep.subr.bf16.mxu0 0
    %773 = vmatpush1.bf16.xpose.msra.mxu0 0
    %774 = vmatprep.subr.bf16.mxu0 0
    %775 = vmatpush1.bf16.xpose.msra.mxu0 0
    %776 = vmatprep.subr.bf16.mxu0 0
    %777 = vmatpush1.bf16.xpose.msra.mxu0 0
    %778 = vmatprep.subr.bf16.mxu0 0
    %779 = vmatpush1.bf16.xpose.msra.mxu0 0
    %780 = vmatprep.subr.bf16.mxu0 0
    %781 = vmatpush1.bf16.xpose.msra.mxu0 0
    %782 = vmatprep.subr.bf16.mxu0 0
    %783 = vmatpush1.bf16.xpose.msra.mxu0 0
    %784 = vmatprep.subr.bf16.mxu0 0
    %785 = vmatpush1.bf16.xpose.msra.mxu0 0
    %786 = vmatprep.mubr.bf16.mxu0 0
    %787 = vmatmul.mubr.bf16.gmra.mrb[0].mxu0 %v752
    %v788 = vpop.f32.mrb[0].mxu0
    %v789 = vadd.f32 %v117, %v788
    %v790 = vpop.f32.mrb[0].mxu0
    %v791 = vpop.f32.mrb[0].mxu0
    %v792 = vadd.f32 %v118, %v791
    %v793 = vpop.f32.mrb[0].mxu0
    %794 = vdwg.mxu0
    %v795 = vsel %vm125, %v642, -inf
    %796 = vmax.xlane.f32.xlu0 %v795
    %v797 = vpop.xlane.xlu0 %796
    %v798 = vsel %vm125, %v645, -inf
    %799 = vmax.xlane.f32.xlu0 %v798
    %v800 = vpop.xlane.xlu0 %799
    %v801 = vsel %vm125, %v691, -inf
    %802 = vmax.xlane.f32.xlu0 %v801
    %v803 = vpop.xlane.xlu0 %802
    %v804 = vsel %vm125, %v694, -inf
    %805 = vmax.xlane.f32.xlu0 %v804
    %v806 = vpop.xlane.xlu0 %805
    %v807 = vsel %vm125, %v740, -inf
    %808 = vmax.xlane.f32.xlu0 %v807
    %v809 = vpop.xlane.xlu0 %808
    %v810 = vsel %vm125, %v743, -inf
    %811 = vmax.xlane.f32.xlu0 %v810
    %v812 = vpop.xlane.xlu0 %811
    %v813 = vsel %vm125, %v789, -inf
    %814 = vmax.xlane.f32.xlu0 %v813
    %v815 = vpop.xlane.xlu0 %814
    %v816 = vsel %vm125, %v792, -inf
    %817 = vmax.xlane.f32.xlu0 %v816
    %v818 = vpop.xlane.xlu0 %817
    %v819 = vsub.f32 %v642, %v797
    %v820 = vsub.f32 %v645, %v800
    %v821 = vsub.f32 %v691, %v803
    %v822 = vsub.f32 %v694, %v806
    %v823 = vsub.f32 %v740, %v809
    %v824 = vsub.f32 %v743, %v812
    %v825 = vsub.f32 %v789, %v815
    %v826 = vsub.f32 %v792, %v818
    %v827 = vmul.f32 %v819, 1.442695
    %v828 = vpow.pop %v827
    %v829 = vmul.f32 %v820, 1.442695
    %v830 = vpow.pop %v829
    %v831 = vmul.f32 %v821, 1.442695
    %v832 = vpow.pop %v831
    %v833 = vmul.f32 %v822, 1.442695
    %v834 = vpow.pop %v833
    %v835 = vmul.f32 %v823, 1.442695
    %v836 = vpow.pop %v835
    %v837 = vmul.f32 %v824, 1.442695
    %v838 = vpow.pop %v837
    %v839 = vmul.f32 %v825, 1.442695
    %v840 = vpow.pop %v839
    %v841 = vmul.f32 %v826, 1.442695
    %v842 = vpow.pop %v841
    %v843 = vsel %vm125, %v828, 0.0
    %844 = vadd.xlane.f32.xlu0 %v843
    %v845 = vpop.xlane.xlu0 %844
    %v846 = vsel %vm125, %v830, 0.0
    %847 = vadd.xlane.f32.xlu0 %v846
    %v848 = vpop.xlane.xlu0 %847
    %v849 = vsel %vm125, %v832, 0.0
    %850 = vadd.xlane.f32.xlu0 %v849
    %v851 = vpop.xlane.xlu0 %850
    %v852 = vsel %vm125, %v834, 0.0
    %853 = vadd.xlane.f32.xlu0 %v852
    %v854 = vpop.xlane.xlu0 %853
    %v855 = vsel %vm125, %v836, 0.0
    %856 = vadd.xlane.f32.xlu0 %v855
    %v857 = vpop.xlane.xlu0 %856
    %v858 = vsel %vm125, %v838, 0.0
    %859 = vadd.xlane.f32.xlu0 %v858
    %v860 = vpop.xlane.xlu0 %859
    %v861 = vsel %vm125, %v840, 0.0
    %862 = vadd.xlane.f32.xlu0 %v861
    %v863 = vpop.xlane.xlu0 %862
    %v864 = vsel %vm125, %v842, 0.0
    %865 = vadd.xlane.f32.xlu0 %v864
    %v866 = vpop.xlane.xlu0 %865
    %v867 = vrcp.pop %v845
    %v868 = vrcp.pop %v848
    %v869 = vrcp.pop %v851
    %v870 = vrcp.pop %v854
    %v871 = vrcp.pop %v857
    %v872 = vrcp.pop %v860
    %v873 = vrcp.pop %v863
    %v874 = vrcp.pop %v866
    %v875 = vmul.f32 %v828, %v867
    %v876 = vmul.f32 %v830, %v868
    %v877 = vmul.f32 %v832, %v869
    %v878 = vmul.f32 %v834, %v870
    %v879 = vmul.f32 %v836, %v871
    %v880 = vmul.f32 %v838, %v872
    %v881 = vmul.f32 %v840, %v873
    %v882 = vmul.f32 %v842, %v874
    %v883 = vpack.c.bf16 %v876, %v875
    %v884 = vpack.c.bf16 %v878, %v877
    %v885 = vpack.c.bf16 %v880, %v879
    %v886 = vpack.c.bf16 %v882, %v881
    %887 = vmatprep.subr.bf16.mxu0 0
    %888 = vmatpush1.bf16.xpose.msra.mxu0 %v364
    %889 = vmatprep.subr.bf16.mxu0 0
    %890 = vmatpush1.bf16.xpose.msra.mxu0 0
    %891 = vmatprep.subr.bf16.mxu0 0
    %892 = vmatpush1.bf16.xpose.msra.mxu0 0
    %893 = vmatprep.subr.bf16.mxu0 0
    %894 = vmatpush1.bf16.xpose.msra.mxu0 0
    %895 = vmatprep.subr.bf16.mxu0 0
    %896 = vmatpush1.bf16.xpose.msra.mxu0 0
    %897 = vmatprep.subr.bf16.mxu0 0
    %898 = vmatpush1.bf16.xpose.msra.mxu0 0
    %899 = vmatprep.subr.bf16.mxu0 0
    %900 = vmatpush1.bf16.xpose.msra.mxu0 0
    %901 = vmatprep.subr.bf16.mxu0 0
    %902 = vmatpush1.bf16.xpose.msra.mxu0 0
    %903 = vmatprep.subr.bf16.mxu0 0
    %904 = vmatpush1.bf16.xpose.msra.mxu0 0
    %905 = vmatprep.subr.bf16.mxu0 0
    %906 = vmatpush1.bf16.xpose.msra.mxu0 0
    %907 = vmatprep.subr.bf16.mxu0 0
    %908 = vmatpush1.bf16.xpose.msra.mxu0 0
    %909 = vmatprep.subr.bf16.mxu0 0
    %910 = vmatpush1.bf16.xpose.msra.mxu0 0
    %911 = vmatprep.subr.bf16.mxu0 0
    %912 = vmatpush1.bf16.xpose.msra.mxu0 0
    %913 = vmatprep.subr.bf16.mxu0 0
    %914 = vmatpush1.bf16.xpose.msra.mxu0 0
    %915 = vmatprep.subr.bf16.mxu0 0
    %916 = vmatpush1.bf16.xpose.msra.mxu0 0
    %917 = vmatprep.subr.bf16.mxu0 0
    %918 = vmatpush1.bf16.xpose.msra.mxu0 0
    %919 = vmatprep.mubr.bf16.mxu0 0
    %920 = vmatmul.mubr.bf16.gmra.mrb[0].mxu0 %v605
    %v921 = vpop.f32.mrb[0].mxu0
    %v922 = vadd.f32 %v123, %v921
    %v923 = vpop.f32.mrb[0].mxu0
    %v924 = vpop.f32.mrb[0].mxu0
    %v925 = vadd.f32 %v124, %v924
    %v926 = vpop.f32.mrb[0].mxu0
    %927 = vdwg.mxu0
    %928 = vmatprep.subr.bf16.mxu0 0
    %929 = vmatpush1.bf16.xpose.msra.mxu0 %v412
    %930 = vmatprep.subr.bf16.mxu0 0
    %931 = vmatpush1.bf16.xpose.msra.mxu0 0
    %932 = vmatprep.subr.bf16.mxu0 0
    %933 = vmatpush1.bf16.xpose.msra.mxu0 0
    %934 = vmatprep.subr.bf16.mxu0 0
    %935 = vmatpush1.bf16.xpose.msra.mxu0 0
    %936 = vmatprep.subr.bf16.mxu0 0
    %937 = vmatpush1.bf16.xpose.msra.mxu0 0
    %938 = vmatprep.subr.bf16.mxu0 0
    %939 = vmatpush1.bf16.xpose.msra.mxu0 0
    %940 = vmatprep.subr.bf16.mxu0 0
    %941 = vmatpush1.bf16.xpose.msra.mxu0 0
    %942 = vmatprep.subr.bf16.mxu0 0
    %943 = vmatpush1.bf16.xpose.msra.mxu0 0
    %944 = vmatprep.subr.bf16.mxu0 0
    %945 = vmatpush1.bf16.xpose.msra.mxu0 0
    %946 = vmatprep.subr.bf16.mxu0 0
    %947 = vmatpush1.bf16.xpose.msra.mxu0 0
    %948 = vmatprep.subr.bf16.mxu0 0
    %949 = vmatpush1.bf16.xpose.msra.mxu0 0
    %950 = vmatprep.subr.bf16.mxu0 0
    %951 = vmatpush1.bf16.xpose.msra.mxu0 0
    %952 = vmatprep.subr.bf16.mxu0 0
    %953 = vmatpush1.bf16.xpose.msra.mxu0 0
    %954 = vmatprep.subr.bf16.mxu0 0
    %955 = vmatpush1.bf16.xpose.msra.mxu0 0
    %956 = vmatprep.subr.bf16.mxu0 0
    %957 = vmatpush1.bf16.xpose.msra.mxu0 0
    %958 = vmatprep.subr.bf16.mxu0 0
    %959 = vmatpush1.bf16.xpose.msra.mxu0 0
    %960 = vmatprep.mubr.bf16.mxu0 0
    %961 = vmatmul.mubr.bf16.gmra.mrb[0].mxu0 %v654
    %v962 = vpop.f32.mrb[0].mxu0
    %v963 = vadd.f32 %v123, %v962
    %v964 = vpop.f32.mrb[0].mxu0
    %v965 = vpop.f32.mrb[0].mxu0
    %v966 = vadd.f32 %v124, %v965
    %v967 = vpop.f32.mrb[0].mxu0
    %968 = vdwg.mxu0
    %969 = vmatprep.subr.bf16.mxu0 0
    %970 = vmatpush1.bf16.xpose.msra.mxu0 %v460
    %971 = vmatprep.subr.bf16.mxu0 0
    %972 = vmatpush1.bf16.xpose.msra.mxu0 0
    %973 = vmatprep.subr.bf16.mxu0 0
    %974 = vmatpush1.bf16.xpose.msra.mxu0 0
    %975 = vmatprep.subr.bf16.mxu0 0
    %976 = vmatpush1.bf16.xpose.msra.mxu0 0
    %977 = vmatprep.subr.bf16.mxu0 0
    %978 = vmatpush1.bf16.xpose.msra.mxu0 0
    %979 = vmatprep.subr.bf16.mxu0 0
    %980 = vmatpush1.bf16.xpose.msra.mxu0 0
    %981 = vmatprep.subr.bf16.mxu0 0
    %982 = vmatpush1.bf16.xpose.msra.mxu0 0
    %983 = vmatprep.subr.bf16.mxu0 0
    %984 = vmatpush1.bf16.xpose.msra.mxu0 0
    %985 = vmatprep.subr.bf16.mxu0 0
    %986 = vmatpush1.bf16.xpose.msra.mxu0 0
    %987 = vmatprep.subr.bf16.mxu0 0
    %988 = vmatpush1.bf16.xpose.msra.mxu0 0
    %989 = vmatprep.subr.bf16.mxu0 0
    %990 = vmatpush1.bf16.xpose.msra.mxu0 0
    %991 = vmatprep.subr.bf16.mxu0 0
    %992 = vmatpush1.bf16.xpose.msra.mxu0 0
    %993 = vmatprep.subr.bf16.mxu0 0
    %994 = vmatpush1.bf16.xpose.msra.mxu0 0
    %995 = vmatprep.subr.bf16.mxu0 0
    %996 = vmatpush1.bf16.xpose.msra.mxu0 0
    %997 = vmatprep.subr.bf16.mxu0 0
    %998 = vmatpush1.bf16.xpose.msra.mxu0 0
    %999 = vmatprep.subr.bf16.mxu0 0
    %1000 = vmatpush1.bf16.xpose.msra.mxu0 0
    %1001 = vmatprep.mubr.bf16.mxu0 0
    %1002 = vmatmul.mubr.bf16.gmra.mrb[0].mxu0 %v703
    %v1003 = vpop.f32.mrb[0].mxu0
    %v1004 = vadd.f32 %v123, %v1003
    %v1005 = vpop.f32.mrb[0].mxu0
    %v1006 = vpop.f32.mrb[0].mxu0
    %v1007 = vadd.f32 %v124, %v1006
    %v1008 = vpop.f32.mrb[0].mxu0
    %1009 = vdwg.mxu0
    %1010 = vmatprep.subr.bf16.mxu0 0
    %1011 = vmatpush1.bf16.xpose.msra.mxu0 %v508
    %1012 = vmatprep.subr.bf16.mxu0 0
    %1013 = vmatpush1.bf16.xpose.msra.mxu0 0
    %1014 = vmatprep.subr.bf16.mxu0 0
    %1015 = vmatpush1.bf16.xpose.msra.mxu0 0
    %1016 = vmatprep.subr.bf16.mxu0 0
    %1017 = vmatpush1.bf16.xpose.msra.mxu0 0
    %1018 = vmatprep.subr.bf16.mxu0 0
    %1019 = vmatpush1.bf16.xpose.msra.mxu0 0
    %1020 = vmatprep.subr.bf16.mxu0 0
    %1021 = vmatpush1.bf16.xpose.msra.mxu0 0
    %1022 = vmatprep.subr.bf16.mxu0 0
    %1023 = vmatpush1.bf16.xpose.msra.mxu0 0
    %1024 = vmatprep.subr.bf16.mxu0 0
    %1025 = vmatpush1.bf16.xpose.msra.mxu0 0
    %1026 = vmatprep.subr.bf16.mxu0 0
    %1027 = vmatpush1.bf16.xpose.msra.mxu0 0
    %1028 = vmatprep.subr.bf16.mxu0 0
    %1029 = vmatpush1.bf16.xpose.msra.mxu0 0
    %1030 = vmatprep.subr.bf16.mxu0 0
    %1031 = vmatpush1.bf16.xpose.msra.mxu0 0
    %1032 = vmatprep.subr.bf16.mxu0 0
    %1033 = vmatpush1.bf16.xpose.msra.mxu0 0
    %1034 = vmatprep.subr.bf16.mxu0 0
    %1035 = vmatpush1.bf16.xpose.msra.mxu0 0
    %1036 = vmatprep.subr.bf16.mxu0 0
    %1037 = vmatpush1.bf16.xpose.msra.mxu0 0
    %1038 = vmatprep.subr.bf16.mxu0 0
    %1039 = vmatpush1.bf16.xpose.msra.mxu0 0
    %1040 = vmatprep.subr.bf16.mxu0 0
    %1041 = vmatpush1.bf16.xpose.msra.mxu0 0
    %1042 = vmatprep.mubr.bf16.mxu0 0
    %1043 = vmatmul.mubr.bf16.gmra.mrb[0].mxu0 %v752
    %v1044 = vpop.f32.mrb[0].mxu0
    %v1045 = vadd.f32 %v123, %v1044
    %v1046 = vpop.f32.mrb[0].mxu0
    %v1047 = vpop.f32.mrb[0].mxu0
    %v1048 = vadd.f32 %v124, %v1047
    %v1049 = vpop.f32.mrb[0].mxu0
    %1050 = vdwg.mxu0
    %v1051 = vsel %vm550, %v922, -inf
    %1052 = vmax.xlane.f32.xlu0 %v1051
    %v1053 = vpop.xlane.xlu0 %1052
    %v1054 = vsel %vm550, %v925, -inf
    %1055 = vmax.xlane.f32.xlu0 %v1054
    %v1056 = vpop.xlane.xlu0 %1055
    %v1057 = vsel %vm550, %v963, -inf
    %1058 = vmax.xlane.f32.xlu0 %v1057
    %v1059 = vpop.xlane.xlu0 %1058
    %v1060 = vsel %vm550, %v966, -inf
    %1061 = vmax.xlane.f32.xlu0 %v1060
    %v1062 = vpop.xlane.xlu0 %1061
    %v1063 = vsel %vm550, %v1004, -inf
    %1064 = vmax.xlane.f32.xlu0 %v1063
    %v1065 = vpop.xlane.xlu0 %1064
    %v1066 = vsel %vm550, %v1007, -inf
    %1067 = vmax.xlane.f32.xlu0 %v1066
    %v1068 = vpop.xlane.xlu0 %1067
    %v1069 = vsel %vm550, %v1045, -inf
    %1070 = vmax.xlane.f32.xlu0 %v1069
    %v1071 = vpop.xlane.xlu0 %1070
    %v1072 = vsel %vm550, %v1048, -inf
    %1073 = vmax.xlane.f32.xlu0 %v1072
    %v1074 = vpop.xlane.xlu0 %1073
    %v1075 = vsub.f32 %v922, %v1053
    %v1076 = vsub.f32 %v925, %v1056
    %v1077 = vsub.f32 %v963, %v1059
    %v1078 = vsub.f32 %v966, %v1062
    %v1079 = vsub.f32 %v1004, %v1065
    %v1080 = vsub.f32 %v1007, %v1068
    %v1081 = vsub.f32 %v1045, %v1071
    %v1082 = vsub.f32 %v1048, %v1074
    %v1083 = vmul.f32 %v1075, 1.442695
    %v1084 = vpow.pop %v1083
    %v1085 = vmul.f32 %v1076, 1.442695
    %v1086 = vpow.pop %v1085
    %v1087 = vmul.f32 %v1077, 1.442695
    %v1088 = vpow.pop %v1087
    %v1089 = vmul.f32 %v1078, 1.442695
    %v1090 = vpow.pop %v1089
    %v1091 = vmul.f32 %v1079, 1.442695
    %v1092 = vpow.pop %v1091
    %v1093 = vmul.f32 %v1080, 1.442695
    %v1094 = vpow.pop %v1093
    %v1095 = vmul.f32 %v1081, 1.442695
    %v1096 = vpow.pop %v1095
    %v1097 = vmul.f32 %v1082, 1.442695
    %v1098 = vpow.pop %v1097
    %v1099 = vsel %vm550, %v1084, 0.0
    %1100 = vadd.xlane.f32.xlu0 %v1099
    %v1101 = vpop.xlane.xlu0 %1100
    %v1102 = vsel %vm550, %v1086, 0.0
    %1103 = vadd.xlane.f32.xlu0 %v1102
    %v1104 = vpop.xlane.xlu0 %1103
    %v1105 = vsel %vm550, %v1088, 0.0
    %1106 = vadd.xlane.f32.xlu0 %v1105
    %v1107 = vpop.xlane.xlu0 %1106
    %v1108 = vsel %vm550, %v1090, 0.0
    %1109 = vadd.xlane.f32.xlu0 %v1108
    %v1110 = vpop.xlane.xlu0 %1109
    %v1111 = vsel %vm550, %v1092, 0.0
    %1112 = vadd.xlane.f32.xlu0 %v1111
    %v1113 = vpop.xlane.xlu0 %1112
    %v1114 = vsel %vm550, %v1094, 0.0
    %1115 = vadd.xlane.f32.xlu0 %v1114
    %v1116 = vpop.xlane.xlu0 %1115
    %v1117 = vsel %vm550, %v1096, 0.0
    %1118 = vadd.xlane.f32.xlu0 %v1117
    %v1119 = vpop.xlane.xlu0 %1118
    %v1120 = vsel %vm550, %v1098, 0.0
    %1121 = vadd.xlane.f32.xlu0 %v1120
    %v1122 = vpop.xlane.xlu0 %1121
    %v1123 = vrcp.pop %v1101
    %v1124 = vrcp.pop %v1104
    %v1125 = vrcp.pop %v1107
    %v1126 = vrcp.pop %v1110
    %v1127 = vrcp.pop %v1113
    %v1128 = vrcp.pop %v1116
    %v1129 = vrcp.pop %v1119
    %v1130 = vrcp.pop %v1122
    %v1131 = vmul.f32 %v1084, %v1123
    %v1132 = vmul.f32 %v1086, %v1124
    %v1133 = vmul.f32 %v1088, %v1125
    %v1134 = vmul.f32 %v1090, %v1126
    %v1135 = vmul.f32 %v1092, %v1127
    %v1136 = vmul.f32 %v1094, %v1128
    %v1137 = vmul.f32 %v1096, %v1129
    %v1138 = vmul.f32 %v1098, %v1130
    %v1139 = vpack.c.bf16 %v1132, %v1131
    %v1140 = vpack.c.bf16 %v1134, %v1133
    %v1141 = vpack.c.bf16 %v1136, %v1135
    %v1142 = vpack.c.bf16 %v1138, %v1137
    %v1145 = vunpack.c.l.b16 %v67
    %v1146 = vunpack.c.l.b16 %v68
    %v1147 = vpack.c.b16 %v1146, %v1145
    %v1150 = vsel %vm550, %v595, 0
    %1152 = vmatprep.subr.bf16.mxu0 0
    %1153 = vmatpush1.bf16.msra.mxu0 %v1147
    %1154 = vmatprep.subr.bf16.mxu0 0
    %1155 = vmatpush1.bf16.msra.mxu0 0
    %1156 = vmatprep.subr.bf16.mxu0 0
    %1157 = vmatpush1.bf16.msra.mxu0 0
    %1158 = vmatprep.subr.bf16.mxu0 0
    %1159 = vmatpush1.bf16.msra.mxu0 0
    %1160 = vmatprep.subr.bf16.mxu0 0
    %1161 = vmatpush1.bf16.msra.mxu0 0
    %1162 = vmatprep.subr.bf16.mxu0 0
    %1163 = vmatpush1.bf16.msra.mxu0 0
    %1164 = vmatprep.subr.bf16.mxu0 0
    %1165 = vmatpush1.bf16.msra.mxu0 0
    %1166 = vmatprep.subr.bf16.mxu0 0
    %1167 = vmatpush1.bf16.msra.mxu0 0
    %1168 = vmatprep.subr.bf16.mxu0 0
    %1169 = vmatpush1.bf16.msra.mxu0 0
    %1170 = vmatprep.subr.bf16.mxu0 0
    %1171 = vmatpush1.bf16.msra.mxu0 0
    %1172 = vmatprep.subr.bf16.mxu0 0
    %1173 = vmatpush1.bf16.msra.mxu0 0
    %1174 = vmatprep.subr.bf16.mxu0 0
    %1175 = vmatpush1.bf16.msra.mxu0 0
    %1176 = vmatprep.subr.bf16.mxu0 0
    %1177 = vmatpush1.bf16.msra.mxu0 0
    %1178 = vmatprep.subr.bf16.mxu0 0
    %1179 = vmatpush1.bf16.msra.mxu0 0
    %1180 = vmatprep.subr.bf16.mxu0 0
    %1181 = vmatpush1.bf16.msra.mxu0 0
    %1182 = vmatprep.subr.bf16.mxu0 0
    %1183 = vmatpush1.bf16.msra.mxu0 0
    %1184 = vmatprep.mubr.bf16.mxu0 0
    %1185 = vmatmul.mubr.bf16.gmra.mrb[0].mxu0 %v1150
    %v1186 = vpop.f32.mrb[0].mxu0
    %v1187 = vadd.f32 0.0, %v1186
    %v1188 = vpop.f32.mrb[0].mxu0
    %v1189 = vpop.f32.mrb[0].mxu0
    %v1190 = vpop.f32.mrb[0].mxu0
    %1191 = vdwg.mxu0
    %v1194 = vunpack.c.l.b16 %v69
    %v1195 = vunpack.c.l.b16 %v70
    %v1196 = vpack.c.b16 %v1195, %v1194
    %v1199 = vsel %vm550, %v596, 0
    %1201 = vmatprep.subr.bf16.mxu0 0
    %1202 = vmatpush1.bf16.msra.mxu0 %v1196
    %1203 = vmatprep.subr.bf16.mxu0 0
    %1204 = vmatpush1.bf16.msra.mxu0 0
    %1205 = vmatprep.subr.bf16.mxu0 0
    %1206 = vmatpush1.bf16.msra.mxu0 0
    %1207 = vmatprep.subr.bf16.mxu0 0
    %1208 = vmatpush1.bf16.msra.mxu0 0
    %1209 = vmatprep.subr.bf16.mxu0 0
    %1210 = vmatpush1.bf16.msra.mxu0 0
    %1211 = vmatprep.subr.bf16.mxu0 0
    %1212 = vmatpush1.bf16.msra.mxu0 0
    %1213 = vmatprep.subr.bf16.mxu0 0
    %1214 = vmatpush1.bf16.msra.mxu0 0
    %1215 = vmatprep.subr.bf16.mxu0 0
    %1216 = vmatpush1.bf16.msra.mxu0 0
    %1217 = vmatprep.subr.bf16.mxu0 0
    %1218 = vmatpush1.bf16.msra.mxu0 0
    %1219 = vmatprep.subr.bf16.mxu0 0
    %1220 = vmatpush1.bf16.msra.mxu0 0
    %1221 = vmatprep.subr.bf16.mxu0 0
    %1222 = vmatpush1.bf16.msra.mxu0 0
    %1223 = vmatprep.subr.bf16.mxu0 0
    %1224 = vmatpush1.bf16.msra.mxu0 0
    %1225 = vmatprep.subr.bf16.mxu0 0
    %1226 = vmatpush1.bf16.msra.mxu0 0
    %1227 = vmatprep.subr.bf16.mxu0 0
    %1228 = vmatpush1.bf16.msra.mxu0 0
    %1229 = vmatprep.subr.bf16.mxu0 0
    %1230 = vmatpush1.bf16.msra.mxu0 0
    %1231 = vmatprep.subr.bf16.mxu0 0
    %1232 = vmatpush1.bf16.msra.mxu0 0
    %1233 = vmatprep.mubr.bf16.mxu0 0
    %1234 = vmatmul.mubr.bf16.gmra.mrb[0].mxu0 %v1199
    %v1235 = vpop.f32.mrb[0].mxu0
    %v1236 = vadd.f32 0.0, %v1235
    %v1237 = vpop.f32.mrb[0].mxu0
    %v1238 = vpop.f32.mrb[0].mxu0
    %v1239 = vpop.f32.mrb[0].mxu0
    %1240 = vdwg.mxu0
    %v1243 = vunpack.c.l.b16 %v71
    %v1244 = vunpack.c.l.b16 %v72
    %v1245 = vpack.c.b16 %v1244, %v1243
    %v1248 = vsel %vm550, %v597, 0
    %1250 = vmatprep.subr.bf16.mxu0 0
    %1251 = vmatpush1.bf16.msra.mxu0 %v1245
    %1252 = vmatprep.subr.bf16.mxu0 0
    %1253 = vmatpush1.bf16.msra.mxu0 0
    %1254 = vmatprep.subr.bf16.mxu0 0
    %1255 = vmatpush1.bf16.msra.mxu0 0
    %1256 = vmatprep.subr.bf16.mxu0 0
    %1257 = vmatpush1.bf16.msra.mxu0 0
    %1258 = vmatprep.subr.bf16.mxu0 0
    %1259 = vmatpush1.bf16.msra.mxu0 0
    %1260 = vmatprep.subr.bf16.mxu0 0
    %1261 = vmatpush1.bf16.msra.mxu0 0
    %1262 = vmatprep.subr.bf16.mxu0 0
    %1263 = vmatpush1.bf16.msra.mxu0 0
    %1264 = vmatprep.subr.bf16.mxu0 0
    %1265 = vmatpush1.bf16.msra.mxu0 0
    %1266 = vmatprep.subr.bf16.mxu0 0
    %1267 = vmatpush1.bf16.msra.mxu0 0
    %1268 = vmatprep.subr.bf16.mxu0 0
    %1269 = vmatpush1.bf16.msra.mxu0 0
    %1270 = vmatprep.subr.bf16.mxu0 0
    %1271 = vmatpush1.bf16.msra.mxu0 0
    %1272 = vmatprep.subr.bf16.mxu0 0
    %1273 = vmatpush1.bf16.msra.mxu0 0
    %1274 = vmatprep.subr.bf16.mxu0 0
    %1275 = vmatpush1.bf16.msra.mxu0 0
    %1276 = vmatprep.subr.bf16.mxu0 0
    %1277 = vmatpush1.bf16.msra.mxu0 0
    %1278 = vmatprep.subr.bf16.mxu0 0
    %1279 = vmatpush1.bf16.msra.mxu0 0
    %1280 = vmatprep.subr.bf16.mxu0 0
    %1281 = vmatpush1.bf16.msra.mxu0 0
    %1282 = vmatprep.mubr.bf16.mxu0 0
    %1283 = vmatmul.mubr.bf16.gmra.mrb[0].mxu0 %v1248
    %v1284 = vpop.f32.mrb[0].mxu0
    %v1285 = vadd.f32 0.0, %v1284
    %v1286 = vpop.f32.mrb[0].mxu0
    %v1287 = vpop.f32.mrb[0].mxu0
    %v1288 = vpop.f32.mrb[0].mxu0
    %1289 = vdwg.mxu0
    %v1292 = vunpack.c.l.b16 %v73
    %v1293 = vunpack.c.l.b16 %v74
    %v1294 = vpack.c.b16 %v1293, %v1292
    %v1297 = vsel %vm550, %v598, 0
    %1299 = vmatprep.subr.bf16.mxu0 0
    %1300 = vmatpush1.bf16.msra.mxu0 %v1294
    %1301 = vmatprep.subr.bf16.mxu0 0
    %1302 = vmatpush1.bf16.msra.mxu0 0
    %1303 = vmatprep.subr.bf16.mxu0 0
    %1304 = vmatpush1.bf16.msra.mxu0 0
    %1305 = vmatprep.subr.bf16.mxu0 0
    %1306 = vmatpush1.bf16.msra.mxu0 0
    %1307 = vmatprep.subr.bf16.mxu0 0
    %1308 = vmatpush1.bf16.msra.mxu0 0
    %1309 = vmatprep.subr.bf16.mxu0 0
    %1310 = vmatpush1.bf16.msra.mxu0 0
    %1311 = vmatprep.subr.bf16.mxu0 0
    %1312 = vmatpush1.bf16.msra.mxu0 0
    %1313 = vmatprep.subr.bf16.mxu0 0
    %1314 = vmatpush1.bf16.msra.mxu0 0
    %1315 = vmatprep.subr.bf16.mxu0 0
    %1316 = vmatpush1.bf16.msra.mxu0 0
    %1317 = vmatprep.subr.bf16.mxu0 0
    %1318 = vmatpush1.bf16.msra.mxu0 0
    %1319 = vmatprep.subr.bf16.mxu0 0
    %1320 = vmatpush1.bf16.msra.mxu0 0
    %1321 = vmatprep.subr.bf16.mxu0 0
    %1322 = vmatpush1.bf16.msra.mxu0 0
    %1323 = vmatprep.subr.bf16.mxu0 0
    %1324 = vmatpush1.bf16.msra.mxu0 0
    %1325 = vmatprep.subr.bf16.mxu0 0
    %1326 = vmatpush1.bf16.msra.mxu0 0
    %1327 = vmatprep.subr.bf16.mxu0 0
    %1328 = vmatpush1.bf16.msra.mxu0 0
    %1329 = vmatprep.subr.bf16.mxu0 0
    %1330 = vmatpush1.bf16.msra.mxu0 0
    %1331 = vmatprep.mubr.bf16.mxu0 0
    %1332 = vmatmul.mubr.bf16.gmra.mrb[0].mxu0 %v1297
    %v1333 = vpop.f32.mrb[0].mxu0
    %v1334 = vadd.f32 0.0, %v1333
    %v1335 = vpop.f32.mrb[0].mxu0
    %v1336 = vpop.f32.mrb[0].mxu0
    %v1337 = vpop.f32.mrb[0].mxu0
    %1338 = vdwg.mxu0
    %v1340 = vsel %vm125, %v354, 0
    %vm1342 = vcmask 1043456
    %v1344 = vsel %vm1342, %v47, 0
    %1346 = vmatprep.subr.bf16.mxu0 0
    %1347 = vmatpush1.bf16.msra.mxu0 %v1344
    %1348 = vmatprep.subr.bf16.mxu0 0
    %1349 = vmatpush1.bf16.msra.mxu0 0
    %1350 = vmatprep.subr.bf16.mxu0 0
    %1351 = vmatpush1.bf16.msra.mxu0 0
    %1352 = vmatprep.subr.bf16.mxu0 0
    %1353 = vmatpush1.bf16.msra.mxu0 0
    %1354 = vmatprep.subr.bf16.mxu0 0
    %1355 = vmatpush1.bf16.msra.mxu0 0
    %1356 = vmatprep.subr.bf16.mxu0 0
    %1357 = vmatpush1.bf16.msra.mxu0 0
    %1358 = vmatprep.subr.bf16.mxu0 0
    %1359 = vmatpush1.bf16.msra.mxu0 0
    %1360 = vmatprep.subr.bf16.mxu0 0
    %1361 = vmatpush1.bf16.msra.mxu0 0
    %1362 = vmatprep.subr.bf16.mxu0 0
    %1363 = vmatpush1.bf16.msra.mxu0 0
    %1364 = vmatprep.subr.bf16.mxu0 0
    %1365 = vmatpush1.bf16.msra.mxu0 0
    %1366 = vmatprep.subr.bf16.mxu0 0
    %1367 = vmatpush1.bf16.msra.mxu0 0
    %1368 = vmatprep.subr.bf16.mxu0 0
    %1369 = vmatpush1.bf16.msra.mxu0 0
    %1370 = vmatprep.subr.bf16.mxu0 0
    %1371 = vmatpush1.bf16.msra.mxu0 0
    %1372 = vmatprep.subr.bf16.mxu0 0
    %1373 = vmatpush1.bf16.msra.mxu0 0
    %1374 = vmatprep.subr.bf16.mxu0 0
    %1375 = vmatpush1.bf16.msra.mxu0 0
    %1376 = vmatprep.subr.bf16.mxu0 0
    %1377 = vmatpush1.bf16.msra.mxu0 0
    %1378 = vmatprep.mubr.bf16.mxu0 0
    %1379 = vmatmul.mubr.bf16.gmra.mrb[0].mxu0 %v1340
    %v1380 = vpop.f32.mrb[0].mxu0
    %v1381 = vadd.f32 %v1187, %v1380
    %v1382 = vpop.f32.mrb[0].mxu0
    %v1383 = vpop.f32.mrb[0].mxu0
    %v1384 = vpop.f32.mrb[0].mxu0
    %1385 = vdwg.mxu0
    %v1387 = vsel %vm125, %v355, 0
    %v1390 = vsel %vm1342, %v48, 0
    %1392 = vmatprep.subr.bf16.mxu0 0
    %1393 = vmatpush1.bf16.msra.mxu0 %v1390
    %1394 = vmatprep.subr.bf16.mxu0 0
    %1395 = vmatpush1.bf16.msra.mxu0 0
    %1396 = vmatprep.subr.bf16.mxu0 0
    %1397 = vmatpush1.bf16.msra.mxu0 0
    %1398 = vmatprep.subr.bf16.mxu0 0
    %1399 = vmatpush1.bf16.msra.mxu0 0
    %1400 = vmatprep.subr.bf16.mxu0 0
    %1401 = vmatpush1.bf16.msra.mxu0 0
    %1402 = vmatprep.subr.bf16.mxu0 0
    %1403 = vmatpush1.bf16.msra.mxu0 0
    %1404 = vmatprep.subr.bf16.mxu0 0
    %1405 = vmatpush1.bf16.msra.mxu0 0
    %1406 = vmatprep.subr.bf16.mxu0 0
    %1407 = vmatpush1.bf16.msra.mxu0 0
    %1408 = vmatprep.subr.bf16.mxu0 0
    %1409 = vmatpush1.bf16.msra.mxu0 0
    %1410 = vmatprep.subr.bf16.mxu0 0
    %1411 = vmatpush1.bf16.msra.mxu0 0
    %1412 = vmatprep.subr.bf16.mxu0 0
    %1413 = vmatpush1.bf16.msra.mxu0 0
    %1414 = vmatprep.subr.bf16.mxu0 0
    %1415 = vmatpush1.bf16.msra.mxu0 0
    %1416 = vmatprep.subr.bf16.mxu0 0
    %1417 = vmatpush1.bf16.msra.mxu0 0
    %1418 = vmatprep.subr.bf16.mxu0 0
    %1419 = vmatpush1.bf16.msra.mxu0 0
    %1420 = vmatprep.subr.bf16.mxu0 0
    %1421 = vmatpush1.bf16.msra.mxu0 0
    %1422 = vmatprep.subr.bf16.mxu0 0
    %1423 = vmatpush1.bf16.msra.mxu0 0
    %1424 = vmatprep.mubr.bf16.mxu0 0
    %1425 = vmatmul.mubr.bf16.gmra.mrb[0].mxu0 %v1387
    %v1426 = vpop.f32.mrb[0].mxu0
    %v1427 = vadd.f32 %v1236, %v1426
    %v1428 = vpop.f32.mrb[0].mxu0
    %v1429 = vpop.f32.mrb[0].mxu0
    %v1430 = vpop.f32.mrb[0].mxu0
    %1431 = vdwg.mxu0
    %v1433 = vsel %vm125, %v356, 0
    %v1436 = vsel %vm1342, %v49, 0
    %1438 = vmatprep.subr.bf16.mxu0 0
    %1439 = vmatpush1.bf16.msra.mxu0 %v1436
    %1440 = vmatprep.subr.bf16.mxu0 0
    %1441 = vmatpush1.bf16.msra.mxu0 0
    %1442 = vmatprep.subr.bf16.mxu0 0
    %1443 = vmatpush1.bf16.msra.mxu0 0
    %1444 = vmatprep.subr.bf16.mxu0 0
    %1445 = vmatpush1.bf16.msra.mxu0 0
    %1446 = vmatprep.subr.bf16.mxu0 0
    %1447 = vmatpush1.bf16.msra.mxu0 0
    %1448 = vmatprep.subr.bf16.mxu0 0
    %1449 = vmatpush1.bf16.msra.mxu0 0
    %1450 = vmatprep.subr.bf16.mxu0 0
    %1451 = vmatpush1.bf16.msra.mxu0 0
    %1452 = vmatprep.subr.bf16.mxu0 0
    %1453 = vmatpush1.bf16.msra.mxu0 0
    %1454 = vmatprep.subr.bf16.mxu0 0
    %1455 = vmatpush1.bf16.msra.mxu0 0
    %1456 = vmatprep.subr.bf16.mxu0 0
    %1457 = vmatpush1.bf16.msra.mxu0 0
    %1458 = vmatprep.subr.bf16.mxu0 0
    %1459 = vmatpush1.bf16.msra.mxu0 0
    %1460 = vmatprep.subr.bf16.mxu0 0
    %1461 = vmatpush1.bf16.msra.mxu0 0
    %1462 = vmatprep.subr.bf16.mxu0 0
    %1463 = vmatpush1.bf16.msra.mxu0 0
    %1464 = vmatprep.subr.bf16.mxu0 0
    %1465 = vmatpush1.bf16.msra.mxu0 0
    %1466 = vmatprep.subr.bf16.mxu0 0
    %1467 = vmatpush1.bf16.msra.mxu0 0
    %1468 = vmatprep.subr.bf16.mxu0 0
    %1469 = vmatpush1.bf16.msra.mxu0 0
    %1470 = vmatprep.mubr.bf16.mxu0 0
    %1471 = vmatmul.mubr.bf16.gmra.mrb[0].mxu0 %v1433
    %v1472 = vpop.f32.mrb[0].mxu0
    %v1473 = vadd.f32 %v1285, %v1472
    %v1474 = vpop.f32.mrb[0].mxu0
    %v1475 = vpop.f32.mrb[0].mxu0
    %v1476 = vpop.f32.mrb[0].mxu0
    %1477 = vdwg.mxu0
    %v1479 = vsel %vm125, %v357, 0
    %v1482 = vsel %vm1342, %v50, 0
    %1484 = vmatprep.subr.bf16.mxu0 0
    %1485 = vmatpush1.bf16.msra.mxu0 %v1482
    %1486 = vmatprep.subr.bf16.mxu0 0
    %1487 = vmatpush1.bf16.msra.mxu0 0
    %1488 = vmatprep.subr.bf16.mxu0 0
    %1489 = vmatpush1.bf16.msra.mxu0 0
    %1490 = vmatprep.subr.bf16.mxu0 0
    %1491 = vmatpush1.bf16.msra.mxu0 0
    %1492 = vmatprep.subr.bf16.mxu0 0
    %1493 = vmatpush1.bf16.msra.mxu0 0
    %1494 = vmatprep.subr.bf16.mxu0 0
    %1495 = vmatpush1.bf16.msra.mxu0 0
    %1496 = vmatprep.subr.bf16.mxu0 0
    %1497 = vmatpush1.bf16.msra.mxu0 0
    %1498 = vmatprep.subr.bf16.mxu0 0
    %1499 = vmatpush1.bf16.msra.mxu0 0
    %1500 = vmatprep.subr.bf16.mxu0 0
    %1501 = vmatpush1.bf16.msra.mxu0 0
    %1502 = vmatprep.subr.bf16.mxu0 0
    %1503 = vmatpush1.bf16.msra.mxu0 0
    %1504 = vmatprep.subr.bf16.mxu0 0
    %1505 = vmatpush1.bf16.msra.mxu0 0
    %1506 = vmatprep.subr.bf16.mxu0 0
    %1507 = vmatpush1.bf16.msra.mxu0 0
    %1508 = vmatprep.subr.bf16.mxu0 0
    %1509 = vmatpush1.bf16.msra.mxu0 0
    %1510 = vmatprep.subr.bf16.mxu0 0
    %1511 = vmatpush1.bf16.msra.mxu0 0
    %1512 = vmatprep.subr.bf16.mxu0 0
    %1513 = vmatpush1.bf16.msra.mxu0 0
    %1514 = vmatprep.subr.bf16.mxu0 0
    %1515 = vmatpush1.bf16.msra.mxu0 0
    %1516 = vmatprep.mubr.bf16.mxu0 0
    %1517 = vmatmul.mubr.bf16.gmra.mrb[0].mxu0 %v1479
    %v1518 = vpop.f32.mrb[0].mxu0
    %v1519 = vadd.f32 %v1334, %v1518
    %v1520 = vpop.f32.mrb[0].mxu0
    %v1521 = vpop.f32.mrb[0].mxu0
    %v1522 = vpop.f32.mrb[0].mxu0
    %1523 = vdwg.mxu0
    %v1525 = vsel %vm550, %v1139, 0
    %1527 = vmatprep.subr.bf16.mxu0 0
    %1528 = vmatpush1.bf16.msra.mxu0 %v1147
    %1529 = vmatprep.subr.bf16.mxu0 0
    %1530 = vmatpush1.bf16.msra.mxu0 0
    %1531 = vmatprep.subr.bf16.mxu0 0
    %1532 = vmatpush1.bf16.msra.mxu0 0
    %1533 = vmatprep.subr.bf16.mxu0 0
    %1534 = vmatpush1.bf16.msra.mxu0 0
    %1535 = vmatprep.subr.bf16.mxu0 0
    %1536 = vmatpush1.bf16.msra.mxu0 0
    %1537 = vmatprep.subr.bf16.mxu0 0
    %1538 = vmatpush1.bf16.msra.mxu0 0
    %1539 = vmatprep.subr.bf16.mxu0 0
    %1540 = vmatpush1.bf16.msra.mxu0 0
    %1541 = vmatprep.subr.bf16.mxu0 0
    %1542 = vmatpush1.bf16.msra.mxu0 0
    %1543 = vmatprep.subr.bf16.mxu0 0
    %1544 = vmatpush1.bf16.msra.mxu0 0
    %1545 = vmatprep.subr.bf16.mxu0 0
    %1546 = vmatpush1.bf16.msra.mxu0 0
    %1547 = vmatprep.subr.bf16.mxu0 0
    %1548 = vmatpush1.bf16.msra.mxu0 0
    %1549 = vmatprep.subr.bf16.mxu0 0
    %1550 = vmatpush1.bf16.msra.mxu0 0
    %1551 = vmatprep.subr.bf16.mxu0 0
    %1552 = vmatpush1.bf16.msra.mxu0 0
    %1553 = vmatprep.subr.bf16.mxu0 0
    %1554 = vmatpush1.bf16.msra.mxu0 0
    %1555 = vmatprep.subr.bf16.mxu0 0
    %1556 = vmatpush1.bf16.msra.mxu0 0
    %1557 = vmatprep.subr.bf16.mxu0 0
    %1558 = vmatpush1.bf16.msra.mxu0 0
    %1559 = vmatprep.mubr.bf16.mxu0 0
    %1560 = vmatmul.mubr.bf16.gmra.mrb[0].mxu0 %v1525
    %v1561 = vpop.f32.mrb[0].mxu0
    %v1562 = vadd.f32 0.0, %v1561
    %v1563 = vpop.f32.mrb[0].mxu0
    %v1564 = vpop.f32.mrb[0].mxu0
    %v1565 = vadd.f32 0.0, %v1564
    %v1566 = vpop.f32.mrb[0].mxu0
    %1567 = vdwg.mxu0
    %v1569 = vsel %vm550, %v1140, 0
    %1571 = vmatprep.subr.bf16.mxu0 0
    %1572 = vmatpush1.bf16.msra.mxu0 %v1196
    %1573 = vmatprep.subr.bf16.mxu0 0
    %1574 = vmatpush1.bf16.msra.mxu0 0
    %1575 = vmatprep.subr.bf16.mxu0 0
    %1576 = vmatpush1.bf16.msra.mxu0 0
    %1577 = vmatprep.subr.bf16.mxu0 0
    %1578 = vmatpush1.bf16.msra.mxu0 0
    %1579 = vmatprep.subr.bf16.mxu0 0
    %1580 = vmatpush1.bf16.msra.mxu0 0
    %1581 = vmatprep.subr.bf16.mxu0 0
    %1582 = vmatpush1.bf16.msra.mxu0 0
    %1583 = vmatprep.subr.bf16.mxu0 0
    %1584 = vmatpush1.bf16.msra.mxu0 0
    %1585 = vmatprep.subr.bf16.mxu0 0
    %1586 = vmatpush1.bf16.msra.mxu0 0
    %1587 = vmatprep.subr.bf16.mxu0 0
    %1588 = vmatpush1.bf16.msra.mxu0 0
    %1589 = vmatprep.subr.bf16.mxu0 0
    %1590 = vmatpush1.bf16.msra.mxu0 0
    %1591 = vmatprep.subr.bf16.mxu0 0
    %1592 = vmatpush1.bf16.msra.mxu0 0
    %1593 = vmatprep.subr.bf16.mxu0 0
    %1594 = vmatpush1.bf16.msra.mxu0 0
    %1595 = vmatprep.subr.bf16.mxu0 0
    %1596 = vmatpush1.bf16.msra.mxu0 0
    %1597 = vmatprep.subr.bf16.mxu0 0
    %1598 = vmatpush1.bf16.msra.mxu0 0
    %1599 = vmatprep.subr.bf16.mxu0 0
    %1600 = vmatpush1.bf16.msra.mxu0 0
    %1601 = vmatprep.subr.bf16.mxu0 0
    %1602 = vmatpush1.bf16.msra.mxu0 0
    %1603 = vmatprep.mubr.bf16.mxu0 0
    %1604 = vmatmul.mubr.bf16.gmra.mrb[0].mxu0 %v1569
    %v1605 = vpop.f32.mrb[0].mxu0
    %v1606 = vadd.f32 0.0, %v1605
    %v1607 = vpop.f32.mrb[0].mxu0
    %v1608 = vpop.f32.mrb[0].mxu0
    %v1609 = vadd.f32 0.0, %v1608
    %v1610 = vpop.f32.mrb[0].mxu0
    %1611 = vdwg.mxu0
    %v1613 = vsel %vm550, %v1141, 0
    %1615 = vmatprep.subr.bf16.mxu0 0
    %1616 = vmatpush1.bf16.msra.mxu0 %v1245
    %1617 = vmatprep.subr.bf16.mxu0 0
    %1618 = vmatpush1.bf16.msra.mxu0 0
    %1619 = vmatprep.subr.bf16.mxu0 0
    %1620 = vmatpush1.bf16.msra.mxu0 0
    %1621 = vmatprep.subr.bf16.mxu0 0
    %1622 = vmatpush1.bf16.msra.mxu0 0
    %1623 = vmatprep.subr.bf16.mxu0 0
    %1624 = vmatpush1.bf16.msra.mxu0 0
    %1625 = vmatprep.subr.bf16.mxu0 0
    %1626 = vmatpush1.bf16.msra.mxu0 0
    %1627 = vmatprep.subr.bf16.mxu0 0
    %1628 = vmatpush1.bf16.msra.mxu0 0
    %1629 = vmatprep.subr.bf16.mxu0 0
    %1630 = vmatpush1.bf16.msra.mxu0 0
    %1631 = vmatprep.subr.bf16.mxu0 0
    %1632 = vmatpush1.bf16.msra.mxu0 0
    %1633 = vmatprep.subr.bf16.mxu0 0
    %1634 = vmatpush1.bf16.msra.mxu0 0
    %1635 = vmatprep.subr.bf16.mxu0 0
    %1636 = vmatpush1.bf16.msra.mxu0 0
    %1637 = vmatprep.subr.bf16.mxu0 0
    %1638 = vmatpush1.bf16.msra.mxu0 0
    %1639 = vmatprep.subr.bf16.mxu0 0
    %1640 = vmatpush1.bf16.msra.mxu0 0
    %1641 = vmatprep.subr.bf16.mxu0 0
    %1642 = vmatpush1.bf16.msra.mxu0 0
    %1643 = vmatprep.subr.bf16.mxu0 0
    %1644 = vmatpush1.bf16.msra.mxu0 0
    %1645 = vmatprep.subr.bf16.mxu0 0
    %1646 = vmatpush1.bf16.msra.mxu0 0
    %1647 = vmatprep.mubr.bf16.mxu0 0
    %1648 = vmatmul.mubr.bf16.gmra.mrb[0].mxu0 %v1613
    %v1649 = vpop.f32.mrb[0].mxu0
    %v1650 = vadd.f32 0.0, %v1649
    %v1651 = vpop.f32.mrb[0].mxu0
    %v1652 = vpop.f32.mrb[0].mxu0
    %v1653 = vadd.f32 0.0, %v1652
    %v1654 = vpop.f32.mrb[0].mxu0
    %1655 = vdwg.mxu0
    %v1657 = vsel %vm550, %v1142, 0
    %1659 = vmatprep.subr.bf16.mxu0 0
    %1660 = vmatpush1.bf16.msra.mxu0 %v1294
    %1661 = vmatprep.subr.bf16.mxu0 0
    %1662 = vmatpush1.bf16.msra.mxu0 0
    %1663 = vmatprep.subr.bf16.mxu0 0
    %1664 = vmatpush1.bf16.msra.mxu0 0
    %1665 = vmatprep.subr.bf16.mxu0 0
    %1666 = vmatpush1.bf16.msra.mxu0 0
    %1667 = vmatprep.subr.bf16.mxu0 0
    %1668 = vmatpush1.bf16.msra.mxu0 0
    %1669 = vmatprep.subr.bf16.mxu0 0
    %1670 = vmatpush1.bf16.msra.mxu0 0
    %1671 = vmatprep.subr.bf16.mxu0 0
    %1672 = vmatpush1.bf16.msra.mxu0 0
    %1673 = vmatprep.subr.bf16.mxu0 0
    %1674 = vmatpush1.bf16.msra.mxu0 0
    %1675 = vmatprep.subr.bf16.mxu0 0
    %1676 = vmatpush1.bf16.msra.mxu0 0
    %1677 = vmatprep.subr.bf16.mxu0 0
    %1678 = vmatpush1.bf16.msra.mxu0 0
    %1679 = vmatprep.subr.bf16.mxu0 0
    %1680 = vmatpush1.bf16.msra.mxu0 0
    %1681 = vmatprep.subr.bf16.mxu0 0
    %1682 = vmatpush1.bf16.msra.mxu0 0
    %1683 = vmatprep.subr.bf16.mxu0 0
    %1684 = vmatpush1.bf16.msra.mxu0 0
    %1685 = vmatprep.subr.bf16.mxu0 0
    %1686 = vmatpush1.bf16.msra.mxu0 0
    %1687 = vmatprep.subr.bf16.mxu0 0
    %1688 = vmatpush1.bf16.msra.mxu0 0
    %1689 = vmatprep.subr.bf16.mxu0 0
    %1690 = vmatpush1.bf16.msra.mxu0 0
    %1691 = vmatprep.mubr.bf16.mxu0 0
    %1692 = vmatmul.mubr.bf16.gmra.mrb[0].mxu0 %v1657
    %v1693 = vpop.f32.mrb[0].mxu0
    %v1694 = vadd.f32 0.0, %v1693
    %v1695 = vpop.f32.mrb[0].mxu0
    %v1696 = vpop.f32.mrb[0].mxu0
    %v1697 = vadd.f32 0.0, %v1696
    %v1698 = vpop.f32.mrb[0].mxu0
    %1699 = vdwg.mxu0
    %v1701 = vsel %vm125, %v883, 0
    %1703 = vmatprep.subr.bf16.mxu0 0
    %1704 = vmatpush1.bf16.msra.mxu0 %v1344
    %1705 = vmatprep.subr.bf16.mxu0 0
    %1706 = vmatpush1.bf16.msra.mxu0 0
    %1707 = vmatprep.subr.bf16.mxu0 0
    %1708 = vmatpush1.bf16.msra.mxu0 0
    %1709 = vmatprep.subr.bf16.mxu0 0
    %1710 = vmatpush1.bf16.msra.mxu0 0
    %1711 = vmatprep.subr.bf16.mxu0 0
    %1712 = vmatpush1.bf16.msra.mxu0 0
    %1713 = vmatprep.subr.bf16.mxu0 0
    %1714 = vmatpush1.bf16.msra.mxu0 0
    %1715 = vmatprep.subr.bf16.mxu0 0
    %1716 = vmatpush1.bf16.msra.mxu0 0
    %1717 = vmatprep.subr.bf16.mxu0 0
    %1718 = vmatpush1.bf16.msra.mxu0 0
    %1719 = vmatprep.subr.bf16.mxu0 0
    %1720 = vmatpush1.bf16.msra.mxu0 0
    %1721 = vmatprep.subr.bf16.mxu0 0
    %1722 = vmatpush1.bf16.msra.mxu0 0
    %1723 = vmatprep.subr.bf16.mxu0 0
    %1724 = vmatpush1.bf16.msra.mxu0 0
    %1725 = vmatprep.subr.bf16.mxu0 0
    %1726 = vmatpush1.bf16.msra.mxu0 0
    %1727 = vmatprep.subr.bf16.mxu0 0
    %1728 = vmatpush1.bf16.msra.mxu0 0
    %1729 = vmatprep.subr.bf16.mxu0 0
    %1730 = vmatpush1.bf16.msra.mxu0 0
    %1731 = vmatprep.subr.bf16.mxu0 0
    %1732 = vmatpush1.bf16.msra.mxu0 0
    %1733 = vmatprep.subr.bf16.mxu0 0
    %1734 = vmatpush1.bf16.msra.mxu0 0
    %1735 = vmatprep.mubr.bf16.mxu0 0
    %1736 = vmatmul.mubr.bf16.gmra.mrb[0].mxu0 %v1701
    %v1737 = vpop.f32.mrb[0].mxu0
    %v1738 = vadd.f32 %v1562, %v1737
    %v1739 = vpop.f32.mrb[0].mxu0
    %v1740 = vpop.f32.mrb[0].mxu0
    %v1741 = vadd.f32 %v1565, %v1740
    %v1742 = vpop.f32.mrb[0].mxu0
    %1743 = vdwg.mxu0
    %v1745 = vsel %vm125, %v884, 0
    %1747 = vmatprep.subr.bf16.mxu0 0
    %1748 = vmatpush1.bf16.msra.mxu0 %v1390
    %1749 = vmatprep.subr.bf16.mxu0 0
    %1750 = vmatpush1.bf16.msra.mxu0 0
    %1751 = vmatprep.subr.bf16.mxu0 0
    %1752 = vmatpush1.bf16.msra.mxu0 0
    %1753 = vmatprep.subr.bf16.mxu0 0
    %1754 = vmatpush1.bf16.msra.mxu0 0
    %1755 = vmatprep.subr.bf16.mxu0 0
    %1756 = vmatpush1.bf16.msra.mxu0 0
    %1757 = vmatprep.subr.bf16.mxu0 0
    %1758 = vmatpush1.bf16.msra.mxu0 0
    %1759 = vmatprep.subr.bf16.mxu0 0
    %1760 = vmatpush1.bf16.msra.mxu0 0
    %1761 = vmatprep.subr.bf16.mxu0 0
    %1762 = vmatpush1.bf16.msra.mxu0 0
    %1763 = vmatprep.subr.bf16.mxu0 0
    %1764 = vmatpush1.bf16.msra.mxu0 0
    %1765 = vmatprep.subr.bf16.mxu0 0
    %1766 = vmatpush1.bf16.msra.mxu0 0
    %1767 = vmatprep.subr.bf16.mxu0 0
    %1768 = vmatpush1.bf16.msra.mxu0 0
    %1769 = vmatprep.subr.bf16.mxu0 0
    %1770 = vmatpush1.bf16.msra.mxu0 0
    %1771 = vmatprep.subr.bf16.mxu0 0
    %1772 = vmatpush1.bf16.msra.mxu0 0
    %1773 = vmatprep.subr.bf16.mxu0 0
    %1774 = vmatpush1.bf16.msra.mxu0 0
    %1775 = vmatprep.subr.bf16.mxu0 0
    %1776 = vmatpush1.bf16.msra.mxu0 0
    %1777 = vmatprep.subr.bf16.mxu0 0
    %1778 = vmatpush1.bf16.msra.mxu0 0
    %1779 = vmatprep.mubr.bf16.mxu0 0
    %1780 = vmatmul.mubr.bf16.gmra.mrb[0].mxu0 %v1745
    %v1781 = vpop.f32.mrb[0].mxu0
    %v1782 = vadd.f32 %v1606, %v1781
    %v1783 = vpop.f32.mrb[0].mxu0
    %v1784 = vpop.f32.mrb[0].mxu0
    %v1785 = vadd.f32 %v1609, %v1784
    %v1786 = vpop.f32.mrb[0].mxu0
    %1787 = vdwg.mxu0
    %v1789 = vsel %vm125, %v885, 0
    %1791 = vmatprep.subr.bf16.mxu0 0
    %1792 = vmatpush1.bf16.msra.mxu0 %v1436
    %1793 = vmatprep.subr.bf16.mxu0 0
    %1794 = vmatpush1.bf16.msra.mxu0 0
    %1795 = vmatprep.subr.bf16.mxu0 0
    %1796 = vmatpush1.bf16.msra.mxu0 0
    %1797 = vmatprep.subr.bf16.mxu0 0
    %1798 = vmatpush1.bf16.msra.mxu0 0
    %1799 = vmatprep.subr.bf16.mxu0 0
    %1800 = vmatpush1.bf16.msra.mxu0 0
    %1801 = vmatprep.subr.bf16.mxu0 0
    %1802 = vmatpush1.bf16.msra.mxu0 0
    %1803 = vmatprep.subr.bf16.mxu0 0
    %1804 = vmatpush1.bf16.msra.mxu0 0
    %1805 = vmatprep.subr.bf16.mxu0 0
    %1806 = vmatpush1.bf16.msra.mxu0 0
    %1807 = vmatprep.subr.bf16.mxu0 0
    %1808 = vmatpush1.bf16.msra.mxu0 0
    %1809 = vmatprep.subr.bf16.mxu0 0
    %1810 = vmatpush1.bf16.msra.mxu0 0
    %1811 = vmatprep.subr.bf16.mxu0 0
    %1812 = vmatpush1.bf16.msra.mxu0 0
    %1813 = vmatprep.subr.bf16.mxu0 0
    %1814 = vmatpush1.bf16.msra.mxu0 0
    %1815 = vmatprep.subr.bf16.mxu0 0
    %1816 = vmatpush1.bf16.msra.mxu0 0
    %1817 = vmatprep.subr.bf16.mxu0 0
    %1818 = vmatpush1.bf16.msra.mxu0 0
    %1819 = vmatprep.subr.bf16.mxu0 0
    %1820 = vmatpush1.bf16.msra.mxu0 0
    %1821 = vmatprep.subr.bf16.mxu0 0
    %1822 = vmatpush1.bf16.msra.mxu0 0
    %1823 = vmatprep.mubr.bf16.mxu0 0
    %1824 = vmatmul.mubr.bf16.gmra.mrb[0].mxu0 %v1789
    %v1825 = vpop.f32.mrb[0].mxu0
    %v1826 = vadd.f32 %v1650, %v1825
    %v1827 = vpop.f32.mrb[0].mxu0
    %v1828 = vpop.f32.mrb[0].mxu0
    %v1829 = vadd.f32 %v1653, %v1828
    %v1830 = vpop.f32.mrb[0].mxu0
    %1831 = vdwg.mxu0
    %v1833 = vsel %vm125, %v886, 0
    %1835 = vmatprep.subr.bf16.mxu0 0
    %1836 = vmatpush1.bf16.msra.mxu0 %v1482
    %1837 = vmatprep.subr.bf16.mxu0 0
    %1838 = vmatpush1.bf16.msra.mxu0 0
    %1839 = vmatprep.subr.bf16.mxu0 0
    %1840 = vmatpush1.bf16.msra.mxu0 0
    %1841 = vmatprep.subr.bf16.mxu0 0
    %1842 = vmatpush1.bf16.msra.mxu0 0
    %1843 = vmatprep.subr.bf16.mxu0 0
    %1844 = vmatpush1.bf16.msra.mxu0 0
    %1845 = vmatprep.subr.bf16.mxu0 0
    %1846 = vmatpush1.bf16.msra.mxu0 0
    %1847 = vmatprep.subr.bf16.mxu0 0
    %1848 = vmatpush1.bf16.msra.mxu0 0
    %1849 = vmatprep.subr.bf16.mxu0 0
    %1850 = vmatpush1.bf16.msra.mxu0 0
    %1851 = vmatprep.subr.bf16.mxu0 0
    %1852 = vmatpush1.bf16.msra.mxu0 0
    %1853 = vmatprep.subr.bf16.mxu0 0
    %1854 = vmatpush1.bf16.msra.mxu0 0
    %1855 = vmatprep.subr.bf16.mxu0 0
    %1856 = vmatpush1.bf16.msra.mxu0 0
    %1857 = vmatprep.subr.bf16.mxu0 0
    %1858 = vmatpush1.bf16.msra.mxu0 0
    %1859 = vmatprep.subr.bf16.mxu0 0
    %1860 = vmatpush1.bf16.msra.mxu0 0
    %1861 = vmatprep.subr.bf16.mxu0 0
    %1862 = vmatpush1.bf16.msra.mxu0 0
    %1863 = vmatprep.subr.bf16.mxu0 0
    %1864 = vmatpush1.bf16.msra.mxu0 0
    %1865 = vmatprep.subr.bf16.mxu0 0
    %1866 = vmatpush1.bf16.msra.mxu0 0
    %1867 = vmatprep.mubr.bf16.mxu0 0
    %1868 = vmatmul.mubr.bf16.gmra.mrb[0].mxu0 %v1833
    %v1869 = vpop.f32.mrb[0].mxu0
    %v1870 = vadd.f32 %v1694, %v1869
    %v1871 = vpop.f32.mrb[0].mxu0
    %v1872 = vpop.f32.mrb[0].mxu0
    %v1873 = vadd.f32 %v1697, %v1872
    %v1874 = vpop.f32.mrb[0].mxu0
    %1875 = vdwg.mxu0
    %v1876 = vmul.f32 %v75, 0.5
    %1878 = vset.pattern.permute.xlu0 0
    %1879 = vperm.xlu0 %1878, %v1876
    %v1880 = vpop.permute.xlu0 %1879
    %v1882 = vmul.f32 %v1381, %v1880
    %v1883 = vmul.f32 %v1427, %v1880
    %v1884 = vmul.f32 %v1473, %v1880
    %v1885 = vmul.f32 %v1519, %v1880
    %1886 = vst.msk [vmem:[#allocation2] sm:$0xff] %vm125, %v1882
    %1887 = vst.msk [vmem:[#allocation2 + $0x8] sm:$0xff] %vm125, %v1883
    %1888 = vst.msk [vmem:[#allocation2 + $0x10] sm:$0xff] %vm125, %v1884
    %1889 = vst.msk [vmem:[#allocation2 + $0x18] sm:$0xff] %vm125, %v1885
    %v1890 = vmul.f32 %v77, 0.5
    %v1891 = vmul.f32 %v78, 0.5
    %1893 = vset.pattern.permute.xlu0 0
    %1894 = vperm.xlu0 %1893, %v1890
    %v1895 = vpop.permute.xlu0 %1894
    %1898 = vset.pattern.permute.xlu0 0
    %1899 = vperm.xlu0 %1898, %v1891
    %v1900 = vpop.permute.xlu0 %1899
    %v1902 = vmul.f32 %v1738, %v1895
    %v1903 = vmul.f32 %v1741, %v1900
    %v1904 = vmul.f32 %v1782, %v1895
    %v1905 = vmul.f32 %v1785, %v1900
    %v1906 = vmul.f32 %v1826, %v1895
    %v1907 = vmul.f32 %v1829, %v1900
    %v1908 = vmul.f32 %v1870, %v1895
    %v1909 = vmul.f32 %v1873, %v1900
    %1910 = vst.msk [vmem:[%s11] sm:$0xff] %vm125, %v1902
    %1911 = vst.msk [vmem:[%s11 + $0x8] sm:$0xff] %vm125, %v1903
    %1912 = vst.msk [vmem:[%s11 + $0x10] sm:$0xff] %vm125, %v1904
    %1913 = vst.msk [vmem:[%s11 + $0x18] sm:$0xff] %vm125, %v1905
    %1914 = vst.msk [vmem:[%s11 + $0x20] sm:$0xff] %vm125, %v1906
    %1915 = vst.msk [vmem:[%s11 + $0x28] sm:$0xff] %vm125, %v1907
    %1916 = vst.msk [vmem:[%s11 + $0x30] sm:$0xff] %vm125, %v1908
    %1917 = vst.msk [vmem:[%s11 + $0x38] sm:$0xff] %vm125, %v1909
    %s1918 = scalar_lea.vmem %s0, 16
    %v1919 = vld [vmem:[%s1918] sm:$0xf]
    %v1920 = vld [vmem:[%s1918 + $0x4] sm:$0xf]
    %v1921 = vld [vmem:[%s1918 + $0x8] sm:$0xf]
    %v1922 = vld [vmem:[%s1918 + $0xc] sm:$0xf]
    %s1923 = scalar_lea.vmem %s1, 16
    %v1924 = vld [vmem:[%s1923] sm:$0xf]
    %v1925 = vld [vmem:[%s1923 + $0x4] sm:$0xf]
    %v1926 = vld [vmem:[%s1923 + $0x8] sm:$0xf]
    %v1927 = vld [vmem:[%s1923 + $0xc] sm:$0xf]
    %s1928 = scalar_lea.vmem %s2, 16
    %v1929 = vld [vmem:[%s1928] sm:$0xf]
    %v1930 = vld [vmem:[%s1928 + $0x4] sm:$0xf]
    %v1931 = vld [vmem:[%s1928 + $0x8] sm:$0xf]
    %v1932 = vld [vmem:[%s1928 + $0xc] sm:$0xf]
    %s1933 = scalar_lea.vmem %s3, 32
    %v1934 = vld [vmem:[%s1933] sm:$0xf]
    %v1935 = vld [vmem:[%s1933 + $0x4] sm:$0xf]
    %v1936 = vld [vmem:[%s1933 + $0x8] sm:$0xf]
    %v1937 = vld [vmem:[%s1933 + $0xc] sm:$0xf]
    %v1938 = vld [vmem:[%s1933 + $0x10] sm:$0xf]
    %v1939 = vld [vmem:[%s1933 + $0x14] sm:$0xf]
    %v1940 = vld [vmem:[%s1933 + $0x18] sm:$0xf]
    %v1941 = vld [vmem:[%s1933 + $0x1c] sm:$0xf]
    %s1942 = scalar_lea.vmem %s4, 32
    %v1943 = vld [vmem:[%s1942] sm:$0xf]
    %v1944 = vld [vmem:[%s1942 + $0x4] sm:$0xf]
    %v1945 = vld [vmem:[%s1942 + $0x8] sm:$0xf]
    %v1946 = vld [vmem:[%s1942 + $0xc] sm:$0xf]
    %v1947 = vld [vmem:[%s1942 + $0x10] sm:$0xf]
    %v1948 = vld [vmem:[%s1942 + $0x14] sm:$0xf]
    %v1949 = vld [vmem:[%s1942 + $0x18] sm:$0xf]
    %v1950 = vld [vmem:[%s1942 + $0x1c] sm:$0xf]
    %s1951 = scalar_lea.vmem %s5, 32
    %v1952 = vld [vmem:[%s1951] sm:$0xf]
    %v1953 = vld [vmem:[%s1951 + $0x4] sm:$0xf]
    %v1954 = vld [vmem:[%s1951 + $0x8] sm:$0xf]
    %v1955 = vld [vmem:[%s1951 + $0xc] sm:$0xf]
    %v1956 = vld [vmem:[%s1951 + $0x10] sm:$0xf]
    %v1957 = vld [vmem:[%s1951 + $0x14] sm:$0xf]
    %v1958 = vld [vmem:[%s1951 + $0x18] sm:$0xf]
    %v1959 = vld [vmem:[%s1951 + $0x1c] sm:$0xf]
    %s1960 = scalar_lea.vmem %s6, 8
    %v1961 = vld [vmem:[%s1960] sm:$0xff]
    %s1962 = scalar_lea.vmem %s7, 1
    %v1963 = vld [vmem:[%s1962] sm:$0x1]
    %s1964 = scalar_lea.vmem %s8, 16
    %v1965 = vld [vmem:[%s1964] sm:$0xff]
    %v1966 = vld [vmem:[%s1964 + $0x8] sm:$0xff]
    %s1967 = scalar_lea.vmem %s9, 1
    %v1968 = vld [vmem:[%s1967] sm:$0x1]
    %1970 = vset.pattern.permute.xlu0 0
    %1971 = vperm.xlu0 %1970, %v1961
    %v1972 = vpop.permute.xlu0 %1971
    %v1975 = vlaneseq
    %v1976 = vshrl.u32 %v1975, 7
    %v1977 = vsub.s32 0, %v1976
    %v1978 = vrot.slane %v1963, %v1977
    %v1980 = vmul.f32 %v1972, %v1978
    %v1981 = vsub.f32 %v1980, 1.0
    %v1982 = vmul.f32 %v1981, 1000000.0
    %v1984 = vlaneseq
    %v1985 = vshrl.u32 %v1984, 7
    %v1986 = vsub.s32 0, %v1985
    %v1987 = vrot.slane %v1968, %v1986
    %v1989 = vmul.f32 %v1972, %v1987
    %v1990 = vsub.f32 %v1989, 1.0
    %v1991 = vmul.f32 %v1990, 1000000.0
    %1993 = vset.pattern.permute.xlu0 0
    %1994 = vperm.xlu0 %1993, %v1965
    %v1995 = vpop.permute.xlu0 %1994
    %1998 = vset.pattern.permute.xlu0 0
    %1999 = vperm.xlu0 %1998, %v1966
    %v2000 = vpop.permute.xlu0 %1999
    %v2002 = vmul.f32 %v1995, %v1978
    %v2003 = vmul.f32 %v2000, %v1978
    %v2004 = vsub.f32 %v2002, 1.0
    %v2005 = vsub.f32 %v2003, 1.0
    %v2006 = vmul.f32 %v2004, 1000000.0
    %v2007 = vmul.f32 %v2005, 1000000.0
    %v2008 = vmul.f32 %v1995, %v1987
    %v2009 = vmul.f32 %v2000, %v1987
    %v2010 = vsub.f32 %v2008, 1.0
    %v2011 = vsub.f32 %v2009, 1.0
    %v2012 = vmul.f32 %v2010, 1000000.0
    %v2013 = vmul.f32 %v2011, 1000000.0
    %v2015 = vsel %vm125, %v1919, 0
    %v2018 = vsel %vm125, %v1924, 0
    %2020 = vmatprep.subr.bf16.mxu0 0
    %2021 = vmatpush1.bf16.xpose.msra.mxu0 %v2018
    %2022 = vmatprep.subr.bf16.mxu0 0
    %2023 = vmatpush1.bf16.xpose.msra.mxu0 0
    %2024 = vmatprep.subr.bf16.mxu0 0
    %2025 = vmatpush1.bf16.xpose.msra.mxu0 0
    %2026 = vmatprep.subr.bf16.mxu0 0
    %2027 = vmatpush1.bf16.xpose.msra.mxu0 0
    %2028 = vmatprep.subr.bf16.mxu0 0
    %2029 = vmatpush1.bf16.xpose.msra.mxu0 0
    %2030 = vmatprep.subr.bf16.mxu0 0
    %2031 = vmatpush1.bf16.xpose.msra.mxu0 0
    %2032 = vmatprep.subr.bf16.mxu0 0
    %2033 = vmatpush1.bf16.xpose.msra.mxu0 0
    %2034 = vmatprep.subr.bf16.mxu0 0
    %2035 = vmatpush1.bf16.xpose.msra.mxu0 0
    %2036 = vmatprep.subr.bf16.mxu0 0
    %2037 = vmatpush1.bf16.xpose.msra.mxu0 0
    %2038 = vmatprep.subr.bf16.mxu0 0
    %2039 = vmatpush1.bf16.xpose.msra.mxu0 0
    %2040 = vmatprep.subr.bf16.mxu0 0
    %2041 = vmatpush1.bf16.xpose.msra.mxu0 0
    %2042 = vmatprep.subr.bf16.mxu0 0
    %2043 = vmatpush1.bf16.xpose.msra.mxu0 0
    %2044 = vmatprep.subr.bf16.mxu0 0
    %2045 = vmatpush1.bf16.xpose.msra.mxu0 0
    %2046 = vmatprep.subr.bf16.mxu0 0
    %2047 = vmatpush1.bf16.xpose.msra.mxu0 0
    %2048 = vmatprep.subr.bf16.mxu0 0
    %2049 = vmatpush1.bf16.xpose.msra.mxu0 0
    %2050 = vmatprep.subr.bf16.mxu0 0
    %2051 = vmatpush1.bf16.xpose.msra.mxu0 0
    %2052 = vmatprep.mubr.bf16.mxu0 0
    %2053 = vmatmul.mubr.bf16.gmra.mrb[0].mxu0 %v2015
    %v2054 = vpop.f32.mrb[0].mxu0
    %v2055 = vadd.f32 %v1982, %v2054
    %v2056 = vpop.f32.mrb[0].mxu0
    %v2057 = vpop.f32.mrb[0].mxu0
    %v2058 = vpop.f32.mrb[0].mxu0
    %2059 = vdwg.mxu0
    %v2061 = vsel %vm125, %v1920, 0
    %v2064 = vsel %vm125, %v1925, 0
    %2066 = vmatprep.subr.bf16.mxu0 0
    %2067 = vmatpush1.bf16.xpose.msra.mxu0 %v2064
    %2068 = vmatprep.subr.bf16.mxu0 0
    %2069 = vmatpush1.bf16.xpose.msra.mxu0 0
    %2070 = vmatprep.subr.bf16.mxu0 0
    %2071 = vmatpush1.bf16.xpose.msra.mxu0 0
    %2072 = vmatprep.subr.bf16.mxu0 0
    %2073 = vmatpush1.bf16.xpose.msra.mxu0 0
    %2074 = vmatprep.subr.bf16.mxu0 0
    %2075 = vmatpush1.bf16.xpose.msra.mxu0 0
    %2076 = vmatprep.subr.bf16.mxu0 0
    %2077 = vmatpush1.bf16.xpose.msra.mxu0 0
    %2078 = vmatprep.subr.bf16.mxu0 0
    %2079 = vmatpush1.bf16.xpose.msra.mxu0 0
    %2080 = vmatprep.subr.bf16.mxu0 0
    %2081 = vmatpush1.bf16.xpose.msra.mxu0 0
    %2082 = vmatprep.subr.bf16.mxu0 0
    %2083 = vmatpush1.bf16.xpose.msra.mxu0 0
    %2084 = vmatprep.subr.bf16.mxu0 0
    %2085 = vmatpush1.bf16.xpose.msra.mxu0 0
    %2086 = vmatprep.subr.bf16.mxu0 0
    %2087 = vmatpush1.bf16.xpose.msra.mxu0 0
    %2088 = vmatprep.subr.bf16.mxu0 0
    %2089 = vmatpush1.bf16.xpose.msra.mxu0 0
    %2090 = vmatprep.subr.bf16.mxu0 0
    %2091 = vmatpush1.bf16.xpose.msra.mxu0 0
    %2092 = vmatprep.subr.bf16.mxu0 0
    %2093 = vmatpush1.bf16.xpose.msra.mxu0 0
    %2094 = vmatprep.subr.bf16.mxu0 0
    %2095 = vmatpush1.bf16.xpose.msra.mxu0 0
    %2096 = vmatprep.subr.bf16.mxu0 0
    %2097 = vmatpush1.bf16.xpose.msra.mxu0 0
    %2098 = vmatprep.mubr.bf16.mxu0 0
    %2099 = vmatmul.mubr.bf16.gmra.mrb[0].mxu0 %v2061
    %v2100 = vpop.f32.mrb[0].mxu0
    %v2101 = vadd.f32 %v1982, %v2100
    %v2102 = vpop.f32.mrb[0].mxu0
    %v2103 = vpop.f32.mrb[0].mxu0
    %v2104 = vpop.f32.mrb[0].mxu0
    %2105 = vdwg.mxu0
    %v2107 = vsel %vm125, %v1921, 0
    %v2110 = vsel %vm125, %v1926, 0
    %2112 = vmatprep.subr.bf16.mxu0 0
    %2113 = vmatpush1.bf16.xpose.msra.mxu0 %v2110
    %2114 = vmatprep.subr.bf16.mxu0 0
    %2115 = vmatpush1.bf16.xpose.msra.mxu0 0
    %2116 = vmatprep.subr.bf16.mxu0 0
    %2117 = vmatpush1.bf16.xpose.msra.mxu0 0
    %2118 = vmatprep.subr.bf16.mxu0 0
    %2119 = vmatpush1.bf16.xpose.msra.mxu0 0
    %2120 = vmatprep.subr.bf16.mxu0 0
    %2121 = vmatpush1.bf16.xpose.msra.mxu0 0
    %2122 = vmatprep.subr.bf16.mxu0 0
    %2123 = vmatpush1.bf16.xpose.msra.mxu0 0
    %2124 = vmatprep.subr.bf16.mxu0 0
    %2125 = vmatpush1.bf16.xpose.msra.mxu0 0
    %2126 = vmatprep.subr.bf16.mxu0 0
    %2127 = vmatpush1.bf16.xpose.msra.mxu0 0
    %2128 = vmatprep.subr.bf16.mxu0 0
    %2129 = vmatpush1.bf16.xpose.msra.mxu0 0
    %2130 = vmatprep.subr.bf16.mxu0 0
    %2131 = vmatpush1.bf16.xpose.msra.mxu0 0
    %2132 = vmatprep.subr.bf16.mxu0 0
    %2133 = vmatpush1.bf16.xpose.msra.mxu0 0
    %2134 = vmatprep.subr.bf16.mxu0 0
    %2135 = vmatpush1.bf16.xpose.msra.mxu0 0
    %2136 = vmatprep.subr.bf16.mxu0 0
    %2137 = vmatpush1.bf16.xpose.msra.mxu0 0
    %2138 = vmatprep.subr.bf16.mxu0 0
    %2139 = vmatpush1.bf16.xpose.msra.mxu0 0
    %2140 = vmatprep.subr.bf16.mxu0 0
    %2141 = vmatpush1.bf16.xpose.msra.mxu0 0
    %2142 = vmatprep.subr.bf16.mxu0 0
    %2143 = vmatpush1.bf16.xpose.msra.mxu0 0
    %2144 = vmatprep.mubr.bf16.mxu0 0
    %2145 = vmatmul.mubr.bf16.gmra.mrb[0].mxu0 %v2107
    %v2146 = vpop.f32.mrb[0].mxu0
    %v2147 = vadd.f32 %v1982, %v2146
    %v2148 = vpop.f32.mrb[0].mxu0
    %v2149 = vpop.f32.mrb[0].mxu0
    %v2150 = vpop.f32.mrb[0].mxu0
    %2151 = vdwg.mxu0
    %v2153 = vsel %vm125, %v1922, 0
    %v2156 = vsel %vm125, %v1927, 0
    %2158 = vmatprep.subr.bf16.mxu0 0
    %2159 = vmatpush1.bf16.xpose.msra.mxu0 %v2156
    %2160 = vmatprep.subr.bf16.mxu0 0
    %2161 = vmatpush1.bf16.xpose.msra.mxu0 0
    %2162 = vmatprep.subr.bf16.mxu0 0
    %2163 = vmatpush1.bf16.xpose.msra.mxu0 0
    %2164 = vmatprep.subr.bf16.mxu0 0
    %2165 = vmatpush1.bf16.xpose.msra.mxu0 0
    %2166 = vmatprep.subr.bf16.mxu0 0
    %2167 = vmatpush1.bf16.xpose.msra.mxu0 0
    %2168 = vmatprep.subr.bf16.mxu0 0
    %2169 = vmatpush1.bf16.xpose.msra.mxu0 0
    %2170 = vmatprep.subr.bf16.mxu0 0
    %2171 = vmatpush1.bf16.xpose.msra.mxu0 0
    %2172 = vmatprep.subr.bf16.mxu0 0
    %2173 = vmatpush1.bf16.xpose.msra.mxu0 0
    %2174 = vmatprep.subr.bf16.mxu0 0
    %2175 = vmatpush1.bf16.xpose.msra.mxu0 0
    %2176 = vmatprep.subr.bf16.mxu0 0
    %2177 = vmatpush1.bf16.xpose.msra.mxu0 0
    %2178 = vmatprep.subr.bf16.mxu0 0
    %2179 = vmatpush1.bf16.xpose.msra.mxu0 0
    %2180 = vmatprep.subr.bf16.mxu0 0
    %2181 = vmatpush1.bf16.xpose.msra.mxu0 0
    %2182 = vmatprep.subr.bf16.mxu0 0
    %2183 = vmatpush1.bf16.xpose.msra.mxu0 0
    %2184 = vmatprep.subr.bf16.mxu0 0
    %2185 = vmatpush1.bf16.xpose.msra.mxu0 0
    %2186 = vmatprep.subr.bf16.mxu0 0
    %2187 = vmatpush1.bf16.xpose.msra.mxu0 0
    %2188 = vmatprep.subr.bf16.mxu0 0
    %2189 = vmatpush1.bf16.xpose.msra.mxu0 0
    %2190 = vmatprep.mubr.bf16.mxu0 0
    %2191 = vmatmul.mubr.bf16.gmra.mrb[0].mxu0 %v2153
    %v2192 = vpop.f32.mrb[0].mxu0
    %v2193 = vadd.f32 %v1982, %v2192
    %v2194 = vpop.f32.mrb[0].mxu0
    %v2195 = vpop.f32.mrb[0].mxu0
    %v2196 = vpop.f32.mrb[0].mxu0
    %2197 = vdwg.mxu0
    %v2198 = vsel %vm125, %v2055, -inf
    %2199 = vmax.xlane.f32.xlu0 %v2198
    %v2200 = vpop.xlane.xlu0 %2199
    %v2201 = vsel %vm125, %v2101, -inf
    %2202 = vmax.xlane.f32.xlu0 %v2201
    %v2203 = vpop.xlane.xlu0 %2202
    %v2204 = vsel %vm125, %v2147, -inf
    %2205 = vmax.xlane.f32.xlu0 %v2204
    %v2206 = vpop.xlane.xlu0 %2205
    %v2207 = vsel %vm125, %v2193, -inf
    %2208 = vmax.xlane.f32.xlu0 %v2207
    %v2209 = vpop.xlane.xlu0 %2208
    %v2210 = vsub.f32 %v2055, %v2200
    %v2211 = vsub.f32 %v2101, %v2203
    %v2212 = vsub.f32 %v2147, %v2206
    %v2213 = vsub.f32 %v2193, %v2209
    %v2214 = vmul.f32 %v2210, 1.442695
    %v2215 = vpow.pop %v2214
    %v2216 = vmul.f32 %v2211, 1.442695
    %v2217 = vpow.pop %v2216
    %v2218 = vmul.f32 %v2212, 1.442695
    %v2219 = vpow.pop %v2218
    %v2220 = vmul.f32 %v2213, 1.442695
    %v2221 = vpow.pop %v2220
    %v2222 = vsel %vm125, %v2215, 0.0
    %2223 = vadd.xlane.f32.xlu0 %v2222
    %v2224 = vpop.xlane.xlu0 %2223
    %v2225 = vsel %vm125, %v2217, 0.0
    %2226 = vadd.xlane.f32.xlu0 %v2225
    %v2227 = vpop.xlane.xlu0 %2226
    %v2228 = vsel %vm125, %v2219, 0.0
    %2229 = vadd.xlane.f32.xlu0 %v2228
    %v2230 = vpop.xlane.xlu0 %2229
    %v2231 = vsel %vm125, %v2221, 0.0
    %2232 = vadd.xlane.f32.xlu0 %v2231
    %v2233 = vpop.xlane.xlu0 %2232
    %v2234 = vrcp.pop %v2224
    %v2235 = vrcp.pop %v2227
    %v2236 = vrcp.pop %v2230
    %v2237 = vrcp.pop %v2233
    %v2238 = vmul.f32 %v2215, %v2234
    %v2239 = vmul.f32 %v2217, %v2235
    %v2240 = vmul.f32 %v2219, %v2236
    %v2241 = vmul.f32 %v2221, %v2237
    %v2242 = vpack.c.bf16 %v2238, %v2238
    %v2243 = vpack.c.bf16 %v2239, %v2239
    %v2244 = vpack.c.bf16 %v2240, %v2240
    %v2245 = vpack.c.bf16 %v2241, %v2241
    %v2248 = vunpack.c.l.b16 %v1943
    %v2249 = vunpack.c.l.b16 %v1944
    %v2250 = vpack.c.b16 %v2249, %v2248
    %v2252 = vsel %vm125, %v2250, 0
    %2254 = vmatprep.subr.bf16.mxu0 0
    %2255 = vmatpush1.bf16.xpose.msra.mxu0 %v2252
    %2256 = vmatprep.subr.bf16.mxu0 0
    %2257 = vmatpush1.bf16.xpose.msra.mxu0 0
    %2258 = vmatprep.subr.bf16.mxu0 0
    %2259 = vmatpush1.bf16.xpose.msra.mxu0 0
    %2260 = vmatprep.subr.bf16.mxu0 0
    %2261 = vmatpush1.bf16.xpose.msra.mxu0 0
    %2262 = vmatprep.subr.bf16.mxu0 0
    %2263 = vmatpush1.bf16.xpose.msra.mxu0 0
    %2264 = vmatprep.subr.bf16.mxu0 0
    %2265 = vmatpush1.bf16.xpose.msra.mxu0 0
    %2266 = vmatprep.subr.bf16.mxu0 0
    %2267 = vmatpush1.bf16.xpose.msra.mxu0 0
    %2268 = vmatprep.subr.bf16.mxu0 0
    %2269 = vmatpush1.bf16.xpose.msra.mxu0 0
    %2270 = vmatprep.subr.bf16.mxu0 0
    %2271 = vmatpush1.bf16.xpose.msra.mxu0 0
    %2272 = vmatprep.subr.bf16.mxu0 0
    %2273 = vmatpush1.bf16.xpose.msra.mxu0 0
    %2274 = vmatprep.subr.bf16.mxu0 0
    %2275 = vmatpush1.bf16.xpose.msra.mxu0 0
    %2276 = vmatprep.subr.bf16.mxu0 0
    %2277 = vmatpush1.bf16.xpose.msra.mxu0 0
    %2278 = vmatprep.subr.bf16.mxu0 0
    %2279 = vmatpush1.bf16.xpose.msra.mxu0 0
    %2280 = vmatprep.subr.bf16.mxu0 0
    %2281 = vmatpush1.bf16.xpose.msra.mxu0 0
    %2282 = vmatprep.subr.bf16.mxu0 0
    %2283 = vmatpush1.bf16.xpose.msra.mxu0 0
    %2284 = vmatprep.subr.bf16.mxu0 0
    %2285 = vmatpush1.bf16.xpose.msra.mxu0 0
    %2286 = vmatprep.mubr.bf16.mxu0 0
    %2287 = vmatmul.mubr.bf16.gmra.mrb[0].mxu0 %v2015
    %v2288 = vpop.f32.mrb[0].mxu0
    %v2289 = vadd.f32 %v1991, %v2288
    %v2290 = vpop.f32.mrb[0].mxu0
    %v2291 = vpop.f32.mrb[0].mxu0
    %v2292 = vpop.f32.mrb[0].mxu0
    %2293 = vdwg.mxu0
    %v2296 = vunpack.c.l.b16 %v1945
    %v2297 = vunpack.c.l.b16 %v1946
    %v2298 = vpack.c.b16 %v2297, %v2296
    %v2300 = vsel %vm125, %v2298, 0
    %2302 = vmatprep.subr.bf16.mxu0 0
    %2303 = vmatpush1.bf16.xpose.msra.mxu0 %v2300
    %2304 = vmatprep.subr.bf16.mxu0 0
    %2305 = vmatpush1.bf16.xpose.msra.mxu0 0
    %2306 = vmatprep.subr.bf16.mxu0 0
    %2307 = vmatpush1.bf16.xpose.msra.mxu0 0
    %2308 = vmatprep.subr.bf16.mxu0 0
    %2309 = vmatpush1.bf16.xpose.msra.mxu0 0
    %2310 = vmatprep.subr.bf16.mxu0 0
    %2311 = vmatpush1.bf16.xpose.msra.mxu0 0
    %2312 = vmatprep.subr.bf16.mxu0 0
    %2313 = vmatpush1.bf16.xpose.msra.mxu0 0
    %2314 = vmatprep.subr.bf16.mxu0 0
    %2315 = vmatpush1.bf16.xpose.msra.mxu0 0
    %2316 = vmatprep.subr.bf16.mxu0 0
    %2317 = vmatpush1.bf16.xpose.msra.mxu0 0
    %2318 = vmatprep.subr.bf16.mxu0 0
    %2319 = vmatpush1.bf16.xpose.msra.mxu0 0
    %2320 = vmatprep.subr.bf16.mxu0 0
    %2321 = vmatpush1.bf16.xpose.msra.mxu0 0
    %2322 = vmatprep.subr.bf16.mxu0 0
    %2323 = vmatpush1.bf16.xpose.msra.mxu0 0
    %2324 = vmatprep.subr.bf16.mxu0 0
    %2325 = vmatpush1.bf16.xpose.msra.mxu0 0
    %2326 = vmatprep.subr.bf16.mxu0 0
    %2327 = vmatpush1.bf16.xpose.msra.mxu0 0
    %2328 = vmatprep.subr.bf16.mxu0 0
    %2329 = vmatpush1.bf16.xpose.msra.mxu0 0
    %2330 = vmatprep.subr.bf16.mxu0 0
    %2331 = vmatpush1.bf16.xpose.msra.mxu0 0
    %2332 = vmatprep.subr.bf16.mxu0 0
    %2333 = vmatpush1.bf16.xpose.msra.mxu0 0
    %2334 = vmatprep.mubr.bf16.mxu0 0
    %2335 = vmatmul.mubr.bf16.gmra.mrb[0].mxu0 %v2061
    %v2336 = vpop.f32.mrb[0].mxu0
    %v2337 = vadd.f32 %v1991, %v2336
    %v2338 = vpop.f32.mrb[0].mxu0
    %v2339 = vpop.f32.mrb[0].mxu0
    %v2340 = vpop.f32.mrb[0].mxu0
    %2341 = vdwg.mxu0
    %v2344 = vunpack.c.l.b16 %v1947
    %v2345 = vunpack.c.l.b16 %v1948
    %v2346 = vpack.c.b16 %v2345, %v2344
    %v2348 = vsel %vm125, %v2346, 0
    %2350 = vmatprep.subr.bf16.mxu0 0
    %2351 = vmatpush1.bf16.xpose.msra.mxu0 %v2348
    %2352 = vmatprep.subr.bf16.mxu0 0
    %2353 = vmatpush1.bf16.xpose.msra.mxu0 0
    %2354 = vmatprep.subr.bf16.mxu0 0
    %2355 = vmatpush1.bf16.xpose.msra.mxu0 0
    %2356 = vmatprep.subr.bf16.mxu0 0
    %2357 = vmatpush1.bf16.xpose.msra.mxu0 0
    %2358 = vmatprep.subr.bf16.mxu0 0
    %2359 = vmatpush1.bf16.xpose.msra.mxu0 0
    %2360 = vmatprep.subr.bf16.mxu0 0
    %2361 = vmatpush1.bf16.xpose.msra.mxu0 0
    %2362 = vmatprep.subr.bf16.mxu0 0
    %2363 = vmatpush1.bf16.xpose.msra.mxu0 0
    %2364 = vmatprep.subr.bf16.mxu0 0
    %2365 = vmatpush1.bf16.xpose.msra.mxu0 0
    %2366 = vmatprep.subr.bf16.mxu0 0
    %2367 = vmatpush1.bf16.xpose.msra.mxu0 0
    %2368 = vmatprep.subr.bf16.mxu0 0
    %2369 = vmatpush1.bf16.xpose.msra.mxu0 0
    %2370 = vmatprep.subr.bf16.mxu0 0
    %2371 = vmatpush1.bf16.xpose.msra.mxu0 0
    %2372 = vmatprep.subr.bf16.mxu0 0
    %2373 = vmatpush1.bf16.xpose.msra.mxu0 0
    %2374 = vmatprep.subr.bf16.mxu0 0
    %2375 = vmatpush1.bf16.xpose.msra.mxu0 0
    %2376 = vmatprep.subr.bf16.mxu0 0
    %2377 = vmatpush1.bf16.xpose.msra.mxu0 0
    %2378 = vmatprep.subr.bf16.mxu0 0
    %2379 = vmatpush1.bf16.xpose.msra.mxu0 0
    %2380 = vmatprep.subr.bf16.mxu0 0
    %2381 = vmatpush1.bf16.xpose.msra.mxu0 0
    %2382 = vmatprep.mubr.bf16.mxu0 0
    %2383 = vmatmul.mubr.bf16.gmra.mrb[0].mxu0 %v2107
    %v2384 = vpop.f32.mrb[0].mxu0
    %v2385 = vadd.f32 %v1991, %v2384
    %v2386 = vpop.f32.mrb[0].mxu0
    %v2387 = vpop.f32.mrb[0].mxu0
    %v2388 = vpop.f32.mrb[0].mxu0
    %2389 = vdwg.mxu0
    %v2392 = vunpack.c.l.b16 %v1949
    %v2393 = vunpack.c.l.b16 %v1950
    %v2394 = vpack.c.b16 %v2393, %v2392
    %v2396 = vsel %vm125, %v2394, 0
    %2398 = vmatprep.subr.bf16.mxu0 0
    %2399 = vmatpush1.bf16.xpose.msra.mxu0 %v2396
    %2400 = vmatprep.subr.bf16.mxu0 0
    %2401 = vmatpush1.bf16.xpose.msra.mxu0 0
    %2402 = vmatprep.subr.bf16.mxu0 0
    %2403 = vmatpush1.bf16.xpose.msra.mxu0 0
    %2404 = vmatprep.subr.bf16.mxu0 0
    %2405 = vmatpush1.bf16.xpose.msra.mxu0 0
    %2406 = vmatprep.subr.bf16.mxu0 0
    %2407 = vmatpush1.bf16.xpose.msra.mxu0 0
    %2408 = vmatprep.subr.bf16.mxu0 0
    %2409 = vmatpush1.bf16.xpose.msra.mxu0 0
    %2410 = vmatprep.subr.bf16.mxu0 0
    %2411 = vmatpush1.bf16.xpose.msra.mxu0 0
    %2412 = vmatprep.subr.bf16.mxu0 0
    %2413 = vmatpush1.bf16.xpose.msra.mxu0 0
    %2414 = vmatprep.subr.bf16.mxu0 0
    %2415 = vmatpush1.bf16.xpose.msra.mxu0 0
    %2416 = vmatprep.subr.bf16.mxu0 0
    %2417 = vmatpush1.bf16.xpose.msra.mxu0 0
    %2418 = vmatprep.subr.bf16.mxu0 0
    %2419 = vmatpush1.bf16.xpose.msra.mxu0 0
    %2420 = vmatprep.subr.bf16.mxu0 0
    %2421 = vmatpush1.bf16.xpose.msra.mxu0 0
    %2422 = vmatprep.subr.bf16.mxu0 0
    %2423 = vmatpush1.bf16.xpose.msra.mxu0 0
    %2424 = vmatprep.subr.bf16.mxu0 0
    %2425 = vmatpush1.bf16.xpose.msra.mxu0 0
    %2426 = vmatprep.subr.bf16.mxu0 0
    %2427 = vmatpush1.bf16.xpose.msra.mxu0 0
    %2428 = vmatprep.subr.bf16.mxu0 0
    %2429 = vmatpush1.bf16.xpose.msra.mxu0 0
    %2430 = vmatprep.mubr.bf16.mxu0 0
    %2431 = vmatmul.mubr.bf16.gmra.mrb[0].mxu0 %v2153
    %v2432 = vpop.f32.mrb[0].mxu0
    %v2433 = vadd.f32 %v1991, %v2432
    %v2434 = vpop.f32.mrb[0].mxu0
    %v2435 = vpop.f32.mrb[0].mxu0
    %v2436 = vpop.f32.mrb[0].mxu0
    %2437 = vdwg.mxu0
    %v2438 = vsel %vm550, %v2289, -inf
    %2439 = vmax.xlane.f32.xlu0 %v2438
    %v2440 = vpop.xlane.xlu0 %2439
    %v2441 = vsel %vm550, %v2337, -inf
    %2442 = vmax.xlane.f32.xlu0 %v2441
    %v2443 = vpop.xlane.xlu0 %2442
    %v2444 = vsel %vm550, %v2385, -inf
    %2445 = vmax.xlane.f32.xlu0 %v2444
    %v2446 = vpop.xlane.xlu0 %2445
    %v2447 = vsel %vm550, %v2433, -inf
    %2448 = vmax.xlane.f32.xlu0 %v2447
    %v2449 = vpop.xlane.xlu0 %2448
    %v2450 = vsub.f32 %v2289, %v2440
    %v2451 = vsub.f32 %v2337, %v2443
    %v2452 = vsub.f32 %v2385, %v2446
    %v2453 = vsub.f32 %v2433, %v2449
    %v2454 = vmul.f32 %v2450, 1.442695
    %v2455 = vpow.pop %v2454
    %v2456 = vmul.f32 %v2451, 1.442695
    %v2457 = vpow.pop %v2456
    %v2458 = vmul.f32 %v2452, 1.442695
    %v2459 = vpow.pop %v2458
    %v2460 = vmul.f32 %v2453, 1.442695
    %v2461 = vpow.pop %v2460
    %v2462 = vsel %vm550, %v2455, 0.0
    %2463 = vadd.xlane.f32.xlu0 %v2462
    %v2464 = vpop.xlane.xlu0 %2463
    %v2465 = vsel %vm550, %v2457, 0.0
    %2466 = vadd.xlane.f32.xlu0 %v2465
    %v2467 = vpop.xlane.xlu0 %2466
    %v2468 = vsel %vm550, %v2459, 0.0
    %2469 = vadd.xlane.f32.xlu0 %v2468
    %v2470 = vpop.xlane.xlu0 %2469
    %v2471 = vsel %vm550, %v2461, 0.0
    %2472 = vadd.xlane.f32.xlu0 %v2471
    %v2473 = vpop.xlane.xlu0 %2472
    %v2474 = vrcp.pop %v2464
    %v2475 = vrcp.pop %v2467
    %v2476 = vrcp.pop %v2470
    %v2477 = vrcp.pop %v2473
    %v2478 = vmul.f32 %v2455, %v2474
    %v2479 = vmul.f32 %v2457, %v2475
    %v2480 = vmul.f32 %v2459, %v2476
    %v2481 = vmul.f32 %v2461, %v2477
    %v2482 = vpack.c.bf16 %v2478, %v2478
    %v2483 = vpack.c.bf16 %v2479, %v2479
    %v2484 = vpack.c.bf16 %v2480, %v2480
    %v2485 = vpack.c.bf16 %v2481, %v2481
    %v2488 = vunpack.c.l.b16 %v1934
    %v2489 = vunpack.c.l.b16 %v1935
    %v2490 = vpack.c.b16 %v2489, %v2488
    %v2492 = vsel %vm125, %v2490, 0
    %2494 = vmatprep.subr.bf16.mxu0 0
    %2495 = vmatpush1.bf16.xpose.msra.mxu0 %v2018
    %2496 = vmatprep.subr.bf16.mxu0 0
    %2497 = vmatpush1.bf16.xpose.msra.mxu0 0
    %2498 = vmatprep.subr.bf16.mxu0 0
    %2499 = vmatpush1.bf16.xpose.msra.mxu0 0
    %2500 = vmatprep.subr.bf16.mxu0 0
    %2501 = vmatpush1.bf16.xpose.msra.mxu0 0
    %2502 = vmatprep.subr.bf16.mxu0 0
    %2503 = vmatpush1.bf16.xpose.msra.mxu0 0
    %2504 = vmatprep.subr.bf16.mxu0 0
    %2505 = vmatpush1.bf16.xpose.msra.mxu0 0
    %2506 = vmatprep.subr.bf16.mxu0 0
    %2507 = vmatpush1.bf16.xpose.msra.mxu0 0
    %2508 = vmatprep.subr.bf16.mxu0 0
    %2509 = vmatpush1.bf16.xpose.msra.mxu0 0
    %2510 = vmatprep.subr.bf16.mxu0 0
    %2511 = vmatpush1.bf16.xpose.msra.mxu0 0
    %2512 = vmatprep.subr.bf16.mxu0 0
    %2513 = vmatpush1.bf16.xpose.msra.mxu0 0
    %2514 = vmatprep.subr.bf16.mxu0 0
    %2515 = vmatpush1.bf16.xpose.msra.mxu0 0
    %2516 = vmatprep.subr.bf16.mxu0 0
    %2517 = vmatpush1.bf16.xpose.msra.mxu0 0
    %2518 = vmatprep.subr.bf16.mxu0 0
    %2519 = vmatpush1.bf16.xpose.msra.mxu0 0
    %2520 = vmatprep.subr.bf16.mxu0 0
    %2521 = vmatpush1.bf16.xpose.msra.mxu0 0
    %2522 = vmatprep.subr.bf16.mxu0 0
    %2523 = vmatpush1.bf16.xpose.msra.mxu0 0
    %2524 = vmatprep.subr.bf16.mxu0 0
    %2525 = vmatpush1.bf16.xpose.msra.mxu0 0
    %2526 = vmatprep.mubr.bf16.mxu0 0
    %2527 = vmatmul.mubr.bf16.gmra.mrb[0].mxu0 %v2492
    %v2528 = vpop.f32.mrb[0].mxu0
    %v2529 = vadd.f32 %v2006, %v2528
    %v2530 = vpop.f32.mrb[0].mxu0
    %v2531 = vpop.f32.mrb[0].mxu0
    %v2532 = vadd.f32 %v2007, %v2531
    %v2533 = vpop.f32.mrb[0].mxu0
    %2534 = vdwg.mxu0
    %v2537 = vunpack.c.l.b16 %v1936
    %v2538 = vunpack.c.l.b16 %v1937
    %v2539 = vpack.c.b16 %v2538, %v2537
    %v2541 = vsel %vm125, %v2539, 0
    %2543 = vmatprep.subr.bf16.mxu0 0
    %2544 = vmatpush1.bf16.xpose.msra.mxu0 %v2064
    %2545 = vmatprep.subr.bf16.mxu0 0
    %2546 = vmatpush1.bf16.xpose.msra.mxu0 0
    %2547 = vmatprep.subr.bf16.mxu0 0
    %2548 = vmatpush1.bf16.xpose.msra.mxu0 0
    %2549 = vmatprep.subr.bf16.mxu0 0
    %2550 = vmatpush1.bf16.xpose.msra.mxu0 0
    %2551 = vmatprep.subr.bf16.mxu0 0
    %2552 = vmatpush1.bf16.xpose.msra.mxu0 0
    %2553 = vmatprep.subr.bf16.mxu0 0
    %2554 = vmatpush1.bf16.xpose.msra.mxu0 0
    %2555 = vmatprep.subr.bf16.mxu0 0
    %2556 = vmatpush1.bf16.xpose.msra.mxu0 0
    %2557 = vmatprep.subr.bf16.mxu0 0
    %2558 = vmatpush1.bf16.xpose.msra.mxu0 0
    %2559 = vmatprep.subr.bf16.mxu0 0
    %2560 = vmatpush1.bf16.xpose.msra.mxu0 0
    %2561 = vmatprep.subr.bf16.mxu0 0
    %2562 = vmatpush1.bf16.xpose.msra.mxu0 0
    %2563 = vmatprep.subr.bf16.mxu0 0
    %2564 = vmatpush1.bf16.xpose.msra.mxu0 0
    %2565 = vmatprep.subr.bf16.mxu0 0
    %2566 = vmatpush1.bf16.xpose.msra.mxu0 0
    %2567 = vmatprep.subr.bf16.mxu0 0
    %2568 = vmatpush1.bf16.xpose.msra.mxu0 0
    %2569 = vmatprep.subr.bf16.mxu0 0
    %2570 = vmatpush1.bf16.xpose.msra.mxu0 0
    %2571 = vmatprep.subr.bf16.mxu0 0
    %2572 = vmatpush1.bf16.xpose.msra.mxu0 0
    %2573 = vmatprep.subr.bf16.mxu0 0
    %2574 = vmatpush1.bf16.xpose.msra.mxu0 0
    %2575 = vmatprep.mubr.bf16.mxu0 0
    %2576 = vmatmul.mubr.bf16.gmra.mrb[0].mxu0 %v2541
    %v2577 = vpop.f32.mrb[0].mxu0
    %v2578 = vadd.f32 %v2006, %v2577
    %v2579 = vpop.f32.mrb[0].mxu0
    %v2580 = vpop.f32.mrb[0].mxu0
    %v2581 = vadd.f32 %v2007, %v2580
    %v2582 = vpop.f32.mrb[0].mxu0
    %2583 = vdwg.mxu0
    %v2586 = vunpack.c.l.b16 %v1938
    %v2587 = vunpack.c.l.b16 %v1939
    %v2588 = vpack.c.b16 %v2587, %v2586
    %v2590 = vsel %vm125, %v2588, 0
    %2592 = vmatprep.subr.bf16.mxu0 0
    %2593 = vmatpush1.bf16.xpose.msra.mxu0 %v2110
    %2594 = vmatprep.subr.bf16.mxu0 0
    %2595 = vmatpush1.bf16.xpose.msra.mxu0 0
    %2596 = vmatprep.subr.bf16.mxu0 0
    %2597 = vmatpush1.bf16.xpose.msra.mxu0 0
    %2598 = vmatprep.subr.bf16.mxu0 0
    %2599 = vmatpush1.bf16.xpose.msra.mxu0 0
    %2600 = vmatprep.subr.bf16.mxu0 0
    %2601 = vmatpush1.bf16.xpose.msra.mxu0 0
    %2602 = vmatprep.subr.bf16.mxu0 0
    %2603 = vmatpush1.bf16.xpose.msra.mxu0 0
    %2604 = vmatprep.subr.bf16.mxu0 0
    %2605 = vmatpush1.bf16.xpose.msra.mxu0 0
    %2606 = vmatprep.subr.bf16.mxu0 0
    %2607 = vmatpush1.bf16.xpose.msra.mxu0 0
    %2608 = vmatprep.subr.bf16.mxu0 0
    %2609 = vmatpush1.bf16.xpose.msra.mxu0 0
    %2610 = vmatprep.subr.bf16.mxu0 0
    %2611 = vmatpush1.bf16.xpose.msra.mxu0 0
    %2612 = vmatprep.subr.bf16.mxu0 0
    %2613 = vmatpush1.bf16.xpose.msra.mxu0 0
    %2614 = vmatprep.subr.bf16.mxu0 0
    %2615 = vmatpush1.bf16.xpose.msra.mxu0 0
    %2616 = vmatprep.subr.bf16.mxu0 0
    %2617 = vmatpush1.bf16.xpose.msra.mxu0 0
    %2618 = vmatprep.subr.bf16.mxu0 0
    %2619 = vmatpush1.bf16.xpose.msra.mxu0 0
    %2620 = vmatprep.subr.bf16.mxu0 0
    %2621 = vmatpush1.bf16.xpose.msra.mxu0 0
    %2622 = vmatprep.subr.bf16.mxu0 0
    %2623 = vmatpush1.bf16.xpose.msra.mxu0 0
    %2624 = vmatprep.mubr.bf16.mxu0 0
    %2625 = vmatmul.mubr.bf16.gmra.mrb[0].mxu0 %v2590
    %v2626 = vpop.f32.mrb[0].mxu0
    %v2627 = vadd.f32 %v2006, %v2626
    %v2628 = vpop.f32.mrb[0].mxu0
    %v2629 = vpop.f32.mrb[0].mxu0
    %v2630 = vadd.f32 %v2007, %v2629
    %v2631 = vpop.f32.mrb[0].mxu0
    %2632 = vdwg.mxu0
    %v2635 = vunpack.c.l.b16 %v1940
    %v2636 = vunpack.c.l.b16 %v1941
    %v2637 = vpack.c.b16 %v2636, %v2635
    %v2639 = vsel %vm125, %v2637, 0
    %2641 = vmatprep.subr.bf16.mxu0 0
    %2642 = vmatpush1.bf16.xpose.msra.mxu0 %v2156
    %2643 = vmatprep.subr.bf16.mxu0 0
    %2644 = vmatpush1.bf16.xpose.msra.mxu0 0
    %2645 = vmatprep.subr.bf16.mxu0 0
    %2646 = vmatpush1.bf16.xpose.msra.mxu0 0
    %2647 = vmatprep.subr.bf16.mxu0 0
    %2648 = vmatpush1.bf16.xpose.msra.mxu0 0
    %2649 = vmatprep.subr.bf16.mxu0 0
    %2650 = vmatpush1.bf16.xpose.msra.mxu0 0
    %2651 = vmatprep.subr.bf16.mxu0 0
    %2652 = vmatpush1.bf16.xpose.msra.mxu0 0
    %2653 = vmatprep.subr.bf16.mxu0 0
    %2654 = vmatpush1.bf16.xpose.msra.mxu0 0
    %2655 = vmatprep.subr.bf16.mxu0 0
    %2656 = vmatpush1.bf16.xpose.msra.mxu0 0
    %2657 = vmatprep.subr.bf16.mxu0 0
    %2658 = vmatpush1.bf16.xpose.msra.mxu0 0
    %2659 = vmatprep.subr.bf16.mxu0 0
    %2660 = vmatpush1.bf16.xpose.msra.mxu0 0
    %2661 = vmatprep.subr.bf16.mxu0 0
    %2662 = vmatpush1.bf16.xpose.msra.mxu0 0
    %2663 = vmatprep.subr.bf16.mxu0 0
    %2664 = vmatpush1.bf16.xpose.msra.mxu0 0
    %2665 = vmatprep.subr.bf16.mxu0 0
    %2666 = vmatpush1.bf16.xpose.msra.mxu0 0
    %2667 = vmatprep.subr.bf16.mxu0 0
    %2668 = vmatpush1.bf16.xpose.msra.mxu0 0
    %2669 = vmatprep.subr.bf16.mxu0 0
    %2670 = vmatpush1.bf16.xpose.msra.mxu0 0
    %2671 = vmatprep.subr.bf16.mxu0 0
    %2672 = vmatpush1.bf16.xpose.msra.mxu0 0
    %2673 = vmatprep.mubr.bf16.mxu0 0
    %2674 = vmatmul.mubr.bf16.gmra.mrb[0].mxu0 %v2639
    %v2675 = vpop.f32.mrb[0].mxu0
    %v2676 = vadd.f32 %v2006, %v2675
    %v2677 = vpop.f32.mrb[0].mxu0
    %v2678 = vpop.f32.mrb[0].mxu0
    %v2679 = vadd.f32 %v2007, %v2678
    %v2680 = vpop.f32.mrb[0].mxu0
    %2681 = vdwg.mxu0
    %v2682 = vsel %vm125, %v2529, -inf
    %2683 = vmax.xlane.f32.xlu0 %v2682
    %v2684 = vpop.xlane.xlu0 %2683
    %v2685 = vsel %vm125, %v2532, -inf
    %2686 = vmax.xlane.f32.xlu0 %v2685
    %v2687 = vpop.xlane.xlu0 %2686
    %v2688 = vsel %vm125, %v2578, -inf
    %2689 = vmax.xlane.f32.xlu0 %v2688
    %v2690 = vpop.xlane.xlu0 %2689
    %v2691 = vsel %vm125, %v2581, -inf
    %2692 = vmax.xlane.f32.xlu0 %v2691
    %v2693 = vpop.xlane.xlu0 %2692
    %v2694 = vsel %vm125, %v2627, -inf
    %2695 = vmax.xlane.f32.xlu0 %v2694
    %v2696 = vpop.xlane.xlu0 %2695
    %v2697 = vsel %vm125, %v2630, -inf
    %2698 = vmax.xlane.f32.xlu0 %v2697
    %v2699 = vpop.xlane.xlu0 %2698
    %v2700 = vsel %vm125, %v2676, -inf
    %2701 = vmax.xlane.f32.xlu0 %v2700
    %v2702 = vpop.xlane.xlu0 %2701
    %v2703 = vsel %vm125, %v2679, -inf
    %2704 = vmax.xlane.f32.xlu0 %v2703
    %v2705 = vpop.xlane.xlu0 %2704
    %v2706 = vsub.f32 %v2529, %v2684
    %v2707 = vsub.f32 %v2532, %v2687
    %v2708 = vsub.f32 %v2578, %v2690
    %v2709 = vsub.f32 %v2581, %v2693
    %v2710 = vsub.f32 %v2627, %v2696
    %v2711 = vsub.f32 %v2630, %v2699
    %v2712 = vsub.f32 %v2676, %v2702
    %v2713 = vsub.f32 %v2679, %v2705
    %v2714 = vmul.f32 %v2706, 1.442695
    %v2715 = vpow.pop %v2714
    %v2716 = vmul.f32 %v2707, 1.442695
    %v2717 = vpow.pop %v2716
    %v2718 = vmul.f32 %v2708, 1.442695
    %v2719 = vpow.pop %v2718
    %v2720 = vmul.f32 %v2709, 1.442695
    %v2721 = vpow.pop %v2720
    %v2722 = vmul.f32 %v2710, 1.442695
    %v2723 = vpow.pop %v2722
    %v2724 = vmul.f32 %v2711, 1.442695
    %v2725 = vpow.pop %v2724
    %v2726 = vmul.f32 %v2712, 1.442695
    %v2727 = vpow.pop %v2726
    %v2728 = vmul.f32 %v2713, 1.442695
    %v2729 = vpow.pop %v2728
    %v2730 = vsel %vm125, %v2715, 0.0
    %2731 = vadd.xlane.f32.xlu0 %v2730
    %v2732 = vpop.xlane.xlu0 %2731
    %v2733 = vsel %vm125, %v2717, 0.0
    %2734 = vadd.xlane.f32.xlu0 %v2733
    %v2735 = vpop.xlane.xlu0 %2734
    %v2736 = vsel %vm125, %v2719, 0.0
    %2737 = vadd.xlane.f32.xlu0 %v2736
    %v2738 = vpop.xlane.xlu0 %2737
    %v2739 = vsel %vm125, %v2721, 0.0
    %2740 = vadd.xlane.f32.xlu0 %v2739
    %v2741 = vpop.xlane.xlu0 %2740
    %v2742 = vsel %vm125, %v2723, 0.0
    %2743 = vadd.xlane.f32.xlu0 %v2742
    %v2744 = vpop.xlane.xlu0 %2743
    %v2745 = vsel %vm125, %v2725, 0.0
    %2746 = vadd.xlane.f32.xlu0 %v2745
    %v2747 = vpop.xlane.xlu0 %2746
    %v2748 = vsel %vm125, %v2727, 0.0
    %2749 = vadd.xlane.f32.xlu0 %v2748
    %v2750 = vpop.xlane.xlu0 %2749
    %v2751 = vsel %vm125, %v2729, 0.0
    %2752 = vadd.xlane.f32.xlu0 %v2751
    %v2753 = vpop.xlane.xlu0 %2752
    %v2754 = vrcp.pop %v2732
    %v2755 = vrcp.pop %v2735
    %v2756 = vrcp.pop %v2738
    %v2757 = vrcp.pop %v2741
    %v2758 = vrcp.pop %v2744
    %v2759 = vrcp.pop %v2747
    %v2760 = vrcp.pop %v2750
    %v2761 = vrcp.pop %v2753
    %v2762 = vmul.f32 %v2715, %v2754
    %v2763 = vmul.f32 %v2717, %v2755
    %v2764 = vmul.f32 %v2719, %v2756
    %v2765 = vmul.f32 %v2721, %v2757
    %v2766 = vmul.f32 %v2723, %v2758
    %v2767 = vmul.f32 %v2725, %v2759
    %v2768 = vmul.f32 %v2727, %v2760
    %v2769 = vmul.f32 %v2729, %v2761
    %v2770 = vpack.c.bf16 %v2763, %v2762
    %v2771 = vpack.c.bf16 %v2765, %v2764
    %v2772 = vpack.c.bf16 %v2767, %v2766
    %v2773 = vpack.c.bf16 %v2769, %v2768
    %2774 = vmatprep.subr.bf16.mxu0 0
    %2775 = vmatpush1.bf16.xpose.msra.mxu0 %v2252
    %2776 = vmatprep.subr.bf16.mxu0 0
    %2777 = vmatpush1.bf16.xpose.msra.mxu0 0
    %2778 = vmatprep.subr.bf16.mxu0 0
    %2779 = vmatpush1.bf16.xpose.msra.mxu0 0
    %2780 = vmatprep.subr.bf16.mxu0 0
    %2781 = vmatpush1.bf16.xpose.msra.mxu0 0
    %2782 = vmatprep.subr.bf16.mxu0 0
    %2783 = vmatpush1.bf16.xpose.msra.mxu0 0
    %2784 = vmatprep.subr.bf16.mxu0 0
    %2785 = vmatpush1.bf16.xpose.msra.mxu0 0
    %2786 = vmatprep.subr.bf16.mxu0 0
    %2787 = vmatpush1.bf16.xpose.msra.mxu0 0
    %2788 = vmatprep.subr.bf16.mxu0 0
    %2789 = vmatpush1.bf16.xpose.msra.mxu0 0
    %2790 = vmatprep.subr.bf16.mxu0 0
    %2791 = vmatpush1.bf16.xpose.msra.mxu0 0
    %2792 = vmatprep.subr.bf16.mxu0 0
    %2793 = vmatpush1.bf16.xpose.msra.mxu0 0
    %2794 = vmatprep.subr.bf16.mxu0 0
    %2795 = vmatpush1.bf16.xpose.msra.mxu0 0
    %2796 = vmatprep.subr.bf16.mxu0 0
    %2797 = vmatpush1.bf16.xpose.msra.mxu0 0
    %2798 = vmatprep.subr.bf16.mxu0 0
    %2799 = vmatpush1.bf16.xpose.msra.mxu0 0
    %2800 = vmatprep.subr.bf16.mxu0 0
    %2801 = vmatpush1.bf16.xpose.msra.mxu0 0
    %2802 = vmatprep.subr.bf16.mxu0 0
    %2803 = vmatpush1.bf16.xpose.msra.mxu0 0
    %2804 = vmatprep.subr.bf16.mxu0 0
    %2805 = vmatpush1.bf16.xpose.msra.mxu0 0
    %2806 = vmatprep.mubr.bf16.mxu0 0
    %2807 = vmatmul.mubr.bf16.gmra.mrb[0].mxu0 %v2492
    %v2808 = vpop.f32.mrb[0].mxu0
    %v2809 = vadd.f32 %v2012, %v2808
    %v2810 = vpop.f32.mrb[0].mxu0
    %v2811 = vpop.f32.mrb[0].mxu0
    %v2812 = vadd.f32 %v2013, %v2811
    %v2813 = vpop.f32.mrb[0].mxu0
    %2814 = vdwg.mxu0
    %2815 = vmatprep.subr.bf16.mxu0 0
    %2816 = vmatpush1.bf16.xpose.msra.mxu0 %v2300
    %2817 = vmatprep.subr.bf16.mxu0 0
    %2818 = vmatpush1.bf16.xpose.msra.mxu0 0
    %2819 = vmatprep.subr.bf16.mxu0 0
    %2820 = vmatpush1.bf16.xpose.msra.mxu0 0
    %2821 = vmatprep.subr.bf16.mxu0 0
    %2822 = vmatpush1.bf16.xpose.msra.mxu0 0
    %2823 = vmatprep.subr.bf16.mxu0 0
    %2824 = vmatpush1.bf16.xpose.msra.mxu0 0
    %2825 = vmatprep.subr.bf16.mxu0 0
    %2826 = vmatpush1.bf16.xpose.msra.mxu0 0
    %2827 = vmatprep.subr.bf16.mxu0 0
    %2828 = vmatpush1.bf16.xpose.msra.mxu0 0
    %2829 = vmatprep.subr.bf16.mxu0 0
    %2830 = vmatpush1.bf16.xpose.msra.mxu0 0
    %2831 = vmatprep.subr.bf16.mxu0 0
    %2832 = vmatpush1.bf16.xpose.msra.mxu0 0
    %2833 = vmatprep.subr.bf16.mxu0 0
    %2834 = vmatpush1.bf16.xpose.msra.mxu0 0
    %2835 = vmatprep.subr.bf16.mxu0 0
    %2836 = vmatpush1.bf16.xpose.msra.mxu0 0
    %2837 = vmatprep.subr.bf16.mxu0 0
    %2838 = vmatpush1.bf16.xpose.msra.mxu0 0
    %2839 = vmatprep.subr.bf16.mxu0 0
    %2840 = vmatpush1.bf16.xpose.msra.mxu0 0
    %2841 = vmatprep.subr.bf16.mxu0 0
    %2842 = vmatpush1.bf16.xpose.msra.mxu0 0
    %2843 = vmatprep.subr.bf16.mxu0 0
    %2844 = vmatpush1.bf16.xpose.msra.mxu0 0
    %2845 = vmatprep.subr.bf16.mxu0 0
    %2846 = vmatpush1.bf16.xpose.msra.mxu0 0
    %2847 = vmatprep.mubr.bf16.mxu0 0
    %2848 = vmatmul.mubr.bf16.gmra.mrb[0].mxu0 %v2541
    %v2849 = vpop.f32.mrb[0].mxu0
    %v2850 = vadd.f32 %v2012, %v2849
    %v2851 = vpop.f32.mrb[0].mxu0
    %v2852 = vpop.f32.mrb[0].mxu0
    %v2853 = vadd.f32 %v2013, %v2852
    %v2854 = vpop.f32.mrb[0].mxu0
    %2855 = vdwg.mxu0
    %2856 = vmatprep.subr.bf16.mxu0 0
    %2857 = vmatpush1.bf16.xpose.msra.mxu0 %v2348
    %2858 = vmatprep.subr.bf16.mxu0 0
    %2859 = vmatpush1.bf16.xpose.msra.mxu0 0
    %2860 = vmatprep.subr.bf16.mxu0 0
    %2861 = vmatpush1.bf16.xpose.msra.mxu0 0
    %2862 = vmatprep.subr.bf16.mxu0 0
    %2863 = vmatpush1.bf16.xpose.msra.mxu0 0
    %2864 = vmatprep.subr.bf16.mxu0 0
    %2865 = vmatpush1.bf16.xpose.msra.mxu0 0
    %2866 = vmatprep.subr.bf16.mxu0 0
    %2867 = vmatpush1.bf16.xpose.msra.mxu0 0
    %2868 = vmatprep.subr.bf16.mxu0 0
    %2869 = vmatpush1.bf16.xpose.msra.mxu0 0
    %2870 = vmatprep.subr.bf16.mxu0 0
    %2871 = vmatpush1.bf16.xpose.msra.mxu0 0
    %2872 = vmatprep.subr.bf16.mxu0 0
    %2873 = vmatpush1.bf16.xpose.msra.mxu0 0
    %2874 = vmatprep.subr.bf16.mxu0 0
    %2875 = vmatpush1.bf16.xpose.msra.mxu0 0
    %2876 = vmatprep.subr.bf16.mxu0 0
    %2877 = vmatpush1.bf16.xpose.msra.mxu0 0
    %2878 = vmatprep.subr.bf16.mxu0 0
    %2879 = vmatpush1.bf16.xpose.msra.mxu0 0
    %2880 = vmatprep.subr.bf16.mxu0 0
    %2881 = vmatpush1.bf16.xpose.msra.mxu0 0
    %2882 = vmatprep.subr.bf16.mxu0 0
    %2883 = vmatpush1.bf16.xpose.msra.mxu0 0
    %2884 = vmatprep.subr.bf16.mxu0 0
    %2885 = vmatpush1.bf16.xpose.msra.mxu0 0
    %2886 = vmatprep.subr.bf16.mxu0 0
    %2887 = vmatpush1.bf16.xpose.msra.mxu0 0
    %2888 = vmatprep.mubr.bf16.mxu0 0
    %2889 = vmatmul.mubr.bf16.gmra.mrb[0].mxu0 %v2590
    %v2890 = vpop.f32.mrb[0].mxu0
    %v2891 = vadd.f32 %v2012, %v2890
    %v2892 = vpop.f32.mrb[0].mxu0
    %v2893 = vpop.f32.mrb[0].mxu0
    %v2894 = vadd.f32 %v2013, %v2893
    %v2895 = vpop.f32.mrb[0].mxu0
    %2896 = vdwg.mxu0
    %2897 = vmatprep.subr.bf16.mxu0 0
    %2898 = vmatpush1.bf16.xpose.msra.mxu0 %v2396
    %2899 = vmatprep.subr.bf16.mxu0 0
    %2900 = vmatpush1.bf16.xpose.msra.mxu0 0
    %2901 = vmatprep.subr.bf16.mxu0 0
    %2902 = vmatpush1.bf16.xpose.msra.mxu0 0
    %2903 = vmatprep.subr.bf16.mxu0 0
    %2904 = vmatpush1.bf16.xpose.msra.mxu0 0
    %2905 = vmatprep.subr.bf16.mxu0 0
    %2906 = vmatpush1.bf16.xpose.msra.mxu0 0
    %2907 = vmatprep.subr.bf16.mxu0 0
    %2908 = vmatpush1.bf16.xpose.msra.mxu0 0
    %2909 = vmatprep.subr.bf16.mxu0 0
    %2910 = vmatpush1.bf16.xpose.msra.mxu0 0
    %2911 = vmatprep.subr.bf16.mxu0 0
    %2912 = vmatpush1.bf16.xpose.msra.mxu0 0
    %2913 = vmatprep.subr.bf16.mxu0 0
    %2914 = vmatpush1.bf16.xpose.msra.mxu0 0
    %2915 = vmatprep.subr.bf16.mxu0 0
    %2916 = vmatpush1.bf16.xpose.msra.mxu0 0
    %2917 = vmatprep.subr.bf16.mxu0 0
    %2918 = vmatpush1.bf16.xpose.msra.mxu0 0
    %2919 = vmatprep.subr.bf16.mxu0 0
    %2920 = vmatpush1.bf16.xpose.msra.mxu0 0
    %2921 = vmatprep.subr.bf16.mxu0 0
    %2922 = vmatpush1.bf16.xpose.msra.mxu0 0
    %2923 = vmatprep.subr.bf16.mxu0 0
    %2924 = vmatpush1.bf16.xpose.msra.mxu0 0
    %2925 = vmatprep.subr.bf16.mxu0 0
    %2926 = vmatpush1.bf16.xpose.msra.mxu0 0
    %2927 = vmatprep.subr.bf16.mxu0 0
    %2928 = vmatpush1.bf16.xpose.msra.mxu0 0
    %2929 = vmatprep.mubr.bf16.mxu0 0
    %2930 = vmatmul.mubr.bf16.gmra.mrb[0].mxu0 %v2639
    %v2931 = vpop.f32.mrb[0].mxu0
    %v2932 = vadd.f32 %v2012, %v2931
    %v2933 = vpop.f32.mrb[0].mxu0
    %v2934 = vpop.f32.mrb[0].mxu0
    %v2935 = vadd.f32 %v2013, %v2934
    %v2936 = vpop.f32.mrb[0].mxu0
    %2937 = vdwg.mxu0
    %v2938 = vsel %vm550, %v2809, -inf
    %2939 = vmax.xlane.f32.xlu0 %v2938
    %v2940 = vpop.xlane.xlu0 %2939
    %v2941 = vsel %vm550, %v2812, -inf
    %2942 = vmax.xlane.f32.xlu0 %v2941
    %v2943 = vpop.xlane.xlu0 %2942
    %v2944 = vsel %vm550, %v2850, -inf
    %2945 = vmax.xlane.f32.xlu0 %v2944
    %v2946 = vpop.xlane.xlu0 %2945
    %v2947 = vsel %vm550, %v2853, -inf
    %2948 = vmax.xlane.f32.xlu0 %v2947
    %v2949 = vpop.xlane.xlu0 %2948
    %v2950 = vsel %vm550, %v2891, -inf
    %2951 = vmax.xlane.f32.xlu0 %v2950
    %v2952 = vpop.xlane.xlu0 %2951
    %v2953 = vsel %vm550, %v2894, -inf
    %2954 = vmax.xlane.f32.xlu0 %v2953
    %v2955 = vpop.xlane.xlu0 %2954
    %v2956 = vsel %vm550, %v2932, -inf
    %2957 = vmax.xlane.f32.xlu0 %v2956
    %v2958 = vpop.xlane.xlu0 %2957
    %v2959 = vsel %vm550, %v2935, -inf
    %2960 = vmax.xlane.f32.xlu0 %v2959
    %v2961 = vpop.xlane.xlu0 %2960
    %v2962 = vsub.f32 %v2809, %v2940
    %v2963 = vsub.f32 %v2812, %v2943
    %v2964 = vsub.f32 %v2850, %v2946
    %v2965 = vsub.f32 %v2853, %v2949
    %v2966 = vsub.f32 %v2891, %v2952
    %v2967 = vsub.f32 %v2894, %v2955
    %v2968 = vsub.f32 %v2932, %v2958
    %v2969 = vsub.f32 %v2935, %v2961
    %v2970 = vmul.f32 %v2962, 1.442695
    %v2971 = vpow.pop %v2970
    %v2972 = vmul.f32 %v2963, 1.442695
    %v2973 = vpow.pop %v2972
    %v2974 = vmul.f32 %v2964, 1.442695
    %v2975 = vpow.pop %v2974
    %v2976 = vmul.f32 %v2965, 1.442695
    %v2977 = vpow.pop %v2976
    %v2978 = vmul.f32 %v2966, 1.442695
    %v2979 = vpow.pop %v2978
    %v2980 = vmul.f32 %v2967, 1.442695
    %v2981 = vpow.pop %v2980
    %v2982 = vmul.f32 %v2968, 1.442695
    %v2983 = vpow.pop %v2982
    %v2984 = vmul.f32 %v2969, 1.442695
    %v2985 = vpow.pop %v2984
    %v2986 = vsel %vm550, %v2971, 0.0
    %2987 = vadd.xlane.f32.xlu0 %v2986
    %v2988 = vpop.xlane.xlu0 %2987
    %v2989 = vsel %vm550, %v2973, 0.0
    %2990 = vadd.xlane.f32.xlu0 %v2989
    %v2991 = vpop.xlane.xlu0 %2990
    %v2992 = vsel %vm550, %v2975, 0.0
    %2993 = vadd.xlane.f32.xlu0 %v2992
    %v2994 = vpop.xlane.xlu0 %2993
    %v2995 = vsel %vm550, %v2977, 0.0
    %2996 = vadd.xlane.f32.xlu0 %v2995
    %v2997 = vpop.xlane.xlu0 %2996
    %v2998 = vsel %vm550, %v2979, 0.0
    %2999 = vadd.xlane.f32.xlu0 %v2998
    %v3000 = vpop.xlane.xlu0 %2999
    %v3001 = vsel %vm550, %v2981, 0.0
    %3002 = vadd.xlane.f32.xlu0 %v3001
    %v3003 = vpop.xlane.xlu0 %3002
    %v3004 = vsel %vm550, %v2983, 0.0
    %3005 = vadd.xlane.f32.xlu0 %v3004
    %v3006 = vpop.xlane.xlu0 %3005
    %v3007 = vsel %vm550, %v2985, 0.0
    %3008 = vadd.xlane.f32.xlu0 %v3007
    %v3009 = vpop.xlane.xlu0 %3008
    %v3010 = vrcp.pop %v2988
    %v3011 = vrcp.pop %v2991
    %v3012 = vrcp.pop %v2994
    %v3013 = vrcp.pop %v2997
    %v3014 = vrcp.pop %v3000
    %v3015 = vrcp.pop %v3003
    %v3016 = vrcp.pop %v3006
    %v3017 = vrcp.pop %v3009
    %v3018 = vmul.f32 %v2971, %v3010
    %v3019 = vmul.f32 %v2973, %v3011
    %v3020 = vmul.f32 %v2975, %v3012
    %v3021 = vmul.f32 %v2977, %v3013
    %v3022 = vmul.f32 %v2979, %v3014
    %v3023 = vmul.f32 %v2981, %v3015
    %v3024 = vmul.f32 %v2983, %v3016
    %v3025 = vmul.f32 %v2985, %v3017
    %v3026 = vpack.c.bf16 %v3019, %v3018
    %v3027 = vpack.c.bf16 %v3021, %v3020
    %v3028 = vpack.c.bf16 %v3023, %v3022
    %v3029 = vpack.c.bf16 %v3025, %v3024
    %v3032 = vunpack.c.l.b16 %v1952
    %v3033 = vunpack.c.l.b16 %v1953
    %v3034 = vpack.c.b16 %v3033, %v3032
    %v3037 = vsel %vm550, %v2482, 0
    %3039 = vmatprep.subr.bf16.mxu0 0
    %3040 = vmatpush1.bf16.msra.mxu0 %v3034
    %3041 = vmatprep.subr.bf16.mxu0 0
    %3042 = vmatpush1.bf16.msra.mxu0 0
    %3043 = vmatprep.subr.bf16.mxu0 0
    %3044 = vmatpush1.bf16.msra.mxu0 0
    %3045 = vmatprep.subr.bf16.mxu0 0
    %3046 = vmatpush1.bf16.msra.mxu0 0
    %3047 = vmatprep.subr.bf16.mxu0 0
    %3048 = vmatpush1.bf16.msra.mxu0 0
    %3049 = vmatprep.subr.bf16.mxu0 0
    %3050 = vmatpush1.bf16.msra.mxu0 0
    %3051 = vmatprep.subr.bf16.mxu0 0
    %3052 = vmatpush1.bf16.msra.mxu0 0
    %3053 = vmatprep.subr.bf16.mxu0 0
    %3054 = vmatpush1.bf16.msra.mxu0 0
    %3055 = vmatprep.subr.bf16.mxu0 0
    %3056 = vmatpush1.bf16.msra.mxu0 0
    %3057 = vmatprep.subr.bf16.mxu0 0
    %3058 = vmatpush1.bf16.msra.mxu0 0
    %3059 = vmatprep.subr.bf16.mxu0 0
    %3060 = vmatpush1.bf16.msra.mxu0 0
    %3061 = vmatprep.subr.bf16.mxu0 0
    %3062 = vmatpush1.bf16.msra.mxu0 0
    %3063 = vmatprep.subr.bf16.mxu0 0
    %3064 = vmatpush1.bf16.msra.mxu0 0
    %3065 = vmatprep.subr.bf16.mxu0 0
    %3066 = vmatpush1.bf16.msra.mxu0 0
    %3067 = vmatprep.subr.bf16.mxu0 0
    %3068 = vmatpush1.bf16.msra.mxu0 0
    %3069 = vmatprep.subr.bf16.mxu0 0
    %3070 = vmatpush1.bf16.msra.mxu0 0
    %3071 = vmatprep.mubr.bf16.mxu0 0
    %3072 = vmatmul.mubr.bf16.gmra.mrb[0].mxu0 %v3037
    %v3073 = vpop.f32.mrb[0].mxu0
    %v3074 = vadd.f32 0.0, %v3073
    %v3075 = vpop.f32.mrb[0].mxu0
    %v3076 = vpop.f32.mrb[0].mxu0
    %v3077 = vpop.f32.mrb[0].mxu0
    %3078 = vdwg.mxu0
    %v3081 = vunpack.c.l.b16 %v1954
    %v3082 = vunpack.c.l.b16 %v1955
    %v3083 = vpack.c.b16 %v3082, %v3081
    %v3086 = vsel %vm550, %v2483, 0
    %3088 = vmatprep.subr.bf16.mxu0 0
    %3089 = vmatpush1.bf16.msra.mxu0 %v3083
    %3090 = vmatprep.subr.bf16.mxu0 0
    %3091 = vmatpush1.bf16.msra.mxu0 0
    %3092 = vmatprep.subr.bf16.mxu0 0
    %3093 = vmatpush1.bf16.msra.mxu0 0
    %3094 = vmatprep.subr.bf16.mxu0 0
    %3095 = vmatpush1.bf16.msra.mxu0 0
    %3096 = vmatprep.subr.bf16.mxu0 0
    %3097 = vmatpush1.bf16.msra.mxu0 0
    %3098 = vmatprep.subr.bf16.mxu0 0
    %3099 = vmatpush1.bf16.msra.mxu0 0
    %3100 = vmatprep.subr.bf16.mxu0 0
    %3101 = vmatpush1.bf16.msra.mxu0 0
    %3102 = vmatprep.subr.bf16.mxu0 0
    %3103 = vmatpush1.bf16.msra.mxu0 0
    %3104 = vmatprep.subr.bf16.mxu0 0
    %3105 = vmatpush1.bf16.msra.mxu0 0
    %3106 = vmatprep.subr.bf16.mxu0 0
    %3107 = vmatpush1.bf16.msra.mxu0 0
    %3108 = vmatprep.subr.bf16.mxu0 0
    %3109 = vmatpush1.bf16.msra.mxu0 0
    %3110 = vmatprep.subr.bf16.mxu0 0
    %3111 = vmatpush1.bf16.msra.mxu0 0
    %3112 = vmatprep.subr.bf16.mxu0 0
    %3113 = vmatpush1.bf16.msra.mxu0 0
    %3114 = vmatprep.subr.bf16.mxu0 0
    %3115 = vmatpush1.bf16.msra.mxu0 0
    %3116 = vmatprep.subr.bf16.mxu0 0
    %3117 = vmatpush1.bf16.msra.mxu0 0
    %3118 = vmatprep.subr.bf16.mxu0 0
    %3119 = vmatpush1.bf16.msra.mxu0 0
    %3120 = vmatprep.mubr.bf16.mxu0 0
    %3121 = vmatmul.mubr.bf16.gmra.mrb[0].mxu0 %v3086
    %v3122 = vpop.f32.mrb[0].mxu0
    %v3123 = vadd.f32 0.0, %v3122
    %v3124 = vpop.f32.mrb[0].mxu0
    %v3125 = vpop.f32.mrb[0].mxu0
    %v3126 = vpop.f32.mrb[0].mxu0
    %3127 = vdwg.mxu0
    %v3130 = vunpack.c.l.b16 %v1956
    %v3131 = vunpack.c.l.b16 %v1957
    %v3132 = vpack.c.b16 %v3131, %v3130
    %v3135 = vsel %vm550, %v2484, 0
    %3137 = vmatprep.subr.bf16.mxu0 0
    %3138 = vmatpush1.bf16.msra.mxu0 %v3132
    %3139 = vmatprep.subr.bf16.mxu0 0
    %3140 = vmatpush1.bf16.msra.mxu0 0
    %3141 = vmatprep.subr.bf16.mxu0 0
    %3142 = vmatpush1.bf16.msra.mxu0 0
    %3143 = vmatprep.subr.bf16.mxu0 0
    %3144 = vmatpush1.bf16.msra.mxu0 0
    %3145 = vmatprep.subr.bf16.mxu0 0
    %3146 = vmatpush1.bf16.msra.mxu0 0
    %3147 = vmatprep.subr.bf16.mxu0 0
    %3148 = vmatpush1.bf16.msra.mxu0 0
    %3149 = vmatprep.subr.bf16.mxu0 0
    %3150 = vmatpush1.bf16.msra.mxu0 0
    %3151 = vmatprep.subr.bf16.mxu0 0
    %3152 = vmatpush1.bf16.msra.mxu0 0
    %3153 = vmatprep.subr.bf16.mxu0 0
    %3154 = vmatpush1.bf16.msra.mxu0 0
    %3155 = vmatprep.subr.bf16.mxu0 0
    %3156 = vmatpush1.bf16.msra.mxu0 0
    %3157 = vmatprep.subr.bf16.mxu0 0
    %3158 = vmatpush1.bf16.msra.mxu0 0
    %3159 = vmatprep.subr.bf16.mxu0 0
    %3160 = vmatpush1.bf16.msra.mxu0 0
    %3161 = vmatprep.subr.bf16.mxu0 0
    %3162 = vmatpush1.bf16.msra.mxu0 0
    %3163 = vmatprep.subr.bf16.mxu0 0
    %3164 = vmatpush1.bf16.msra.mxu0 0
    %3165 = vmatprep.subr.bf16.mxu0 0
    %3166 = vmatpush1.bf16.msra.mxu0 0
    %3167 = vmatprep.subr.bf16.mxu0 0
    %3168 = vmatpush1.bf16.msra.mxu0 0
    %3169 = vmatprep.mubr.bf16.mxu0 0
    %3170 = vmatmul.mubr.bf16.gmra.mrb[0].mxu0 %v3135
    %v3171 = vpop.f32.mrb[0].mxu0
    %v3172 = vadd.f32 0.0, %v3171
    %v3173 = vpop.f32.mrb[0].mxu0
    %v3174 = vpop.f32.mrb[0].mxu0
    %v3175 = vpop.f32.mrb[0].mxu0
    %3176 = vdwg.mxu0
    %v3179 = vunpack.c.l.b16 %v1958
    %v3180 = vunpack.c.l.b16 %v1959
    %v3181 = vpack.c.b16 %v3180, %v3179
    %v3184 = vsel %vm550, %v2485, 0
    %3186 = vmatprep.subr.bf16.mxu0 0
    %3187 = vmatpush1.bf16.msra.mxu0 %v3181
    %3188 = vmatprep.subr.bf16.mxu0 0
    %3189 = vmatpush1.bf16.msra.mxu0 0
    %3190 = vmatprep.subr.bf16.mxu0 0
    %3191 = vmatpush1.bf16.msra.mxu0 0
    %3192 = vmatprep.subr.bf16.mxu0 0
    %3193 = vmatpush1.bf16.msra.mxu0 0
    %3194 = vmatprep.subr.bf16.mxu0 0
    %3195 = vmatpush1.bf16.msra.mxu0 0
    %3196 = vmatprep.subr.bf16.mxu0 0
    %3197 = vmatpush1.bf16.msra.mxu0 0
    %3198 = vmatprep.subr.bf16.mxu0 0
    %3199 = vmatpush1.bf16.msra.mxu0 0
    %3200 = vmatprep.subr.bf16.mxu0 0
    %3201 = vmatpush1.bf16.msra.mxu0 0
    %3202 = vmatprep.subr.bf16.mxu0 0
    %3203 = vmatpush1.bf16.msra.mxu0 0
    %3204 = vmatprep.subr.bf16.mxu0 0
    %3205 = vmatpush1.bf16.msra.mxu0 0
    %3206 = vmatprep.subr.bf16.mxu0 0
    %3207 = vmatpush1.bf16.msra.mxu0 0
    %3208 = vmatprep.subr.bf16.mxu0 0
    %3209 = vmatpush1.bf16.msra.mxu0 0
    %3210 = vmatprep.subr.bf16.mxu0 0
    %3211 = vmatpush1.bf16.msra.mxu0 0
    %3212 = vmatprep.subr.bf16.mxu0 0
    %3213 = vmatpush1.bf16.msra.mxu0 0
    %3214 = vmatprep.subr.bf16.mxu0 0
    %3215 = vmatpush1.bf16.msra.mxu0 0
    %3216 = vmatprep.subr.bf16.mxu0 0
    %3217 = vmatpush1.bf16.msra.mxu0 0
    %3218 = vmatprep.mubr.bf16.mxu0 0
    %3219 = vmatmul.mubr.bf16.gmra.mrb[0].mxu0 %v3184
    %v3220 = vpop.f32.mrb[0].mxu0
    %v3221 = vadd.f32 0.0, %v3220
    %v3222 = vpop.f32.mrb[0].mxu0
    %v3223 = vpop.f32.mrb[0].mxu0
    %v3224 = vpop.f32.mrb[0].mxu0
    %3225 = vdwg.mxu0
    %v3227 = vsel %vm125, %v2242, 0
    %v3230 = vsel %vm1342, %v1929, 0
    %3232 = vmatprep.subr.bf16.mxu0 0
    %3233 = vmatpush1.bf16.msra.mxu0 %v3230
    %3234 = vmatprep.subr.bf16.mxu0 0
    %3235 = vmatpush1.bf16.msra.mxu0 0
    %3236 = vmatprep.subr.bf16.mxu0 0
    %3237 = vmatpush1.bf16.msra.mxu0 0
    %3238 = vmatprep.subr.bf16.mxu0 0
    %3239 = vmatpush1.bf16.msra.mxu0 0
    %3240 = vmatprep.subr.bf16.mxu0 0
    %3241 = vmatpush1.bf16.msra.mxu0 0
    %3242 = vmatprep.subr.bf16.mxu0 0
    %3243 = vmatpush1.bf16.msra.mxu0 0
    %3244 = vmatprep.subr.bf16.mxu0 0
    %3245 = vmatpush1.bf16.msra.mxu0 0
    %3246 = vmatprep.subr.bf16.mxu0 0
    %3247 = vmatpush1.bf16.msra.mxu0 0
    %3248 = vmatprep.subr.bf16.mxu0 0
    %3249 = vmatpush1.bf16.msra.mxu0 0
    %3250 = vmatprep.subr.bf16.mxu0 0
    %3251 = vmatpush1.bf16.msra.mxu0 0
    %3252 = vmatprep.subr.bf16.mxu0 0
    %3253 = vmatpush1.bf16.msra.mxu0 0
    %3254 = vmatprep.subr.bf16.mxu0 0
    %3255 = vmatpush1.bf16.msra.mxu0 0
    %3256 = vmatprep.subr.bf16.mxu0 0
    %3257 = vmatpush1.bf16.msra.mxu0 0
    %3258 = vmatprep.subr.bf16.mxu0 0
    %3259 = vmatpush1.bf16.msra.mxu0 0
    %3260 = vmatprep.subr.bf16.mxu0 0
    %3261 = vmatpush1.bf16.msra.mxu0 0
    %3262 = vmatprep.subr.bf16.mxu0 0
    %3263 = vmatpush1.bf16.msra.mxu0 0
    %3264 = vmatprep.mubr.bf16.mxu0 0
    %3265 = vmatmul.mubr.bf16.gmra.mrb[0].mxu0 %v3227
    %v3266 = vpop.f32.mrb[0].mxu0
    %v3267 = vadd.f32 %v3074, %v3266
    %v3268 = vpop.f32.mrb[0].mxu0
    %v3269 = vpop.f32.mrb[0].mxu0
    %v3270 = vpop.f32.mrb[0].mxu0
    %3271 = vdwg.mxu0
    %v3273 = vsel %vm125, %v2243, 0
    %v3276 = vsel %vm1342, %v1930, 0
    %3278 = vmatprep.subr.bf16.mxu0 0
    %3279 = vmatpush1.bf16.msra.mxu0 %v3276
    %3280 = vmatprep.subr.bf16.mxu0 0
    %3281 = vmatpush1.bf16.msra.mxu0 0
    %3282 = vmatprep.subr.bf16.mxu0 0
    %3283 = vmatpush1.bf16.msra.mxu0 0
    %3284 = vmatprep.subr.bf16.mxu0 0
    %3285 = vmatpush1.bf16.msra.mxu0 0
    %3286 = vmatprep.subr.bf16.mxu0 0
    %3287 = vmatpush1.bf16.msra.mxu0 0
    %3288 = vmatprep.subr.bf16.mxu0 0
    %3289 = vmatpush1.bf16.msra.mxu0 0
    %3290 = vmatprep.subr.bf16.mxu0 0
    %3291 = vmatpush1.bf16.msra.mxu0 0
    %3292 = vmatprep.subr.bf16.mxu0 0
    %3293 = vmatpush1.bf16.msra.mxu0 0
    %3294 = vmatprep.subr.bf16.mxu0 0
    %3295 = vmatpush1.bf16.msra.mxu0 0
    %3296 = vmatprep.subr.bf16.mxu0 0
    %3297 = vmatpush1.bf16.msra.mxu0 0
    %3298 = vmatprep.subr.bf16.mxu0 0
    %3299 = vmatpush1.bf16.msra.mxu0 0
    %3300 = vmatprep.subr.bf16.mxu0 0
    %3301 = vmatpush1.bf16.msra.mxu0 0
    %3302 = vmatprep.subr.bf16.mxu0 0
    %3303 = vmatpush1.bf16.msra.mxu0 0
    %3304 = vmatprep.subr.bf16.mxu0 0
    %3305 = vmatpush1.bf16.msra.mxu0 0
    %3306 = vmatprep.subr.bf16.mxu0 0
    %3307 = vmatpush1.bf16.msra.mxu0 0
    %3308 = vmatprep.subr.bf16.mxu0 0
    %3309 = vmatpush1.bf16.msra.mxu0 0
    %3310 = vmatprep.mubr.bf16.mxu0 0
    %3311 = vmatmul.mubr.bf16.gmra.mrb[0].mxu0 %v3273
    %v3312 = vpop.f32.mrb[0].mxu0
    %v3313 = vadd.f32 %v3123, %v3312
    %v3314 = vpop.f32.mrb[0].mxu0
    %v3315 = vpop.f32.mrb[0].mxu0
    %v3316 = vpop.f32.mrb[0].mxu0
    %3317 = vdwg.mxu0
    %v3319 = vsel %vm125, %v2244, 0
    %v3322 = vsel %vm1342, %v1931, 0
    %3324 = vmatprep.subr.bf16.mxu0 0
    %3325 = vmatpush1.bf16.msra.mxu0 %v3322
    %3326 = vmatprep.subr.bf16.mxu0 0
    %3327 = vmatpush1.bf16.msra.mxu0 0
    %3328 = vmatprep.subr.bf16.mxu0 0
    %3329 = vmatpush1.bf16.msra.mxu0 0
    %3330 = vmatprep.subr.bf16.mxu0 0
    %3331 = vmatpush1.bf16.msra.mxu0 0
    %3332 = vmatprep.subr.bf16.mxu0 0
    %3333 = vmatpush1.bf16.msra.mxu0 0
    %3334 = vmatprep.subr.bf16.mxu0 0
    %3335 = vmatpush1.bf16.msra.mxu0 0
    %3336 = vmatprep.subr.bf16.mxu0 0
    %3337 = vmatpush1.bf16.msra.mxu0 0
    %3338 = vmatprep.subr.bf16.mxu0 0
    %3339 = vmatpush1.bf16.msra.mxu0 0
    %3340 = vmatprep.subr.bf16.mxu0 0
    %3341 = vmatpush1.bf16.msra.mxu0 0
    %3342 = vmatprep.subr.bf16.mxu0 0
    %3343 = vmatpush1.bf16.msra.mxu0 0
    %3344 = vmatprep.subr.bf16.mxu0 0
    %3345 = vmatpush1.bf16.msra.mxu0 0
    %3346 = vmatprep.subr.bf16.mxu0 0
    %3347 = vmatpush1.bf16.msra.mxu0 0
    %3348 = vmatprep.subr.bf16.mxu0 0
    %3349 = vmatpush1.bf16.msra.mxu0 0
    %3350 = vmatprep.subr.bf16.mxu0 0
    %3351 = vmatpush1.bf16.msra.mxu0 0
    %3352 = vmatprep.subr.bf16.mxu0 0
    %3353 = vmatpush1.bf16.msra.mxu0 0
    %3354 = vmatprep.subr.bf16.mxu0 0
    %3355 = vmatpush1.bf16.msra.mxu0 0
    %3356 = vmatprep.mubr.bf16.mxu0 0
    %3357 = vmatmul.mubr.bf16.gmra.mrb[0].mxu0 %v3319
    %v3358 = vpop.f32.mrb[0].mxu0
    %v3359 = vadd.f32 %v3172, %v3358
    %v3360 = vpop.f32.mrb[0].mxu0
    %v3361 = vpop.f32.mrb[0].mxu0
    %v3362 = vpop.f32.mrb[0].mxu0
    %3363 = vdwg.mxu0
    %v3365 = vsel %vm125, %v2245, 0
    %v3368 = vsel %vm1342, %v1932, 0
    %3370 = vmatprep.subr.bf16.mxu0 0
    %3371 = vmatpush1.bf16.msra.mxu0 %v3368
    %3372 = vmatprep.subr.bf16.mxu0 0
    %3373 = vmatpush1.bf16.msra.mxu0 0
    %3374 = vmatprep.subr.bf16.mxu0 0
    %3375 = vmatpush1.bf16.msra.mxu0 0
    %3376 = vmatprep.subr.bf16.mxu0 0
    %3377 = vmatpush1.bf16.msra.mxu0 0
    %3378 = vmatprep.subr.bf16.mxu0 0
    %3379 = vmatpush1.bf16.msra.mxu0 0
    %3380 = vmatprep.subr.bf16.mxu0 0
    %3381 = vmatpush1.bf16.msra.mxu0 0
    %3382 = vmatprep.subr.bf16.mxu0 0
    %3383 = vmatpush1.bf16.msra.mxu0 0
    %3384 = vmatprep.subr.bf16.mxu0 0
    %3385 = vmatpush1.bf16.msra.mxu0 0
    %3386 = vmatprep.subr.bf16.mxu0 0
    %3387 = vmatpush1.bf16.msra.mxu0 0
    %3388 = vmatprep.subr.bf16.mxu0 0
    %3389 = vmatpush1.bf16.msra.mxu0 0
    %3390 = vmatprep.subr.bf16.mxu0 0
    %3391 = vmatpush1.bf16.msra.mxu0 0
    %3392 = vmatprep.subr.bf16.mxu0 0
    %3393 = vmatpush1.bf16.msra.mxu0 0
    %3394 = vmatprep.subr.bf16.mxu0 0
    %3395 = vmatpush1.bf16.msra.mxu0 0
    %3396 = vmatprep.subr.bf16.mxu0 0
    %3397 = vmatpush1.bf16.msra.mxu0 0
    %3398 = vmatprep.subr.bf16.mxu0 0
    %3399 = vmatpush1.bf16.msra.mxu0 0
    %3400 = vmatprep.subr.bf16.mxu0 0
    %3401 = vmatpush1.bf16.msra.mxu0 0
    %3402 = vmatprep.mubr.bf16.mxu0 0
    %3403 = vmatmul.mubr.bf16.gmra.mrb[0].mxu0 %v3365
    %v3404 = vpop.f32.mrb[0].mxu0
    %v3405 = vadd.f32 %v3221, %v3404
    %v3406 = vpop.f32.mrb[0].mxu0
    %v3407 = vpop.f32.mrb[0].mxu0
    %v3408 = vpop.f32.mrb[0].mxu0
    %3409 = vdwg.mxu0
    %v3411 = vsel %vm550, %v3026, 0
    %3413 = vmatprep.subr.bf16.mxu0 0
    %3414 = vmatpush1.bf16.msra.mxu0 %v3034
    %3415 = vmatprep.subr.bf16.mxu0 0
    %3416 = vmatpush1.bf16.msra.mxu0 0
    %3417 = vmatprep.subr.bf16.mxu0 0
    %3418 = vmatpush1.bf16.msra.mxu0 0
    %3419 = vmatprep.subr.bf16.mxu0 0
    %3420 = vmatpush1.bf16.msra.mxu0 0
    %3421 = vmatprep.subr.bf16.mxu0 0
    %3422 = vmatpush1.bf16.msra.mxu0 0
    %3423 = vmatprep.subr.bf16.mxu0 0
    %3424 = vmatpush1.bf16.msra.mxu0 0
    %3425 = vmatprep.subr.bf16.mxu0 0
    %3426 = vmatpush1.bf16.msra.mxu0 0
    %3427 = vmatprep.subr.bf16.mxu0 0
    %3428 = vmatpush1.bf16.msra.mxu0 0
    %3429 = vmatprep.subr.bf16.mxu0 0
    %3430 = vmatpush1.bf16.msra.mxu0 0
    %3431 = vmatprep.subr.bf16.mxu0 0
    %3432 = vmatpush1.bf16.msra.mxu0 0
    %3433 = vmatprep.subr.bf16.mxu0 0
    %3434 = vmatpush1.bf16.msra.mxu0 0
    %3435 = vmatprep.subr.bf16.mxu0 0
    %3436 = vmatpush1.bf16.msra.mxu0 0
    %3437 = vmatprep.subr.bf16.mxu0 0
    %3438 = vmatpush1.bf16.msra.mxu0 0
    %3439 = vmatprep.subr.bf16.mxu0 0
    %3440 = vmatpush1.bf16.msra.mxu0 0
    %3441 = vmatprep.subr.bf16.mxu0 0
    %3442 = vmatpush1.bf16.msra.mxu0 0
    %3443 = vmatprep.subr.bf16.mxu0 0
    %3444 = vmatpush1.bf16.msra.mxu0 0
    %3445 = vmatprep.mubr.bf16.mxu0 0
    %3446 = vmatmul.mubr.bf16.gmra.mrb[0].mxu0 %v3411
    %v3447 = vpop.f32.mrb[0].mxu0
    %v3448 = vadd.f32 0.0, %v3447
    %v3449 = vpop.f32.mrb[0].mxu0
    %v3450 = vpop.f32.mrb[0].mxu0
    %v3451 = vadd.f32 0.0, %v3450
    %v3452 = vpop.f32.mrb[0].mxu0
    %3453 = vdwg.mxu0
    %v3455 = vsel %vm550, %v3027, 0
    %3457 = vmatprep.subr.bf16.mxu0 0
    %3458 = vmatpush1.bf16.msra.mxu0 %v3083
    %3459 = vmatprep.subr.bf16.mxu0 0
    %3460 = vmatpush1.bf16.msra.mxu0 0
    %3461 = vmatprep.subr.bf16.mxu0 0
    %3462 = vmatpush1.bf16.msra.mxu0 0
    %3463 = vmatprep.subr.bf16.mxu0 0
    %3464 = vmatpush1.bf16.msra.mxu0 0
    %3465 = vmatprep.subr.bf16.mxu0 0
    %3466 = vmatpush1.bf16.msra.mxu0 0
    %3467 = vmatprep.subr.bf16.mxu0 0
    %3468 = vmatpush1.bf16.msra.mxu0 0
    %3469 = vmatprep.subr.bf16.mxu0 0
    %3470 = vmatpush1.bf16.msra.mxu0 0
    %3471 = vmatprep.subr.bf16.mxu0 0
    %3472 = vmatpush1.bf16.msra.mxu0 0
    %3473 = vmatprep.subr.bf16.mxu0 0
    %3474 = vmatpush1.bf16.msra.mxu0 0
    %3475 = vmatprep.subr.bf16.mxu0 0
    %3476 = vmatpush1.bf16.msra.mxu0 0
    %3477 = vmatprep.subr.bf16.mxu0 0
    %3478 = vmatpush1.bf16.msra.mxu0 0
    %3479 = vmatprep.subr.bf16.mxu0 0
    %3480 = vmatpush1.bf16.msra.mxu0 0
    %3481 = vmatprep.subr.bf16.mxu0 0
    %3482 = vmatpush1.bf16.msra.mxu0 0
    %3483 = vmatprep.subr.bf16.mxu0 0
    %3484 = vmatpush1.bf16.msra.mxu0 0
    %3485 = vmatprep.subr.bf16.mxu0 0
    %3486 = vmatpush1.bf16.msra.mxu0 0
    %3487 = vmatprep.subr.bf16.mxu0 0
    %3488 = vmatpush1.bf16.msra.mxu0 0
    %3489 = vmatprep.mubr.bf16.mxu0 0
    %3490 = vmatmul.mubr.bf16.gmra.mrb[0].mxu0 %v3455
    %v3491 = vpop.f32.mrb[0].mxu0
    %v3492 = vadd.f32 0.0, %v3491
    %v3493 = vpop.f32.mrb[0].mxu0
    %v3494 = vpop.f32.mrb[0].mxu0
    %v3495 = vadd.f32 0.0, %v3494
    %v3496 = vpop.f32.mrb[0].mxu0
    %3497 = vdwg.mxu0
    %v3499 = vsel %vm550, %v3028, 0
    %3501 = vmatprep.subr.bf16.mxu0 0
    %3502 = vmatpush1.bf16.msra.mxu0 %v3132
    %3503 = vmatprep.subr.bf16.mxu0 0
    %3504 = vmatpush1.bf16.msra.mxu0 0
    %3505 = vmatprep.subr.bf16.mxu0 0
    %3506 = vmatpush1.bf16.msra.mxu0 0
    %3507 = vmatprep.subr.bf16.mxu0 0
    %3508 = vmatpush1.bf16.msra.mxu0 0
    %3509 = vmatprep.subr.bf16.mxu0 0
    %3510 = vmatpush1.bf16.msra.mxu0 0
    %3511 = vmatprep.subr.bf16.mxu0 0
    %3512 = vmatpush1.bf16.msra.mxu0 0
    %3513 = vmatprep.subr.bf16.mxu0 0
    %3514 = vmatpush1.bf16.msra.mxu0 0
    %3515 = vmatprep.subr.bf16.mxu0 0
    %3516 = vmatpush1.bf16.msra.mxu0 0
    %3517 = vmatprep.subr.bf16.mxu0 0
    %3518 = vmatpush1.bf16.msra.mxu0 0
    %3519 = vmatprep.subr.bf16.mxu0 0
    %3520 = vmatpush1.bf16.msra.mxu0 0
    %3521 = vmatprep.subr.bf16.mxu0 0
    %3522 = vmatpush1.bf16.msra.mxu0 0
    %3523 = vmatprep.subr.bf16.mxu0 0
    %3524 = vmatpush1.bf16.msra.mxu0 0
    %3525 = vmatprep.subr.bf16.mxu0 0
    %3526 = vmatpush1.bf16.msra.mxu0 0
    %3527 = vmatprep.subr.bf16.mxu0 0
    %3528 = vmatpush1.bf16.msra.mxu0 0
    %3529 = vmatprep.subr.bf16.mxu0 0
    %3530 = vmatpush1.bf16.msra.mxu0 0
    %3531 = vmatprep.subr.bf16.mxu0 0
    %3532 = vmatpush1.bf16.msra.mxu0 0
    %3533 = vmatprep.mubr.bf16.mxu0 0
    %3534 = vmatmul.mubr.bf16.gmra.mrb[0].mxu0 %v3499
    %v3535 = vpop.f32.mrb[0].mxu0
    %v3536 = vadd.f32 0.0, %v3535
    %v3537 = vpop.f32.mrb[0].mxu0
    %v3538 = vpop.f32.mrb[0].mxu0
    %v3539 = vadd.f32 0.0, %v3538
    %v3540 = vpop.f32.mrb[0].mxu0
    %3541 = vdwg.mxu0
    %v3543 = vsel %vm550, %v3029, 0
    %3545 = vmatprep.subr.bf16.mxu0 0
    %3546 = vmatpush1.bf16.msra.mxu0 %v3181
    %3547 = vmatprep.subr.bf16.mxu0 0
    %3548 = vmatpush1.bf16.msra.mxu0 0
    %3549 = vmatprep.subr.bf16.mxu0 0
    %3550 = vmatpush1.bf16.msra.mxu0 0
    %3551 = vmatprep.subr.bf16.mxu0 0
    %3552 = vmatpush1.bf16.msra.mxu0 0
    %3553 = vmatprep.subr.bf16.mxu0 0
    %3554 = vmatpush1.bf16.msra.mxu0 0
    %3555 = vmatprep.subr.bf16.mxu0 0
    %3556 = vmatpush1.bf16.msra.mxu0 0
    %3557 = vmatprep.subr.bf16.mxu0 0
    %3558 = vmatpush1.bf16.msra.mxu0 0
    %3559 = vmatprep.subr.bf16.mxu0 0
    %3560 = vmatpush1.bf16.msra.mxu0 0
    %3561 = vmatprep.subr.bf16.mxu0 0
    %3562 = vmatpush1.bf16.msra.mxu0 0
    %3563 = vmatprep.subr.bf16.mxu0 0
    %3564 = vmatpush1.bf16.msra.mxu0 0
    %3565 = vmatprep.subr.bf16.mxu0 0
    %3566 = vmatpush1.bf16.msra.mxu0 0
    %3567 = vmatprep.subr.bf16.mxu0 0
    %3568 = vmatpush1.bf16.msra.mxu0 0
    %3569 = vmatprep.subr.bf16.mxu0 0
    %3570 = vmatpush1.bf16.msra.mxu0 0
    %3571 = vmatprep.subr.bf16.mxu0 0
    %3572 = vmatpush1.bf16.msra.mxu0 0
    %3573 = vmatprep.subr.bf16.mxu0 0
    %3574 = vmatpush1.bf16.msra.mxu0 0
    %3575 = vmatprep.subr.bf16.mxu0 0
    %3576 = vmatpush1.bf16.msra.mxu0 0
    %3577 = vmatprep.mubr.bf16.mxu0 0
    %3578 = vmatmul.mubr.bf16.gmra.mrb[0].mxu0 %v3543
    %v3579 = vpop.f32.mrb[0].mxu0
    %v3580 = vadd.f32 0.0, %v3579
    %v3581 = vpop.f32.mrb[0].mxu0
    %v3582 = vpop.f32.mrb[0].mxu0
    %v3583 = vadd.f32 0.0, %v3582
    %v3584 = vpop.f32.mrb[0].mxu0
    %3585 = vdwg.mxu0
    %v3587 = vsel %vm125, %v2770, 0
    %3589 = vmatprep.subr.bf16.mxu0 0
    %3590 = vmatpush1.bf16.msra.mxu0 %v3230
    %3591 = vmatprep.subr.bf16.mxu0 0
    %3592 = vmatpush1.bf16.msra.mxu0 0
    %3593 = vmatprep.subr.bf16.mxu0 0
    %3594 = vmatpush1.bf16.msra.mxu0 0
    %3595 = vmatprep.subr.bf16.mxu0 0
    %3596 = vmatpush1.bf16.msra.mxu0 0
    %3597 = vmatprep.subr.bf16.mxu0 0
    %3598 = vmatpush1.bf16.msra.mxu0 0
    %3599 = vmatprep.subr.bf16.mxu0 0
    %3600 = vmatpush1.bf16.msra.mxu0 0
    %3601 = vmatprep.subr.bf16.mxu0 0
    %3602 = vmatpush1.bf16.msra.mxu0 0
    %3603 = vmatprep.subr.bf16.mxu0 0
    %3604 = vmatpush1.bf16.msra.mxu0 0
    %3605 = vmatprep.subr.bf16.mxu0 0
    %3606 = vmatpush1.bf16.msra.mxu0 0
    %3607 = vmatprep.subr.bf16.mxu0 0
    %3608 = vmatpush1.bf16.msra.mxu0 0
    %3609 = vmatprep.subr.bf16.mxu0 0
    %3610 = vmatpush1.bf16.msra.mxu0 0
    %3611 = vmatprep.subr.bf16.mxu0 0
    %3612 = vmatpush1.bf16.msra.mxu0 0
    %3613 = vmatprep.subr.bf16.mxu0 0
    %3614 = vmatpush1.bf16.msra.mxu0 0
    %3615 = vmatprep.subr.bf16.mxu0 0
    %3616 = vmatpush1.bf16.msra.mxu0 0
    %3617 = vmatprep.subr.bf16.mxu0 0
    %3618 = vmatpush1.bf16.msra.mxu0 0
    %3619 = vmatprep.subr.bf16.mxu0 0
    %3620 = vmatpush1.bf16.msra.mxu0 0
    %3621 = vmatprep.mubr.bf16.mxu0 0
    %3622 = vmatmul.mubr.bf16.gmra.mrb[0].mxu0 %v3587
    %v3623 = vpop.f32.mrb[0].mxu0
    %v3624 = vadd.f32 %v3448, %v3623
    %v3625 = vpop.f32.mrb[0].mxu0
    %v3626 = vpop.f32.mrb[0].mxu0
    %v3627 = vadd.f32 %v3451, %v3626
    %v3628 = vpop.f32.mrb[0].mxu0
    %3629 = vdwg.mxu0
    %v3631 = vsel %vm125, %v2771, 0
    %3633 = vmatprep.subr.bf16.mxu0 0
    %3634 = vmatpush1.bf16.msra.mxu0 %v3276
    %3635 = vmatprep.subr.bf16.mxu0 0
    %3636 = vmatpush1.bf16.msra.mxu0 0
    %3637 = vmatprep.subr.bf16.mxu0 0
    %3638 = vmatpush1.bf16.msra.mxu0 0
    %3639 = vmatprep.subr.bf16.mxu0 0
    %3640 = vmatpush1.bf16.msra.mxu0 0
    %3641 = vmatprep.subr.bf16.mxu0 0
    %3642 = vmatpush1.bf16.msra.mxu0 0
    %3643 = vmatprep.subr.bf16.mxu0 0
    %3644 = vmatpush1.bf16.msra.mxu0 0
    %3645 = vmatprep.subr.bf16.mxu0 0
    %3646 = vmatpush1.bf16.msra.mxu0 0
    %3647 = vmatprep.subr.bf16.mxu0 0
    %3648 = vmatpush1.bf16.msra.mxu0 0
    %3649 = vmatprep.subr.bf16.mxu0 0
    %3650 = vmatpush1.bf16.msra.mxu0 0
    %3651 = vmatprep.subr.bf16.mxu0 0
    %3652 = vmatpush1.bf16.msra.mxu0 0
    %3653 = vmatprep.subr.bf16.mxu0 0
    %3654 = vmatpush1.bf16.msra.mxu0 0
    %3655 = vmatprep.subr.bf16.mxu0 0
    %3656 = vmatpush1.bf16.msra.mxu0 0
    %3657 = vmatprep.subr.bf16.mxu0 0
    %3658 = vmatpush1.bf16.msra.mxu0 0
    %3659 = vmatprep.subr.bf16.mxu0 0
    %3660 = vmatpush1.bf16.msra.mxu0 0
    %3661 = vmatprep.subr.bf16.mxu0 0
    %3662 = vmatpush1.bf16.msra.mxu0 0
    %3663 = vmatprep.subr.bf16.mxu0 0
    %3664 = vmatpush1.bf16.msra.mxu0 0
    %3665 = vmatprep.mubr.bf16.mxu0 0
    %3666 = vmatmul.mubr.bf16.gmra.mrb[0].mxu0 %v3631
    %v3667 = vpop.f32.mrb[0].mxu0
    %v3668 = vadd.f32 %v3492, %v3667
    %v3669 = vpop.f32.mrb[0].mxu0
    %v3670 = vpop.f32.mrb[0].mxu0
    %v3671 = vadd.f32 %v3495, %v3670
    %v3672 = vpop.f32.mrb[0].mxu0
    %3673 = vdwg.mxu0
    %v3675 = vsel %vm125, %v2772, 0
    %3677 = vmatprep.subr.bf16.mxu0 0
    %3678 = vmatpush1.bf16.msra.mxu0 %v3322
    %3679 = vmatprep.subr.bf16.mxu0 0
    %3680 = vmatpush1.bf16.msra.mxu0 0
    %3681 = vmatprep.subr.bf16.mxu0 0
    %3682 = vmatpush1.bf16.msra.mxu0 0
    %3683 = vmatprep.subr.bf16.mxu0 0
    %3684 = vmatpush1.bf16.msra.mxu0 0
    %3685 = vmatprep.subr.bf16.mxu0 0
    %3686 = vmatpush1.bf16.msra.mxu0 0
    %3687 = vmatprep.subr.bf16.mxu0 0
    %3688 = vmatpush1.bf16.msra.mxu0 0
    %3689 = vmatprep.subr.bf16.mxu0 0
    %3690 = vmatpush1.bf16.msra.mxu0 0
    %3691 = vmatprep.subr.bf16.mxu0 0
    %3692 = vmatpush1.bf16.msra.mxu0 0
    %3693 = vmatprep.subr.bf16.mxu0 0
    %3694 = vmatpush1.bf16.msra.mxu0 0
    %3695 = vmatprep.subr.bf16.mxu0 0
    %3696 = vmatpush1.bf16.msra.mxu0 0
    %3697 = vmatprep.subr.bf16.mxu0 0
    %3698 = vmatpush1.bf16.msra.mxu0 0
    %3699 = vmatprep.subr.bf16.mxu0 0
    %3700 = vmatpush1.bf16.msra.mxu0 0
    %3701 = vmatprep.subr.bf16.mxu0 0
    %3702 = vmatpush1.bf16.msra.mxu0 0
    %3703 = vmatprep.subr.bf16.mxu0 0
    %3704 = vmatpush1.bf16.msra.mxu0 0
    %3705 = vmatprep.subr.bf16.mxu0 0
    %3706 = vmatpush1.bf16.msra.mxu0 0
    %3707 = vmatprep.subr.bf16.mxu0 0
    %3708 = vmatpush1.bf16.msra.mxu0 0
    %3709 = vmatprep.mubr.bf16.mxu0 0
    %3710 = vmatmul.mubr.bf16.gmra.mrb[0].mxu0 %v3675
    %v3711 = vpop.f32.mrb[0].mxu0
    %v3712 = vadd.f32 %v3536, %v3711
    %v3713 = vpop.f32.mrb[0].mxu0
    %v3714 = vpop.f32.mrb[0].mxu0
    %v3715 = vadd.f32 %v3539, %v3714
    %v3716 = vpop.f32.mrb[0].mxu0
    %3717 = vdwg.mxu0
    %v3719 = vsel %vm125, %v2773, 0
    %3721 = vmatprep.subr.bf16.mxu0 0
    %3722 = vmatpush1.bf16.msra.mxu0 %v3368
    %3723 = vmatprep.subr.bf16.mxu0 0
    %3724 = vmatpush1.bf16.msra.mxu0 0
    %3725 = vmatprep.subr.bf16.mxu0 0
    %3726 = vmatpush1.bf16.msra.mxu0 0
    %3727 = vmatprep.subr.bf16.mxu0 0
    %3728 = vmatpush1.bf16.msra.mxu0 0
    %3729 = vmatprep.subr.bf16.mxu0 0
    %3730 = vmatpush1.bf16.msra.mxu0 0
    %3731 = vmatprep.subr.bf16.mxu0 0
    %3732 = vmatpush1.bf16.msra.mxu0 0
    %3733 = vmatprep.subr.bf16.mxu0 0
    %3734 = vmatpush1.bf16.msra.mxu0 0
    %3735 = vmatprep.subr.bf16.mxu0 0
    %3736 = vmatpush1.bf16.msra.mxu0 0
    %3737 = vmatprep.subr.bf16.mxu0 0
    %3738 = vmatpush1.bf16.msra.mxu0 0
    %3739 = vmatprep.subr.bf16.mxu0 0
    %3740 = vmatpush1.bf16.msra.mxu0 0
    %3741 = vmatprep.subr.bf16.mxu0 0
    %3742 = vmatpush1.bf16.msra.mxu0 0
    %3743 = vmatprep.subr.bf16.mxu0 0
    %3744 = vmatpush1.bf16.msra.mxu0 0
    %3745 = vmatprep.subr.bf16.mxu0 0
    %3746 = vmatpush1.bf16.msra.mxu0 0
    %3747 = vmatprep.subr.bf16.mxu0 0
    %3748 = vmatpush1.bf16.msra.mxu0 0
    %3749 = vmatprep.subr.bf16.mxu0 0
    %3750 = vmatpush1.bf16.msra.mxu0 0
    %3751 = vmatprep.subr.bf16.mxu0 0
    %3752 = vmatpush1.bf16.msra.mxu0 0
    %3753 = vmatprep.mubr.bf16.mxu0 0
    %3754 = vmatmul.mubr.bf16.gmra.mrb[0].mxu0 %v3719
    %v3755 = vpop.f32.mrb[0].mxu0
    %v3756 = vadd.f32 %v3580, %v3755
    %v3757 = vpop.f32.mrb[0].mxu0
    %v3758 = vpop.f32.mrb[0].mxu0
    %v3759 = vadd.f32 %v3583, %v3758
    %v3760 = vpop.f32.mrb[0].mxu0
    %3761 = vdwg.mxu0
    %v3762 = vmul.f32 %v1961, 0.5
    %3764 = vset.pattern.permute.xlu0 0
    %3765 = vperm.xlu0 %3764, %v3762
    %v3766 = vpop.permute.xlu0 %3765
    %v3768 = vmul.f32 %v3267, %v3766
    %v3769 = vmul.f32 %v3313, %v3766
    %v3770 = vmul.f32 %v3359, %v3766
    %v3771 = vmul.f32 %v3405, %v3766
    %s3772 = scalar_lea.vmem [#allocation2], 32
    %3773 = vst.msk [vmem:[%s3772] sm:$0xff] %vm125, %v3768
    %3774 = vst.msk [vmem:[%s3772 + $0x8] sm:$0xff] %vm125, %v3769
    %3775 = vst.msk [vmem:[%s3772 + $0x10] sm:$0xff] %vm125, %v3770
    %3776 = vst.msk [vmem:[%s3772 + $0x18] sm:$0xff] %vm125, %v3771
    %v3777 = vmul.f32 %v1965, 0.5
    %v3778 = vmul.f32 %v1966, 0.5
    %3780 = vset.pattern.permute.xlu0 0
    %3781 = vperm.xlu0 %3780, %v3777
    %v3782 = vpop.permute.xlu0 %3781
    %3785 = vset.pattern.permute.xlu0 0
    %3786 = vperm.xlu0 %3785, %v3778
    %v3787 = vpop.permute.xlu0 %3786
    %v3789 = vmul.f32 %v3624, %v3782
    %v3790 = vmul.f32 %v3627, %v3787
    %v3791 = vmul.f32 %v3668, %v3782
    %v3792 = vmul.f32 %v3671, %v3787
    %v3793 = vmul.f32 %v3712, %v3782
    %v3794 = vmul.f32 %v3715, %v3787
    %v3795 = vmul.f32 %v3756, %v3782
    %v3796 = vmul.f32 %v3759, %v3787
    %s3797 = scalar_lea.vmem %s11, 64
    %3798 = vst.msk [vmem:[%s3797] sm:$0xff] %vm125, %v3789
    %3799 = vst.msk [vmem:[%s3797 + $0x8] sm:$0xff] %vm125, %v3790
    %3800 = vst.msk [vmem:[%s3797 + $0x10] sm:$0xff] %vm125, %v3791
    %3801 = vst.msk [vmem:[%s3797 + $0x18] sm:$0xff] %vm125, %v3792
    %3802 = vst.msk [vmem:[%s3797 + $0x20] sm:$0xff] %vm125, %v3793
    %3803 = vst.msk [vmem:[%s3797 + $0x28] sm:$0xff] %vm125, %v3794
    %3804 = vst.msk [vmem:[%s3797 + $0x30] sm:$0xff] %vm125, %v3795
    %3805 = vst.msk [vmem:[%s3797 + $0x38] sm:$0xff] %vm125, %v3796
    // Predicated region
    $region42: #{tpu_custom_call.1} parent=1 // pred_check
      _
    $region43: #{tpu_custom_call.1} parent=1 // pred_check_branch
      %3807 = sbr.rel (0) target = $region45
    $region44: #{tpu_custom_call.1} parent=1 // pred_region
      %s3809 = ssub.s32 1024, 1024
      %3810 = vsyncadd [#allocation3], %s3809
      %s3811 = sshll.u32 [#allocation2], 4
      %s3812 = int_to_ptr.vmem [resolvable:$true] %s3811
      %3817 = dma.vmem_to_hbm [thread:$0]  %s3812, 1024, %s10, [#allocation3], 128, 128, 8
    $region45: #{tpu_custom_call.1} parent=1 // pred_fallthru
      _
    // Predicated region
    $region46: #{tpu_custom_call.1} parent=1 // pred_check
      _
    $region47: #{tpu_custom_call.1} parent=1 // pred_check_branch
      %3819 = sbr.rel (0) target = $region49
    $region48: #{tpu_custom_call.1} parent=1 // pred_region
      _
    $region49: #{tpu_custom_call.1} parent=1 // pred_fallthru
      _
    // Predicated region
    $region50: #{tpu_custom_call.1} parent=1 // pred_check
      _
    $region51: #{tpu_custom_call.1} parent=1 // pred_check_branch
      %3821 = sbr.rel (0) target = $region53
    $region52: #{tpu_custom_call.1} parent=1 // pred_region
      %3822 = dma.done [#allocation3], 1024
    $region53: #{tpu_custom_call.1} parent=1 // pred_fallthru
      _
    // Predicated region
    $region54: #{tpu_custom_call.1} parent=1 // pred_check
      _
    $region55: #{tpu_custom_call.1} parent=1 // pred_check_branch
      %3824 = sbr.rel (0) target = $region57
    $region56: #{tpu_custom_call.1} parent=1 // pred_region
      _
    $region57: #{tpu_custom_call.1} parent=1 // pred_fallthru
      _
    %3825 = vsyncpa [#allocation3], 1

</llo_original>
